<compile_context>
chip_gen: v7x
topology: tpu7x:2x2x1
jax: 0.10.0
libtpu: 0.0.40
codegen_flags: <defaults>
</compile_context>

<pallas_src>
import functools

import jax
import jax.numpy as jnp
from jax.experimental import pallas as pl
from jax.experimental.pallas import tpu as pltpu


_SQRT_HALF = 0.7071067811865476
_BN_EPS = 1e-5


def _vmem_limit_bytes():
    """Generation-aware VMEM budget: ~3/4 of physical capacity (≈48 MiB on
    v7x, ≈96 MiB on v5e/v6e); conservative 32 MiB fallback."""
    try:
        cap = int(pltpu.get_tpu_info().vmem_capacity_bytes)
        return int(min((cap * 3) // 4, 96 * 1024 * 1024))
    except Exception:  # CPU tracing / older runtimes: stay safe everywhere.
        return 32 * 1024 * 1024


# --------------------------- fused whole-forward kernel -----------------------

def _vit_forward_kernel(
    patches_ref,     # (B, Np, patch_dim) f32; row 0 of every batch is zeros
    patch_w_ref,     # (patch_dim, dim)
    embed_add_ref,   # (Np, dim)  cls-token / pos-embedding / patch-bias fold
    qkv_w_ref,       # (1, dim, 3*inner)  current layer (q-scale pre-folded)
    proj_w_ref,      # (1, inner, dim)
    proj_b_ref,      # (1, 1, dim)
    bn1_g_ref,       # (1, 1, dim)
    bn1_b_ref,       # (1, 1, dim)
    w1_ref,          # (1, dim, mlp)
    b1_ref,          # (1, 1, mlp)
    w2_ref,          # (1, mlp, dim)
    b2_ref,          # (1, 1, dim)
    bn2_g_ref,       # (1, 1, dim)
    bn2_b_ref,       # (1, 1, dim)
    head_w_ref,      # (dim, ncls)
    head_b_ref,      # (1, ncls)
    out_ref,         # (B, ncls)
    act_ref,         # VMEM scratch (B, Np, dim): residual stream across layers
    y_ref,           # VMEM scratch (B, Np, dim): pre-BatchNorm branch output
    *, batch, seq, heads, dim_head, eps, use_bf16):
    layer = pl.program_id(0)
    inner = heads * dim_head
    inv_rows = 1.0 / float(batch * seq)

    def mm(a, w):
        # MXU matmul: bf16 operands with f32 accumulation; elementwise stays f32.
        if use_bf16:
            a = a.astype(jnp.bfloat16)
            w = w.astype(jnp.bfloat16)
        return jnp.dot(a, w, preferred_element_type=jnp.float32)

    def mm_t(a, w):  # a @ w.T (contract last dims, no explicit transpose)
        if use_bf16:
            a = a.astype(jnp.bfloat16)
            w = w.astype(jnp.bfloat16)
        return jax.lax.dot_general(a, w, (((1,), (1,)), ((), ())),
                                   preferred_element_type=jnp.float32)

    # ---- patch embedding + cls token + positional embedding (layer 0 only) --
    @pl.when(layer == 0)
    def _embed():
        w_p = patch_w_ref[...]
        add = embed_add_ref[...]
        for b in range(batch):                      # static unroll; B is tiny
            act_ref[b] = mm(patches_ref[b], w_p) + add

    qkv_w = qkv_w_ref[0]
    proj_w = proj_w_ref[0]
    proj_b = proj_b_ref[0]

    # ---- attention branch: y = proj(MHA(x)); accumulate BN1 batch stats -----
    sum1 = jnp.zeros((1, proj_b.shape[-1]), jnp.float32)
    sumsq1 = jnp.zeros_like(sum1)
    for b in range(batch):
        x_b = act_ref[b]                                       # (Np, dim)
        qkv = mm(x_b, qkv_w)                                   # (Np, 3*inner)
        acc = jnp.zeros((seq, proj_b.shape[-1]), jnp.float32)
        for h in range(heads):                                 # static unroll
            lo = h * dim_head
            q = qkv[:, lo:lo + dim_head]                       # (Np, Dh)
            k = qkv[:, inner + lo:inner + lo + dim_head]
            v = qkv[:, 2 * inner + lo:2 * inner + lo + dim_head]
            s = mm_t(q, k)                                     # (Np, Np)
            s = s - jnp.max(s, axis=-1, keepdims=True)
            p = jnp.exp(s)
            p = p / jnp.sum(p, axis=-1, keepdims=True)         # exact softmax (f32)
            o_h = mm(p, v)                                     # (Np, Dh)
            # Fold this head directly into the projection (no concatenate);
            # the Dh-row slice of proj_w is sublane-aligned (Dh % 8 == 0).
            acc = acc + mm(o_h, proj_w[lo:lo + dim_head, :])
        y_b = acc + proj_b                                     # (Np, dim) pre-BN
        y_ref[b] = y_b
        sum1 = sum1 + jnp.sum(y_b, axis=0, keepdims=True)
        sumsq1 = sumsq1 + jnp.sum(y_b * y_b, axis=0, keepdims=True)

    # ---- BatchNorm1d over all B*Np tokens + residual, then FeedForward ------
    mean1 = sum1 * inv_rows
    var1 = sumsq1 * inv_rows - mean1 * mean1                   # biased batch var
    scale1 = jax.lax.rsqrt(var1 + eps) * bn1_g_ref[0]
    shift1 = bn1_b_ref[0] - mean1 * scale1

    w1 = w1_ref[0]
    b1 = b1_ref[0]
    w2 = w2_ref[0]
    b2 = b2_ref[0]
    sum2 = jnp.zeros_like(sum1)
    sumsq2 = jnp.zeros_like(sum1)
    for b in range(batch):
        x_b = act_ref[b] + y_ref[b] * scale1 + shift1          # x + BN(attn branch)
        act_ref[b] = x_b
        hid = mm(x_b, w1) + b1
        hid = 0.5 * hid * (1.0 + jax.lax.erf(hid * _SQRT_HALF))   # exact GELU (f32)
        y2_b = mm(hid, w2) + b2
        y_ref[b] = y2_b
        sum2 = sum2 + jnp.sum(y2_b, axis=0, keepdims=True)
        sumsq2 = sumsq2 + jnp.sum(y2_b * y2_b, axis=0, keepdims=True)

    mean2 = sum2 * inv_rows
    var2 = sumsq2 * inv_rows - mean2 * mean2
    scale2 = jax.lax.rsqrt(var2 + eps) * bn2_g_ref[0]
    shift2 = bn2_b_ref[0] - mean2 * scale2
    for b in range(batch):
        act_ref[b] = act_ref[b] + y_ref[b] * scale2 + shift2   # x + BN(mlp branch)

    # ---- classification head on the cls token (last layer only) -------------
    @pl.when(layer == pl.num_programs(0) - 1)
    def _head():
        cls_rows = jnp.concatenate([act_ref[b][0:1, :] for b in range(batch)],
                                   axis=0)                     # (B, dim)
        logits = mm(cls_rows, head_w_ref[...]) + head_b_ref[...]
        out_ref[...] = logits.astype(out_ref.dtype)


# --------------------------- wrapper -------------------------------------------

def vit_forward(params, img, cfg, use_bf16_matmul=True):
    """Whole ViT forward in one pallas_call (grid iterates over layers)."""
    B, C, H, W = img.shape
    P = cfg["patch_size"]
    gh, gw = H // P, W // P
    N = gh * gw
    Np = N + 1
    dim = cfg["dim"]
    heads = cfg["heads"]
    dh = cfg["dim_head"]
    inner = heads * dh
    mlp = cfg["mlp_dim"]
    depth = cfg["depth"]
    ncls = cfg["num_classes"]
    patch_dim = C * P * P

    # Rearrange 'b c (h ph) (w pw) -> b (h w) (ph pw c)'.
    # TODO(synk): fold this transpose into the embedding BlockSpec index_map
    # (per-patch Element mapping) once image sizes grow beyond this demo.
    x = img.reshape(B, C, gh, P, gw, P)
    x = jnp.transpose(x, (0, 2, 4, 3, 5, 1)).reshape(B, N, patch_dim)
    # Prepend an all-zero "patch" per batch element: its embedding-matmul
    # contribution is exactly 0, so the cls-token row falls out of the same
    # in-kernel matmul plus the additive term below (no in-kernel concat).
    patches = jnp.concatenate(
        [jnp.zeros((B, 1, patch_dim), jnp.float32), x.astype(jnp.float32)], axis=1)

    # Fold cls token, positional embedding and the patch-embedding bias into
    # one additive (Np, dim) term (parameter-only preprocessing).
    embed_add = params["pos_embedding"][0, :Np, :] + jnp.concatenate(
        [params["cls_token"].reshape(1, dim),
         jnp.broadcast_to(params["patch_b"].reshape(1, dim), (N, dim))], axis=0)

    head_b = params["head_b"].reshape(1, ncls)

    def const_spec(shape):
        if len(shape) == 3:
            return pl.BlockSpec(shape, lambda l: (0, 0, 0))
        return pl.BlockSpec(shape, lambda l: (0, 0))

    def layer_spec(rows, cols):
        return pl.BlockSpec((1, rows, cols), lambda l: (l, 0, 0))

    in_specs = [
        const_spec((B, Np, patch_dim)),       # patches (zero row 0 per batch)
        const_spec((patch_dim, dim)),         # patch_w
        const_spec((Np, dim)),                # embed_add
        layer_spec(dim, 3 * inner),           # qkv_w  (per layer)
        layer_spec(inner, dim),               # proj_w
        layer_spec(1, dim),                   # proj_b
        layer_spec(1, dim),                   # bn1_g
        layer_spec(1, dim),                   # bn1_b
        layer_spec(dim, mlp),                 # w1
        layer_spec(1, mlp),                   # b1
        layer_spec(mlp, dim),                 # w2
        layer_spec(1, dim),                   # b2
        layer_spec(1, dim),                   # bn2_g
        layer_spec(1, dim),                   # bn2_b
        const_spec((dim, ncls)),              # head_w
        const_spec((1, ncls)),                # head_b
    ]

    args = (patches, params["patch_w"], embed_add,
            params["qkv_w"], params["proj_w"], params["proj_b"],
            params["bn1_g"], params["bn1_b"],
            params["w1"], params["b1"], params["w2"], params["b2"],
            params["bn2_g"], params["bn2_b"],
            params["head_w"], head_b)

    vmem_limit = _vmem_limit_bytes()
    # Whole-forward fusion keeps every activation resident in VMEM; make sure
    # the working set (inputs + double-buffered per-layer weights + scratch)
    # fits.  TODO(synk): fall back to tiled per-op kernels when it does not.
    per_layer_bytes = 4 * (dim * 3 * inner + inner * dim + dim * mlp + mlp
                           + mlp * dim + 7 * dim)
    resident_bytes = (4 * (B * Np * patch_dim + patch_dim * dim + Np * dim
                           + dim * ncls + ncls + 2 * B * Np * dim + B * ncls)
                      + 2 * per_layer_bytes)
    assert resident_bytes < vmem_limit, (
        f"fused ViT working set {resident_bytes} B exceeds VMEM budget "
        f"{vmem_limit} B; this config needs a tiled per-op fallback")

    M = B * Np
    flops = (2 * B * Np * patch_dim * dim
             + depth * (2 * M * dim * 3 * inner
                        + 4 * B * heads * Np * Np * dh
                        + 2 * M * inner * dim
                        + 4 * M * dim * mlp)
             + 2 * B * dim * ncls)
    transcendentals = depth * (B * heads * Np * Np + M * mlp)
    bytes_accessed = 4 * (sum(int(a.size) for a in args) + B * ncls)

    kern = functools.partial(
        _vit_forward_kernel, batch=B, seq=Np, heads=heads, dim_head=dh,
        eps=_BN_EPS, use_bf16=use_bf16_matmul)

    # The layer axis is a true sequential dependency ("arbitrary"); BlockSpec
    # still double-buffers layer l+1's weights behind layer l's compute.
    # TODO(synk): shard tokens across v7x's two TensorCores (needs a
    # cross-core BatchNorm reduction) if this ever becomes compute-bound.
    return pl.pallas_call(
        kern,
        out_shape=jax.ShapeDtypeStruct((B, ncls), jnp.float32),
        grid=(depth,),
        in_specs=in_specs,
        out_specs=pl.BlockSpec((B, ncls), lambda l: (0, 0)),
        scratch_shapes=[pltpu.VMEM((B, Np, dim), jnp.float32),
                        pltpu.VMEM((B, Np, dim), jnp.float32)],
        compiler_params=pltpu.CompilerParams(
            dimension_semantics=("arbitrary",),
            vmem_limit_bytes=vmem_limit),
        cost_estimate=pl.CostEstimate(flops=flops,
                                      transcendentals=transcendentals,
                                      bytes_accessed=bytes_accessed),
    )(*args)


# --------------------------- parameters ----------------------------------------

def init_vit_params(key, cfg):
    C = cfg["channels"]
    P = cfg["patch_size"]
    dim = cfg["dim"]
    heads, dh = cfg["heads"], cfg["dim_head"]
    inner = heads * dh
    mlp = cfg["mlp_dim"]
    depth = cfg["depth"]
    ncls = cfg["num_classes"]
    patch_dim = C * P * P
    n_patches = (cfg["image_size"] // P) ** 2

    def nrm(k, shape, scale=0.02):
        return scale * jax.random.normal(k, shape, jnp.float32)

    ks = jax.random.split(key, 9)
    qkv_w = nrm(ks[5], (depth, dim, 3 * inner))
    # Fold the 1/sqrt(dim_head) query scale into the q columns of the qkv
    # weight: x @ (Wq * s) == (x @ Wq) * s, identical to `q * self.scale`.
    # (to_qkv has bias=False in the torch model.)
    qkv_w = qkv_w.at[:, :, :inner].multiply(dh ** -0.5)
    return {
        "patch_w": nrm(ks[0], (patch_dim, dim)),
        "patch_b": jnp.zeros((dim,), jnp.float32),
        "cls_token": jax.random.normal(ks[1], (1, 1, dim), jnp.float32),
        "pos_embedding": jax.random.normal(ks[2], (1, n_patches + 1, dim),
                                           jnp.float32),
        "head_w": nrm(ks[3], (dim, ncls)),
        "head_b": jnp.zeros((ncls,), jnp.float32),
        # Per-layer weights stacked along a leading depth axis; the fused
        # kernel streams one layer per grid step.
        "qkv_w": qkv_w,
        "proj_w": nrm(ks[4], (depth, inner, dim)),
        "proj_b": jnp.zeros((depth, 1, dim), jnp.float32),
        "bn1_g": jnp.ones((depth, 1, dim), jnp.float32),
        "bn1_b": jnp.zeros((depth, 1, dim), jnp.float32),
        "w1": nrm(ks[6], (depth, dim, mlp)),
        "b1": jnp.zeros((depth, 1, mlp), jnp.float32),
        "w2": nrm(ks[7], (depth, mlp, dim)),
        "b2": jnp.zeros((depth, 1, dim), jnp.float32),
        "bn2_g": jnp.ones((depth, 1, dim), jnp.float32),
        "bn2_b": jnp.zeros((depth, 1, dim), jnp.float32),
    }


# --------------------------- demo / entry point ---------------------------------

if __name__ == "__main__":
    cfg = dict(image_size=16, patch_size=4, channels=3, num_classes=10,
               dim=32, depth=2, heads=2, dim_head=16, mlp_dim=64)

    key = jax.random.PRNGKey(0)
    pkey, xkey = jax.random.split(key)
    params = init_vit_params(pkey, cfg)

    img = jax.random.normal(
        xkey, (2, cfg["channels"], cfg["image_size"], cfg["image_size"]),
        jnp.float32)

    fwd = jax.jit(functools.partial(vit_forward, cfg=cfg))
    logits = fwd(params, img)
    jax.block_until_ready(logits)
    assert logits.shape == (2, cfg["num_classes"]), logits.shape
    assert bool(jnp.all(jnp.isfinite(logits)))
    print("KERNEL_OK")
</pallas_src>

<mosaic_0001>
module attributes {stable_mosaic.version = 11 : i64} {
  func.func @_vit_forward_kernel(%arg0: i32, %arg1: memref<2x17x48xf32, #tpu.memory_space<vmem>>, %arg2: memref<48x32xf32, #tpu.memory_space<vmem>>, %arg3: memref<17x32xf32, #tpu.memory_space<vmem>>, %arg4: memref<1x32x96xf32, #tpu.memory_space<vmem>>, %arg5: memref<1x32x32xf32, #tpu.memory_space<vmem>>, %arg6: memref<1x1x32xf32, #tpu.memory_space<vmem>>, %arg7: memref<1x1x32xf32, #tpu.memory_space<vmem>>, %arg8: memref<1x1x32xf32, #tpu.memory_space<vmem>>, %arg9: memref<1x32x64xf32, #tpu.memory_space<vmem>>, %arg10: memref<1x1x64xf32, #tpu.memory_space<vmem>>, %arg11: memref<1x64x32xf32, #tpu.memory_space<vmem>>, %arg12: memref<1x1x32xf32, #tpu.memory_space<vmem>>, %arg13: memref<1x1x32xf32, #tpu.memory_space<vmem>>, %arg14: memref<1x1x32xf32, #tpu.memory_space<vmem>>, %arg15: memref<32x10xf32, #tpu.memory_space<vmem>>, %arg16: memref<1x10xf32, #tpu.memory_space<vmem>>, %arg17: memref<2x10xf32, #tpu.memory_space<vmem>>, %arg18: memref<2x17x32xf32, #tpu.memory_space<vmem>>, %arg19: memref<2x17x32xf32, #tpu.memory_space<vmem>>) attributes {dimension_semantics = [#tpu.dimension_semantics<arbitrary>], iteration_bounds = array<i64: 2>, scalar_prefetch = 0 : i64, scratch_operands = 2 : i64, tpu.core_type = #tpu.core_type<tc>, window_params = [{pipeline_mode = #tpu.pipeline_mode<synchronous>, transform_indices = @transform_0, window_bounds = array<i64: 2, 17, 48>}, {pipeline_mode = #tpu.pipeline_mode<synchronous>, transform_indices = @transform_1, window_bounds = array<i64: 48, 32>}, {pipeline_mode = #tpu.pipeline_mode<synchronous>, transform_indices = @transform_2, window_bounds = array<i64: 17, 32>}, {transform_indices = @transform_3, window_bounds = array<i64: 1, 32, 96>}, {transform_indices = @transform_4, window_bounds = array<i64: 1, 32, 32>}, {transform_indices = @transform_5, window_bounds = array<i64: 1, 1, 32>}, {transform_indices = @transform_6, window_bounds = array<i64: 1, 1, 32>}, {transform_indices = @transform_7, window_bounds = array<i64: 1, 1, 32>}, {transform_indices = @transform_8, window_bounds = array<i64: 1, 32, 64>}, {transform_indices = @transform_9, window_bounds = array<i64: 1, 1, 64>}, {transform_indices = @transform_10, window_bounds = array<i64: 1, 64, 32>}, {transform_indices = @transform_11, window_bounds = array<i64: 1, 1, 32>}, {transform_indices = @transform_12, window_bounds = array<i64: 1, 1, 32>}, {transform_indices = @transform_13, window_bounds = array<i64: 1, 1, 32>}, {pipeline_mode = #tpu.pipeline_mode<synchronous>, transform_indices = @transform_14, window_bounds = array<i64: 32, 10>}, {pipeline_mode = #tpu.pipeline_mode<synchronous>, transform_indices = @transform_15, window_bounds = array<i64: 1, 10>}, {pipeline_mode = #tpu.pipeline_mode<synchronous>, transform_indices = @transform_16, window_bounds = array<i64: 2, 10>}]} {
    %c0_i32 = arith.constant 0 : i32
    %0 = arith.cmpi eq, %arg0, %c0_i32 : i32
    %1 = arith.extui %0 : i1 to i32
    %c0_i32_0 = arith.constant 0 : i32
    %2 = arith.cmpi ne, %1, %c0_i32_0 : i32
    scf.if %2 {
      %c0_138 = arith.constant 0 : index
      %c0_139 = arith.constant 0 : index
      %288 = vector.load %arg2[%c0_138, %c0_139] : memref<48x32xf32, #tpu.memory_space<vmem>>, vector<48x32xf32>
      %c0_140 = arith.constant 0 : index
      %c0_141 = arith.constant 0 : index
      %289 = vector.load %arg3[%c0_140, %c0_141] : memref<17x32xf32, #tpu.memory_space<vmem>>, vector<17x32xf32>
      %c0_142 = arith.constant 0 : index
      %c0_143 = arith.constant 0 : index
      %c0_144 = arith.constant 0 : index
      %290 = vector.load %arg1[%c0_142, %c0_143, %c0_144] : memref<2x17x48xf32, #tpu.memory_space<vmem>>, vector<1x17x48xf32>
      %291 = vector.shape_cast %290 : vector<1x17x48xf32> to vector<17x48xf32>
      %292 = arith.truncf %291 : vector<17x48xf32> to vector<17x48xbf16>
      %293 = arith.truncf %288 : vector<48x32xf32> to vector<48x32xbf16>
      %cst_145 = arith.constant dense<0.000000e+00> : vector<17x32xf32>
      %294 = tpu.matmul %292, %293, %cst_145 {dimension_numbers = #tpu.dot_dimension_numbers<[1], [0], [0], [1], [0, 0, 1, 1], [], []>} : vector<17x48xbf16>, vector<48x32xbf16>, vector<17x32xf32> -> vector<17x32xf32>
      %295 = arith.addf %294, %289 : vector<17x32xf32>
      %c0_146 = arith.constant 0 : index
      %c0_147 = arith.constant 0 : index
      %c0_148 = arith.constant 0 : index
      %296 = vector.load %arg18[%c0_146, %c0_147, %c0_148] : memref<2x17x32xf32, #tpu.memory_space<vmem>>, vector<1x17x32xf32>
      %297 = vector.shape_cast %296 : vector<1x17x32xf32> to vector<17x32xf32>
      %298 = vector.shape_cast %295 : vector<17x32xf32> to vector<1x17x32xf32>
      tpu.vector_store %arg18[%c0_146, %c0_147, %c0_148], %298 {strides = array<i32>} : memref<2x17x32xf32, #tpu.memory_space<vmem>>, vector<1x17x32xf32>,
      %c1_149 = arith.constant 1 : index
      %c0_150 = arith.constant 0 : index
      %c0_151 = arith.constant 0 : index
      %299 = vector.load %arg1[%c1_149, %c0_150, %c0_151] : memref<2x17x48xf32, #tpu.memory_space<vmem>>, vector<1x17x48xf32>
      %300 = vector.shape_cast %299 : vector<1x17x48xf32> to vector<17x48xf32>
      %301 = arith.truncf %300 : vector<17x48xf32> to vector<17x48xbf16>
      %302 = arith.truncf %288 : vector<48x32xf32> to vector<48x32xbf16>
      %cst_152 = arith.constant dense<0.000000e+00> : vector<17x32xf32>
      %303 = tpu.matmul %301, %302, %cst_152 {dimension_numbers = #tpu.dot_dimension_numbers<[1], [0], [0], [1], [0, 0, 1, 1], [], []>} : vector<17x48xbf16>, vector<48x32xbf16>, vector<17x32xf32> -> vector<17x32xf32>
      %304 = arith.addf %303, %289 : vector<17x32xf32>
      %c1_153 = arith.constant 1 : index
      %c0_154 = arith.constant 0 : index
      %c0_155 = arith.constant 0 : index
      %305 = vector.load %arg18[%c1_153, %c0_154, %c0_155] : memref<2x17x32xf32, #tpu.memory_space<vmem>>, vector<1x17x32xf32>
      %306 = vector.shape_cast %305 : vector<1x17x32xf32> to vector<17x32xf32>
      %307 = vector.shape_cast %304 : vector<17x32xf32> to vector<1x17x32xf32>
      tpu.vector_store %arg18[%c1_153, %c0_154, %c0_155], %307 {strides = array<i32>} : memref<2x17x32xf32, #tpu.memory_space<vmem>>, vector<1x17x32xf32>,
    } else {
    }
    %c0 = arith.constant 0 : index
    %c0_1 = arith.constant 0 : index
    %c0_2 = arith.constant 0 : index
    %3 = vector.load %arg4[%c0, %c0_1, %c0_2] : memref<1x32x96xf32, #tpu.memory_space<vmem>>, vector<1x32x96xf32>
    %4 = vector.shape_cast %3 : vector<1x32x96xf32> to vector<32x96xf32>
    %c0_3 = arith.constant 0 : index
    %c0_4 = arith.constant 0 : index
    %c0_5 = arith.constant 0 : index
    %5 = vector.load %arg5[%c0_3, %c0_4, %c0_5] : memref<1x32x32xf32, #tpu.memory_space<vmem>>, vector<1x32x32xf32>
    %6 = vector.shape_cast %5 : vector<1x32x32xf32> to vector<32x32xf32>
    %c0_6 = arith.constant 0 : index
    %c0_7 = arith.constant 0 : index
    %c0_8 = arith.constant 0 : index
    %7 = vector.load %arg6[%c0_6, %c0_7, %c0_8] : memref<1x1x32xf32, #tpu.memory_space<vmem>>, vector<1x1x32xf32>
    %8 = vector.shape_cast %7 : vector<1x1x32xf32> to vector<1x32xf32>
    %cst = arith.constant 0.000000e+00 : f32
    %9 = vector.broadcast %cst : f32 to vector<1x32xf32>
    %cst_9 = arith.constant 0.000000e+00 : f32
    %10 = vector.broadcast %cst_9 : f32 to vector<1x32xf32>
    %c0_10 = arith.constant 0 : index
    %c0_11 = arith.constant 0 : index
    %c0_12 = arith.constant 0 : index
    %11 = vector.load %arg18[%c0_10, %c0_11, %c0_12] : memref<2x17x32xf32, #tpu.memory_space<vmem>>, vector<1x17x32xf32>
    %12 = vector.shape_cast %11 : vector<1x17x32xf32> to vector<17x32xf32>
    %13 = arith.truncf %12 : vector<17x32xf32> to vector<17x32xbf16>
    %14 = arith.truncf %4 : vector<32x96xf32> to vector<32x96xbf16>
    %cst_13 = arith.constant dense<0.000000e+00> : vector<17x96xf32>
    %15 = tpu.matmul %13, %14, %cst_13 {dimension_numbers = #tpu.dot_dimension_numbers<[1], [0], [0], [1], [0, 0, 1, 1], [], []>} : vector<17x32xbf16>, vector<32x96xbf16>, vector<17x96xf32> -> vector<17x96xf32>
    %cst_14 = arith.constant 0.000000e+00 : f32
    %16 = vector.broadcast %cst_14 : f32 to vector<17x32xf32>
    %17 = vector.extract_strided_slice %15 {offsets = [0, 0], sizes = [17, 16], strides = [1, 1]} : vector<17x96xf32> to vector<17x16xf32>
    %18 = vector.extract_strided_slice %15 {offsets = [0, 32], sizes = [17, 16], strides = [1, 1]} : vector<17x96xf32> to vector<17x16xf32>
    %19 = vector.extract_strided_slice %15 {offsets = [0, 64], sizes = [17, 16], strides = [1, 1]} : vector<17x96xf32> to vector<17x16xf32>
    %20 = arith.truncf %17 : vector<17x16xf32> to vector<17x16xbf16>
    %21 = arith.truncf %18 : vector<17x16xf32> to vector<17x16xbf16>
    %cst_15 = arith.constant dense<0.000000e+00> : vector<17x17xf32>
    %22 = tpu.matmul %20, %21, %cst_15 {dimension_numbers = #tpu.dot_dimension_numbers<[1], [1], [0], [0], [0, 0, 1, 0], [], []>} : vector<17x16xbf16>, vector<17x16xbf16>, vector<17x17xf32> -> vector<17x17xf32>
    %cst_16 = arith.constant dense<0xFF800000> : vector<17xf32>
    %23 = vector.multi_reduction <maximumf>, %22, %cst_16 [1] : vector<17x17xf32> to vector<17xf32>
    %24 = vector.shape_cast %23 : vector<17xf32> to vector<17x1xf32>
    %25 = vector.broadcast %24 : vector<17x1xf32> to vector<17x17xf32>
    %26 = arith.subf %22, %25 : vector<17x17xf32>
    %27 = math.exp %26 : vector<17x17xf32>
    %cst_17 = arith.constant dense<0.000000e+00> : vector<17xf32>
    %28 = vector.multi_reduction <add>, %27, %cst_17 [1] : vector<17x17xf32> to vector<17xf32>
    %29 = vector.shape_cast %28 : vector<17xf32> to vector<17x1xf32>
    %30 = vector.broadcast %29 : vector<17x1xf32> to vector<17x17xf32>
    %31 = arith.divf %27, %30 : vector<17x17xf32>
    %32 = arith.truncf %31 : vector<17x17xf32> to vector<17x17xbf16>
    %33 = arith.truncf %19 : vector<17x16xf32> to vector<17x16xbf16>
    %cst_18 = arith.constant dense<0.000000e+00> : vector<17x16xf32>
    %34 = tpu.matmul %32, %33, %cst_18 {dimension_numbers = #tpu.dot_dimension_numbers<[1], [0], [0], [1], [0, 0, 1, 1], [], []>} : vector<17x17xbf16>, vector<17x16xbf16>, vector<17x16xf32> -> vector<17x16xf32>
    %35 = vector.extract_strided_slice %6 {offsets = [0, 0], sizes = [16, 32], strides = [1, 1]} : vector<32x32xf32> to vector<16x32xf32>
    %36 = arith.truncf %34 : vector<17x16xf32> to vector<17x16xbf16>
    %37 = arith.truncf %35 : vector<16x32xf32> to vector<16x32xbf16>
    %cst_19 = arith.constant dense<0.000000e+00> : vector<17x32xf32>
    %38 = tpu.matmul %36, %37, %cst_19 {dimension_numbers = #tpu.dot_dimension_numbers<[1], [0], [0], [1], [0, 0, 1, 1], [], []>} : vector<17x16xbf16>, vector<16x32xbf16>, vector<17x32xf32> -> vector<17x32xf32>
    %39 = arith.addf %16, %38 : vector<17x32xf32>
    %40 = vector.extract_strided_slice %15 {offsets = [0, 16], sizes = [17, 16], strides = [1, 1]} : vector<17x96xf32> to vector<17x16xf32>
    %41 = vector.extract_strided_slice %15 {offsets = [0, 48], sizes = [17, 16], strides = [1, 1]} : vector<17x96xf32> to vector<17x16xf32>
    %42 = vector.extract_strided_slice %15 {offsets = [0, 80], sizes = [17, 16], strides = [1, 1]} : vector<17x96xf32> to vector<17x16xf32>
    %43 = arith.truncf %40 : vector<17x16xf32> to vector<17x16xbf16>
    %44 = arith.truncf %41 : vector<17x16xf32> to vector<17x16xbf16>
    %cst_20 = arith.constant dense<0.000000e+00> : vector<17x17xf32>
    %45 = tpu.matmul %43, %44, %cst_20 {dimension_numbers = #tpu.dot_dimension_numbers<[1], [1], [0], [0], [0, 0, 1, 0], [], []>} : vector<17x16xbf16>, vector<17x16xbf16>, vector<17x17xf32> -> vector<17x17xf32>
    %cst_21 = arith.constant dense<0xFF800000> : vector<17xf32>
    %46 = vector.multi_reduction <maximumf>, %45, %cst_21 [1] : vector<17x17xf32> to vector<17xf32>
    %47 = vector.shape_cast %46 : vector<17xf32> to vector<17x1xf32>
    %48 = vector.broadcast %47 : vector<17x1xf32> to vector<17x17xf32>
    %49 = arith.subf %45, %48 : vector<17x17xf32>
    %50 = math.exp %49 : vector<17x17xf32>
    %cst_22 = arith.constant dense<0.000000e+00> : vector<17xf32>
    %51 = vector.multi_reduction <add>, %50, %cst_22 [1] : vector<17x17xf32> to vector<17xf32>
    %52 = vector.shape_cast %51 : vector<17xf32> to vector<17x1xf32>
    %53 = vector.broadcast %52 : vector<17x1xf32> to vector<17x17xf32>
    %54 = arith.divf %50, %53 : vector<17x17xf32>
    %55 = arith.truncf %54 : vector<17x17xf32> to vector<17x17xbf16>
    %56 = arith.truncf %42 : vector<17x16xf32> to vector<17x16xbf16>
    %cst_23 = arith.constant dense<0.000000e+00> : vector<17x16xf32>
    %57 = tpu.matmul %55, %56, %cst_23 {dimension_numbers = #tpu.dot_dimension_numbers<[1], [0], [0], [1], [0, 0, 1, 1], [], []>} : vector<17x17xbf16>, vector<17x16xbf16>, vector<17x16xf32> -> vector<17x16xf32>
    %58 = vector.extract_strided_slice %6 {offsets = [16, 0], sizes = [16, 32], strides = [1, 1]} : vector<32x32xf32> to vector<16x32xf32>
    %59 = arith.truncf %57 : vector<17x16xf32> to vector<17x16xbf16>
    %60 = arith.truncf %58 : vector<16x32xf32> to vector<16x32xbf16>
    %cst_24 = arith.constant dense<0.000000e+00> : vector<17x32xf32>
    %61 = tpu.matmul %59, %60, %cst_24 {dimension_numbers = #tpu.dot_dimension_numbers<[1], [0], [0], [1], [0, 0, 1, 1], [], []>} : vector<17x16xbf16>, vector<16x32xbf16>, vector<17x32xf32> -> vector<17x32xf32>
    %62 = arith.addf %39, %61 : vector<17x32xf32>
    %63 = vector.broadcast %8 : vector<1x32xf32> to vector<17x32xf32>
    %64 = arith.addf %62, %63 : vector<17x32xf32>
    %c0_25 = arith.constant 0 : index
    %c0_26 = arith.constant 0 : index
    %c0_27 = arith.constant 0 : index
    %65 = vector.load %arg19[%c0_25, %c0_26, %c0_27] : memref<2x17x32xf32, #tpu.memory_space<vmem>>, vector<1x17x32xf32>
    %66 = vector.shape_cast %65 : vector<1x17x32xf32> to vector<17x32xf32>
    %67 = vector.shape_cast %64 : vector<17x32xf32> to vector<1x17x32xf32>
    tpu.vector_store %arg19[%c0_25, %c0_26, %c0_27], %67 {strides = array<i32>} : memref<2x17x32xf32, #tpu.memory_space<vmem>>, vector<1x17x32xf32>,
    %cst_28 = arith.constant dense<0.000000e+00> : vector<32xf32>
    %68 = vector.multi_reduction <add>, %64, %cst_28 [0] : vector<17x32xf32> to vector<32xf32>
    %69 = vector.shape_cast %68 : vector<32xf32> to vector<1x32xf32>
    %70 = arith.addf %9, %69 : vector<1x32xf32>
    %71 = arith.mulf %64, %64 : vector<17x32xf32>
    %cst_29 = arith.constant dense<0.000000e+00> : vector<32xf32>
    %72 = vector.multi_reduction <add>, %71, %cst_29 [0] : vector<17x32xf32> to vector<32xf32>
    %73 = vector.shape_cast %72 : vector<32xf32> to vector<1x32xf32>
    %74 = arith.addf %10, %73 : vector<1x32xf32>
    %c1 = arith.constant 1 : index
    %c0_30 = arith.constant 0 : index
    %c0_31 = arith.constant 0 : index
    %75 = vector.load %arg18[%c1, %c0_30, %c0_31] : memref<2x17x32xf32, #tpu.memory_space<vmem>>, vector<1x17x32xf32>
    %76 = vector.shape_cast %75 : vector<1x17x32xf32> to vector<17x32xf32>
    %77 = arith.truncf %76 : vector<17x32xf32> to vector<17x32xbf16>
    %78 = arith.truncf %4 : vector<32x96xf32> to vector<32x96xbf16>
    %cst_32 = arith.constant dense<0.000000e+00> : vector<17x96xf32>
    %79 = tpu.matmul %77, %78, %cst_32 {dimension_numbers = #tpu.dot_dimension_numbers<[1], [0], [0], [1], [0, 0, 1, 1], [], []>} : vector<17x32xbf16>, vector<32x96xbf16>, vector<17x96xf32> -> vector<17x96xf32>
    %cst_33 = arith.constant 0.000000e+00 : f32
    %80 = vector.broadcast %cst_33 : f32 to vector<17x32xf32>
    %81 = vector.extract_strided_slice %79 {offsets = [0, 0], sizes = [17, 16], strides = [1, 1]} : vector<17x96xf32> to vector<17x16xf32>
    %82 = vector.extract_strided_slice %79 {offsets = [0, 32], sizes = [17, 16], strides = [1, 1]} : vector<17x96xf32> to vector<17x16xf32>
    %83 = vector.extract_strided_slice %79 {offsets = [0, 64], sizes = [17, 16], strides = [1, 1]} : vector<17x96xf32> to vector<17x16xf32>
    %84 = arith.truncf %81 : vector<17x16xf32> to vector<17x16xbf16>
    %85 = arith.truncf %82 : vector<17x16xf32> to vector<17x16xbf16>
    %cst_34 = arith.constant dense<0.000000e+00> : vector<17x17xf32>
    %86 = tpu.matmul %84, %85, %cst_34 {dimension_numbers = #tpu.dot_dimension_numbers<[1], [1], [0], [0], [0, 0, 1, 0], [], []>} : vector<17x16xbf16>, vector<17x16xbf16>, vector<17x17xf32> -> vector<17x17xf32>
    %cst_35 = arith.constant dense<0xFF800000> : vector<17xf32>
    %87 = vector.multi_reduction <maximumf>, %86, %cst_35 [1] : vector<17x17xf32> to vector<17xf32>
    %88 = vector.shape_cast %87 : vector<17xf32> to vector<17x1xf32>
    %89 = vector.broadcast %88 : vector<17x1xf32> to vector<17x17xf32>
    %90 = arith.subf %86, %89 : vector<17x17xf32>
    %91 = math.exp %90 : vector<17x17xf32>
    %cst_36 = arith.constant dense<0.000000e+00> : vector<17xf32>
    %92 = vector.multi_reduction <add>, %91, %cst_36 [1] : vector<17x17xf32> to vector<17xf32>
    %93 = vector.shape_cast %92 : vector<17xf32> to vector<17x1xf32>
    %94 = vector.broadcast %93 : vector<17x1xf32> to vector<17x17xf32>
    %95 = arith.divf %91, %94 : vector<17x17xf32>
    %96 = arith.truncf %95 : vector<17x17xf32> to vector<17x17xbf16>
    %97 = arith.truncf %83 : vector<17x16xf32> to vector<17x16xbf16>
    %cst_37 = arith.constant dense<0.000000e+00> : vector<17x16xf32>
    %98 = tpu.matmul %96, %97, %cst_37 {dimension_numbers = #tpu.dot_dimension_numbers<[1], [0], [0], [1], [0, 0, 1, 1], [], []>} : vector<17x17xbf16>, vector<17x16xbf16>, vector<17x16xf32> -> vector<17x16xf32>
    %99 = vector.extract_strided_slice %6 {offsets = [0, 0], sizes = [16, 32], strides = [1, 1]} : vector<32x32xf32> to vector<16x32xf32>
    %100 = arith.truncf %98 : vector<17x16xf32> to vector<17x16xbf16>
    %101 = arith.truncf %99 : vector<16x32xf32> to vector<16x32xbf16>
    %cst_38 = arith.constant dense<0.000000e+00> : vector<17x32xf32>
    %102 = tpu.matmul %100, %101, %cst_38 {dimension_numbers = #tpu.dot_dimension_numbers<[1], [0], [0], [1], [0, 0, 1, 1], [], []>} : vector<17x16xbf16>, vector<16x32xbf16>, vector<17x32xf32> -> vector<17x32xf32>
    %103 = arith.addf %80, %102 : vector<17x32xf32>
    %104 = vector.extract_strided_slice %79 {offsets = [0, 16], sizes = [17, 16], strides = [1, 1]} : vector<17x96xf32> to vector<17x16xf32>
    %105 = vector.extract_strided_slice %79 {offsets = [0, 48], sizes = [17, 16], strides = [1, 1]} : vector<17x96xf32> to vector<17x16xf32>
    %106 = vector.extract_strided_slice %79 {offsets = [0, 80], sizes = [17, 16], strides = [1, 1]} : vector<17x96xf32> to vector<17x16xf32>
    %107 = arith.truncf %104 : vector<17x16xf32> to vector<17x16xbf16>
    %108 = arith.truncf %105 : vector<17x16xf32> to vector<17x16xbf16>
    %cst_39 = arith.constant dense<0.000000e+00> : vector<17x17xf32>
    %109 = tpu.matmul %107, %108, %cst_39 {dimension_numbers = #tpu.dot_dimension_numbers<[1], [1], [0], [0], [0, 0, 1, 0], [], []>} : vector<17x16xbf16>, vector<17x16xbf16>, vector<17x17xf32> -> vector<17x17xf32>
    %cst_40 = arith.constant dense<0xFF800000> : vector<17xf32>
    %110 = vector.multi_reduction <maximumf>, %109, %cst_40 [1] : vector<17x17xf32> to vector<17xf32>
    %111 = vector.shape_cast %110 : vector<17xf32> to vector<17x1xf32>
    %112 = vector.broadcast %111 : vector<17x1xf32> to vector<17x17xf32>
    %113 = arith.subf %109, %112 : vector<17x17xf32>
    %114 = math.exp %113 : vector<17x17xf32>
    %cst_41 = arith.constant dense<0.000000e+00> : vector<17xf32>
    %115 = vector.multi_reduction <add>, %114, %cst_41 [1] : vector<17x17xf32> to vector<17xf32>
    %116 = vector.shape_cast %115 : vector<17xf32> to vector<17x1xf32>
    %117 = vector.broadcast %116 : vector<17x1xf32> to vector<17x17xf32>
    %118 = arith.divf %114, %117 : vector<17x17xf32>
    %119 = arith.truncf %118 : vector<17x17xf32> to vector<17x17xbf16>
    %120 = arith.truncf %106 : vector<17x16xf32> to vector<17x16xbf16>
    %cst_42 = arith.constant dense<0.000000e+00> : vector<17x16xf32>
    %121 = tpu.matmul %119, %120, %cst_42 {dimension_numbers = #tpu.dot_dimension_numbers<[1], [0], [0], [1], [0, 0, 1, 1], [], []>} : vector<17x17xbf16>, vector<17x16xbf16>, vector<17x16xf32> -> vector<17x16xf32>
    %122 = vector.extract_strided_slice %6 {offsets = [16, 0], sizes = [16, 32], strides = [1, 1]} : vector<32x32xf32> to vector<16x32xf32>
    %123 = arith.truncf %121 : vector<17x16xf32> to vector<17x16xbf16>
    %124 = arith.truncf %122 : vector<16x32xf32> to vector<16x32xbf16>
    %cst_43 = arith.constant dense<0.000000e+00> : vector<17x32xf32>
    %125 = tpu.matmul %123, %124, %cst_43 {dimension_numbers = #tpu.dot_dimension_numbers<[1], [0], [0], [1], [0, 0, 1, 1], [], []>} : vector<17x16xbf16>, vector<16x32xbf16>, vector<17x32xf32> -> vector<17x32xf32>
    %126 = arith.addf %103, %125 : vector<17x32xf32>
    %127 = vector.broadcast %8 : vector<1x32xf32> to vector<17x32xf32>
    %128 = arith.addf %126, %127 : vector<17x32xf32>
    %c1_44 = arith.constant 1 : index
    %c0_45 = arith.constant 0 : index
    %c0_46 = arith.constant 0 : index
    %129 = vector.load %arg19[%c1_44, %c0_45, %c0_46] : memref<2x17x32xf32, #tpu.memory_space<vmem>>, vector<1x17x32xf32>
    %130 = vector.shape_cast %129 : vector<1x17x32xf32> to vector<17x32xf32>
    %131 = vector.shape_cast %128 : vector<17x32xf32> to vector<1x17x32xf32>
    tpu.vector_store %arg19[%c1_44, %c0_45, %c0_46], %131 {strides = array<i32>} : memref<2x17x32xf32, #tpu.memory_space<vmem>>, vector<1x17x32xf32>,
    %cst_47 = arith.constant dense<0.000000e+00> : vector<32xf32>
    %132 = vector.multi_reduction <add>, %128, %cst_47 [0] : vector<17x32xf32> to vector<32xf32>
    %133 = vector.shape_cast %132 : vector<32xf32> to vector<1x32xf32>
    %134 = arith.addf %70, %133 : vector<1x32xf32>
    %135 = arith.mulf %128, %128 : vector<17x32xf32>
    %cst_48 = arith.constant dense<0.000000e+00> : vector<32xf32>
    %136 = vector.multi_reduction <add>, %135, %cst_48 [0] : vector<17x32xf32> to vector<32xf32>
    %137 = vector.shape_cast %136 : vector<32xf32> to vector<1x32xf32>
    %138 = arith.addf %74, %137 : vector<1x32xf32>
    %cst_49 = arith.constant 0.0294117648 : f32
    %139 = vector.broadcast %cst_49 : f32 to vector<1x32xf32>
    %140 = arith.mulf %134, %139 : vector<1x32xf32>
    %cst_50 = arith.constant 0.0294117648 : f32
    %141 = vector.broadcast %cst_50 : f32 to vector<1x32xf32>
    %142 = arith.mulf %138, %141 : vector<1x32xf32>
    %143 = arith.mulf %140, %140 : vector<1x32xf32>
    %144 = arith.subf %142, %143 : vector<1x32xf32>
    %cst_51 = arith.constant 9.99999974E-6 : f32
    %145 = vector.broadcast %cst_51 : f32 to vector<1x32xf32>
    %146 = arith.addf %144, %145 : vector<1x32xf32>
    %147 = math.rsqrt %146 : vector<1x32xf32>
    %c0_52 = arith.constant 0 : index
    %c0_53 = arith.constant 0 : index
    %c0_54 = arith.constant 0 : index
    %148 = vector.load %arg7[%c0_52, %c0_53, %c0_54] : memref<1x1x32xf32, #tpu.memory_space<vmem>>, vector<1x1x32xf32>
    %149 = vector.shape_cast %148 : vector<1x1x32xf32> to vector<1x32xf32>
    %150 = arith.mulf %147, %149 : vector<1x32xf32>
    %c0_55 = arith.constant 0 : index
    %c0_56 = arith.constant 0 : index
    %c0_57 = arith.constant 0 : index
    %151 = vector.load %arg8[%c0_55, %c0_56, %c0_57] : memref<1x1x32xf32, #tpu.memory_space<vmem>>, vector<1x1x32xf32>
    %152 = vector.shape_cast %151 : vector<1x1x32xf32> to vector<1x32xf32>
    %153 = arith.mulf %140, %150 : vector<1x32xf32>
    %154 = arith.subf %152, %153 : vector<1x32xf32>
    %c0_58 = arith.constant 0 : index
    %c0_59 = arith.constant 0 : index
    %c0_60 = arith.constant 0 : index
    %155 = vector.load %arg9[%c0_58, %c0_59, %c0_60] : memref<1x32x64xf32, #tpu.memory_space<vmem>>, vector<1x32x64xf32>
    %156 = vector.shape_cast %155 : vector<1x32x64xf32> to vector<32x64xf32>
    %c0_61 = arith.constant 0 : index
    %c0_62 = arith.constant 0 : index
    %c0_63 = arith.constant 0 : index
    %157 = vector.load %arg10[%c0_61, %c0_62, %c0_63] : memref<1x1x64xf32, #tpu.memory_space<vmem>>, vector<1x1x64xf32>
    %158 = vector.shape_cast %157 : vector<1x1x64xf32> to vector<1x64xf32>
    %c0_64 = arith.constant 0 : index
    %c0_65 = arith.constant 0 : index
    %c0_66 = arith.constant 0 : index
    %159 = vector.load %arg11[%c0_64, %c0_65, %c0_66] : memref<1x64x32xf32, #tpu.memory_space<vmem>>, vector<1x64x32xf32>
    %160 = vector.shape_cast %159 : vector<1x64x32xf32> to vector<64x32xf32>
    %c0_67 = arith.constant 0 : index
    %c0_68 = arith.constant 0 : index
    %c0_69 = arith.constant 0 : index
    %161 = vector.load %arg12[%c0_67, %c0_68, %c0_69] : memref<1x1x32xf32, #tpu.memory_space<vmem>>, vector<1x1x32xf32>
    %162 = vector.shape_cast %161 : vector<1x1x32xf32> to vector<1x32xf32>
    %cst_70 = arith.constant 0.000000e+00 : f32
    %163 = vector.broadcast %cst_70 : f32 to vector<1x32xf32>
    %cst_71 = arith.constant 0.000000e+00 : f32
    %164 = vector.broadcast %cst_71 : f32 to vector<1x32xf32>
    %c0_72 = arith.constant 0 : index
    %c0_73 = arith.constant 0 : index
    %c0_74 = arith.constant 0 : index
    %165 = vector.load %arg18[%c0_72, %c0_73, %c0_74] : memref<2x17x32xf32, #tpu.memory_space<vmem>>, vector<1x17x32xf32>
    %166 = vector.shape_cast %165 : vector<1x17x32xf32> to vector<17x32xf32>
    %c0_75 = arith.constant 0 : index
    %c0_76 = arith.constant 0 : index
    %c0_77 = arith.constant 0 : index
    %167 = vector.load %arg19[%c0_75, %c0_76, %c0_77] : memref<2x17x32xf32, #tpu.memory_space<vmem>>, vector<1x17x32xf32>
    %168 = vector.shape_cast %167 : vector<1x17x32xf32> to vector<17x32xf32>
    %169 = vector.broadcast %150 : vector<1x32xf32> to vector<17x32xf32>
    %170 = arith.mulf %168, %169 : vector<17x32xf32>
    %171 = arith.addf %166, %170 : vector<17x32xf32>
    %172 = vector.broadcast %154 : vector<1x32xf32> to vector<17x32xf32>
    %173 = arith.addf %171, %172 : vector<17x32xf32>
    %c0_78 = arith.constant 0 : index
    %c0_79 = arith.constant 0 : index
    %c0_80 = arith.constant 0 : index
    %174 = vector.load %arg18[%c0_78, %c0_79, %c0_80] : memref<2x17x32xf32, #tpu.memory_space<vmem>>, vector<1x17x32xf32>
    %175 = vector.shape_cast %174 : vector<1x17x32xf32> to vector<17x32xf32>
    %176 = vector.shape_cast %173 : vector<17x32xf32> to vector<1x17x32xf32>
    tpu.vector_store %arg18[%c0_78, %c0_79, %c0_80], %176 {strides = array<i32>} : memref<2x17x32xf32, #tpu.memory_space<vmem>>, vector<1x17x32xf32>,
    %177 = arith.truncf %173 : vector<17x32xf32> to vector<17x32xbf16>
    %178 = arith.truncf %156 : vector<32x64xf32> to vector<32x64xbf16>
    %cst_81 = arith.constant dense<0.000000e+00> : vector<17x64xf32>
    %179 = tpu.matmul %177, %178, %cst_81 {dimension_numbers = #tpu.dot_dimension_numbers<[1], [0], [0], [1], [0, 0, 1, 1], [], []>} : vector<17x32xbf16>, vector<32x64xbf16>, vector<17x64xf32> -> vector<17x64xf32>
    %180 = vector.broadcast %158 : vector<1x64xf32> to vector<17x64xf32>
    %181 = arith.addf %179, %180 : vector<17x64xf32>
    %cst_82 = arith.constant 5.000000e-01 : f32
    %182 = vector.broadcast %cst_82 : f32 to vector<17x64xf32>
    %183 = arith.mulf %182, %181 : vector<17x64xf32>
    %cst_83 = arith.constant 0.707106769 : f32
    %184 = vector.broadcast %cst_83 : f32 to vector<17x64xf32>
    %185 = arith.mulf %181, %184 : vector<17x64xf32>
    %186 = math.erf %185 : vector<17x64xf32>
    %cst_84 = arith.constant 1.000000e+00 : f32
    %187 = vector.broadcast %cst_84 : f32 to vector<17x64xf32>
    %188 = arith.addf %187, %186 : vector<17x64xf32>
    %189 = arith.mulf %183, %188 : vector<17x64xf32>
    %190 = arith.truncf %189 : vector<17x64xf32> to vector<17x64xbf16>
    %191 = arith.truncf %160 : vector<64x32xf32> to vector<64x32xbf16>
    %cst_85 = arith.constant dense<0.000000e+00> : vector<17x32xf32>
    %192 = tpu.matmul %190, %191, %cst_85 {dimension_numbers = #tpu.dot_dimension_numbers<[1], [0], [0], [1], [0, 0, 1, 1], [], []>} : vector<17x64xbf16>, vector<64x32xbf16>, vector<17x32xf32> -> vector<17x32xf32>
    %193 = vector.broadcast %162 : vector<1x32xf32> to vector<17x32xf32>
    %194 = arith.addf %192, %193 : vector<17x32xf32>
    %c0_86 = arith.constant 0 : index
    %c0_87 = arith.constant 0 : index
    %c0_88 = arith.constant 0 : index
    %195 = vector.load %arg19[%c0_86, %c0_87, %c0_88] : memref<2x17x32xf32, #tpu.memory_space<vmem>>, vector<1x17x32xf32>
    %196 = vector.shape_cast %195 : vector<1x17x32xf32> to vector<17x32xf32>
    %197 = vector.shape_cast %194 : vector<17x32xf32> to vector<1x17x32xf32>
    tpu.vector_store %arg19[%c0_86, %c0_87, %c0_88], %197 {strides = array<i32>} : memref<2x17x32xf32, #tpu.memory_space<vmem>>, vector<1x17x32xf32>,
    %cst_89 = arith.constant dense<0.000000e+00> : vector<32xf32>
    %198 = vector.multi_reduction <add>, %194, %cst_89 [0] : vector<17x32xf32> to vector<32xf32>
    %199 = vector.shape_cast %198 : vector<32xf32> to vector<1x32xf32>
    %200 = arith.addf %163, %199 : vector<1x32xf32>
    %201 = arith.mulf %194, %194 : vector<17x32xf32>
    %cst_90 = arith.constant dense<0.000000e+00> : vector<32xf32>
    %202 = vector.multi_reduction <add>, %201, %cst_90 [0] : vector<17x32xf32> to vector<32xf32>
    %203 = vector.shape_cast %202 : vector<32xf32> to vector<1x32xf32>
    %204 = arith.addf %164, %203 : vector<1x32xf32>
    %c1_91 = arith.constant 1 : index
    %c0_92 = arith.constant 0 : index
    %c0_93 = arith.constant 0 : index
    %205 = vector.load %arg18[%c1_91, %c0_92, %c0_93] : memref<2x17x32xf32, #tpu.memory_space<vmem>>, vector<1x17x32xf32>
    %206 = vector.shape_cast %205 : vector<1x17x32xf32> to vector<17x32xf32>
    %c1_94 = arith.constant 1 : index
    %c0_95 = arith.constant 0 : index
    %c0_96 = arith.constant 0 : index
    %207 = vector.load %arg19[%c1_94, %c0_95, %c0_96] : memref<2x17x32xf32, #tpu.memory_space<vmem>>, vector<1x17x32xf32>
    %208 = vector.shape_cast %207 : vector<1x17x32xf32> to vector<17x32xf32>
    %209 = vector.broadcast %150 : vector<1x32xf32> to vector<17x32xf32>
    %210 = arith.mulf %208, %209 : vector<17x32xf32>
    %211 = arith.addf %206, %210 : vector<17x32xf32>
    %212 = vector.broadcast %154 : vector<1x32xf32> to vector<17x32xf32>
    %213 = arith.addf %211, %212 : vector<17x32xf32>
    %c1_97 = arith.constant 1 : index
    %c0_98 = arith.constant 0 : index
    %c0_99 = arith.constant 0 : index
    %214 = vector.load %arg18[%c1_97, %c0_98, %c0_99] : memref<2x17x32xf32, #tpu.memory_space<vmem>>, vector<1x17x32xf32>
    %215 = vector.shape_cast %214 : vector<1x17x32xf32> to vector<17x32xf32>
    %216 = vector.shape_cast %213 : vector<17x32xf32> to vector<1x17x32xf32>
    tpu.vector_store %arg18[%c1_97, %c0_98, %c0_99], %216 {strides = array<i32>} : memref<2x17x32xf32, #tpu.memory_space<vmem>>, vector<1x17x32xf32>,
    %217 = arith.truncf %213 : vector<17x32xf32> to vector<17x32xbf16>
    %218 = arith.truncf %156 : vector<32x64xf32> to vector<32x64xbf16>
    %cst_100 = arith.constant dense<0.000000e+00> : vector<17x64xf32>
    %219 = tpu.matmul %217, %218, %cst_100 {dimension_numbers = #tpu.dot_dimension_numbers<[1], [0], [0], [1], [0, 0, 1, 1], [], []>} : vector<17x32xbf16>, vector<32x64xbf16>, vector<17x64xf32> -> vector<17x64xf32>
    %220 = vector.broadcast %158 : vector<1x64xf32> to vector<17x64xf32>
    %221 = arith.addf %219, %220 : vector<17x64xf32>
    %cst_101 = arith.constant 5.000000e-01 : f32
    %222 = vector.broadcast %cst_101 : f32 to vector<17x64xf32>
    %223 = arith.mulf %222, %221 : vector<17x64xf32>
    %cst_102 = arith.constant 0.707106769 : f32
    %224 = vector.broadcast %cst_102 : f32 to vector<17x64xf32>
    %225 = arith.mulf %221, %224 : vector<17x64xf32>
    %226 = math.erf %225 : vector<17x64xf32>
    %cst_103 = arith.constant 1.000000e+00 : f32
    %227 = vector.broadcast %cst_103 : f32 to vector<17x64xf32>
    %228 = arith.addf %227, %226 : vector<17x64xf32>
    %229 = arith.mulf %223, %228 : vector<17x64xf32>
    %230 = arith.truncf %229 : vector<17x64xf32> to vector<17x64xbf16>
    %231 = arith.truncf %160 : vector<64x32xf32> to vector<64x32xbf16>
    %cst_104 = arith.constant dense<0.000000e+00> : vector<17x32xf32>
    %232 = tpu.matmul %230, %231, %cst_104 {dimension_numbers = #tpu.dot_dimension_numbers<[1], [0], [0], [1], [0, 0, 1, 1], [], []>} : vector<17x64xbf16>, vector<64x32xbf16>, vector<17x32xf32> -> vector<17x32xf32>
    %233 = vector.broadcast %162 : vector<1x32xf32> to vector<17x32xf32>
    %234 = arith.addf %232, %233 : vector<17x32xf32>
    %c1_105 = arith.constant 1 : index
    %c0_106 = arith.constant 0 : index
    %c0_107 = arith.constant 0 : index
    %235 = vector.load %arg19[%c1_105, %c0_106, %c0_107] : memref<2x17x32xf32, #tpu.memory_space<vmem>>, vector<1x17x32xf32>
    %236 = vector.shape_cast %235 : vector<1x17x32xf32> to vector<17x32xf32>
    %237 = vector.shape_cast %234 : vector<17x32xf32> to vector<1x17x32xf32>
    tpu.vector_store %arg19[%c1_105, %c0_106, %c0_107], %237 {strides = array<i32>} : memref<2x17x32xf32, #tpu.memory_space<vmem>>, vector<1x17x32xf32>,
    %cst_108 = arith.constant dense<0.000000e+00> : vector<32xf32>
    %238 = vector.multi_reduction <add>, %234, %cst_108 [0] : vector<17x32xf32> to vector<32xf32>
    %239 = vector.shape_cast %238 : vector<32xf32> to vector<1x32xf32>
    %240 = arith.addf %200, %239 : vector<1x32xf32>
    %241 = arith.mulf %234, %234 : vector<17x32xf32>
    %cst_109 = arith.constant dense<0.000000e+00> : vector<32xf32>
    %242 = vector.multi_reduction <add>, %241, %cst_109 [0] : vector<17x32xf32> to vector<32xf32>
    %243 = vector.shape_cast %242 : vector<32xf32> to vector<1x32xf32>
    %244 = arith.addf %204, %243 : vector<1x32xf32>
    %cst_110 = arith.constant 0.0294117648 : f32
    %245 = vector.broadcast %cst_110 : f32 to vector<1x32xf32>
    %246 = arith.mulf %240, %245 : vector<1x32xf32>
    %cst_111 = arith.constant 0.0294117648 : f32
    %247 = vector.broadcast %cst_111 : f32 to vector<1x32xf32>
    %248 = arith.mulf %244, %247 : vector<1x32xf32>
    %249 = arith.mulf %246, %246 : vector<1x32xf32>
    %250 = arith.subf %248, %249 : vector<1x32xf32>
    %cst_112 = arith.constant 9.99999974E-6 : f32
    %251 = vector.broadcast %cst_112 : f32 to vector<1x32xf32>
    %252 = arith.addf %250, %251 : vector<1x32xf32>
    %253 = math.rsqrt %252 : vector<1x32xf32>
    %c0_113 = arith.constant 0 : index
    %c0_114 = arith.constant 0 : index
    %c0_115 = arith.constant 0 : index
    %254 = vector.load %arg13[%c0_113, %c0_114, %c0_115] : memref<1x1x32xf32, #tpu.memory_space<vmem>>, vector<1x1x32xf32>
    %255 = vector.shape_cast %254 : vector<1x1x32xf32> to vector<1x32xf32>
    %256 = arith.mulf %253, %255 : vector<1x32xf32>
    %c0_116 = arith.constant 0 : index
    %c0_117 = arith.constant 0 : index
    %c0_118 = arith.constant 0 : index
    %257 = vector.load %arg14[%c0_116, %c0_117, %c0_118] : memref<1x1x32xf32, #tpu.memory_space<vmem>>, vector<1x1x32xf32>
    %258 = vector.shape_cast %257 : vector<1x1x32xf32> to vector<1x32xf32>
    %259 = arith.mulf %246, %256 : vector<1x32xf32>
    %260 = arith.subf %258, %259 : vector<1x32xf32>
    %c0_119 = arith.constant 0 : index
    %c0_120 = arith.constant 0 : index
    %c0_121 = arith.constant 0 : index
    %261 = vector.load %arg18[%c0_119, %c0_120, %c0_121] : memref<2x17x32xf32, #tpu.memory_space<vmem>>, vector<1x17x32xf32>
    %262 = vector.shape_cast %261 : vector<1x17x32xf32> to vector<17x32xf32>
    %c0_122 = arith.constant 0 : index
    %c0_123 = arith.constant 0 : index
    %c0_124 = arith.constant 0 : index
    %263 = vector.load %arg19[%c0_122, %c0_123, %c0_124] : memref<2x17x32xf32, #tpu.memory_space<vmem>>, vector<1x17x32xf32>
    %264 = vector.shape_cast %263 : vector<1x17x32xf32> to vector<17x32xf32>
    %265 = vector.broadcast %256 : vector<1x32xf32> to vector<17x32xf32>
    %266 = arith.mulf %264, %265 : vector<17x32xf32>
    %267 = arith.addf %262, %266 : vector<17x32xf32>
    %268 = vector.broadcast %260 : vector<1x32xf32> to vector<17x32xf32>
    %269 = arith.addf %267, %268 : vector<17x32xf32>
    %c0_125 = arith.constant 0 : index
    %c0_126 = arith.constant 0 : index
    %c0_127 = arith.constant 0 : index
    %270 = vector.load %arg18[%c0_125, %c0_126, %c0_127] : memref<2x17x32xf32, #tpu.memory_space<vmem>>, vector<1x17x32xf32>
    %271 = vector.shape_cast %270 : vector<1x17x32xf32> to vector<17x32xf32>
    %272 = vector.shape_cast %269 : vector<17x32xf32> to vector<1x17x32xf32>
    tpu.vector_store %arg18[%c0_125, %c0_126, %c0_127], %272 {strides = array<i32>} : memref<2x17x32xf32, #tpu.memory_space<vmem>>, vector<1x17x32xf32>,
    %c1_128 = arith.constant 1 : index
    %c0_129 = arith.constant 0 : index
    %c0_130 = arith.constant 0 : index
    %273 = vector.load %arg18[%c1_128, %c0_129, %c0_130] : memref<2x17x32xf32, #tpu.memory_space<vmem>>, vector<1x17x32xf32>
    %274 = vector.shape_cast %273 : vector<1x17x32xf32> to vector<17x32xf32>
    %c1_131 = arith.constant 1 : index
    %c0_132 = arith.constant 0 : index
    %c0_133 = arith.constant 0 : index
    %275 = vector.load %arg19[%c1_131, %c0_132, %c0_133] : memref<2x17x32xf32, #tpu.memory_space<vmem>>, vector<1x17x32xf32>
    %276 = vector.shape_cast %275 : vector<1x17x32xf32> to vector<17x32xf32>
    %277 = vector.broadcast %256 : vector<1x32xf32> to vector<17x32xf32>
    %278 = arith.mulf %276, %277 : vector<17x32xf32>
    %279 = arith.addf %274, %278 : vector<17x32xf32>
    %280 = vector.broadcast %260 : vector<1x32xf32> to vector<17x32xf32>
    %281 = arith.addf %279, %280 : vector<17x32xf32>
    %c1_134 = arith.constant 1 : index
    %c0_135 = arith.constant 0 : index
    %c0_136 = arith.constant 0 : index
    %282 = vector.load %arg18[%c1_134, %c0_135, %c0_136] : memref<2x17x32xf32, #tpu.memory_space<vmem>>, vector<1x17x32xf32>
    %283 = vector.shape_cast %282 : vector<1x17x32xf32> to vector<17x32xf32>
    %284 = vector.shape_cast %281 : vector<17x32xf32> to vector<1x17x32xf32>
    tpu.vector_store %arg18[%c1_134, %c0_135, %c0_136], %284 {strides = array<i32>} : memref<2x17x32xf32, #tpu.memory_space<vmem>>, vector<1x17x32xf32>,
    %c1_i32 = arith.constant 1 : i32
    %285 = arith.cmpi eq, %arg0, %c1_i32 : i32
    %286 = arith.extui %285 : i1 to i32
    %c0_i32_137 = arith.constant 0 : i32
    %287 = arith.cmpi ne, %286, %c0_i32_137 : i32
    scf.if %287 {
      %c0_138 = arith.constant 0 : index
      %c0_139 = arith.constant 0 : index
      %c0_140 = arith.constant 0 : index
      %288 = vector.load %arg18[%c0_138, %c0_139, %c0_140] : memref<2x17x32xf32, #tpu.memory_space<vmem>>, vector<1x17x32xf32>
      %289 = vector.shape_cast %288 : vector<1x17x32xf32> to vector<17x32xf32>
      %290 = vector.extract_strided_slice %289 {offsets = [0, 0], sizes = [1, 32], strides = [1, 1]} : vector<17x32xf32> to vector<1x32xf32>
      %c1_141 = arith.constant 1 : index
      %c0_142 = arith.constant 0 : index
      %c0_143 = arith.constant 0 : index
      %291 = vector.load %arg18[%c1_141, %c0_142, %c0_143] : memref<2x17x32xf32, #tpu.memory_space<vmem>>, vector<1x17x32xf32>
      %292 = vector.shape_cast %291 : vector<1x17x32xf32> to vector<17x32xf32>
      %293 = vector.extract_strided_slice %292 {offsets = [0, 0], sizes = [1, 32], strides = [1, 1]} : vector<17x32xf32> to vector<1x32xf32>
      %294 = tpu.concatenate %290, %293 in 0 : vector<1x32xf32>, vector<1x32xf32> -> vector<2x32xf32>
      %c0_144 = arith.constant 0 : index
      %c0_145 = arith.constant 0 : index
      %295 = vector.load %arg15[%c0_144, %c0_145] : memref<32x10xf32, #tpu.memory_space<vmem>>, vector<32x10xf32>
      %296 = arith.truncf %294 : vector<2x32xf32> to vector<2x32xbf16>
      %297 = arith.truncf %295 : vector<32x10xf32> to vector<32x10xbf16>
      %cst_146 = arith.constant dense<0.000000e+00> : vector<2x10xf32>
      %298 = tpu.matmul %296, %297, %cst_146 {dimension_numbers = #tpu.dot_dimension_numbers<[1], [0], [0], [1], [0, 0, 1, 1], [], []>} : vector<2x32xbf16>, vector<32x10xbf16>, vector<2x10xf32> -> vector<2x10xf32>
      %c0_147 = arith.constant 0 : index
      %c0_148 = arith.constant 0 : index
      %299 = vector.load %arg16[%c0_147, %c0_148] : memref<1x10xf32, #tpu.memory_space<vmem>>, vector<1x10xf32>
      %300 = vector.broadcast %299 : vector<1x10xf32> to vector<2x10xf32>
      %301 = arith.addf %298, %300 : vector<2x10xf32>
      %c0_149 = arith.constant 0 : index
      %c0_150 = arith.constant 0 : index
      %302 = vector.load %arg17[%c0_149, %c0_150] : memref<2x10xf32, #tpu.memory_space<vmem>>, vector<2x10xf32>
      tpu.vector_store %arg17[%c0_149, %c0_150], %301 {strides = array<i32>} : memref<2x10xf32, #tpu.memory_space<vmem>>, vector<2x10xf32>,
    } else {
    }
    return
  }
  func.func @transform_0(%arg0: i32) -> (i32, i32, i32) {
    %c0_i32 = arith.constant 0 : i32
    %c0_i32_0 = arith.constant 0 : i32
    %c0_i32_1 = arith.constant 0 : i32
    %c0_i32_2 = arith.constant 0 : i32
    return %c0_i32, %c0_i32_0, %c0_i32_1 : i32, i32, i32
  }
  func.func @transform_1(%arg0: i32) -> (i32, i32) {
    %c0_i32 = arith.constant 0 : i32
    %c0_i32_0 = arith.constant 0 : i32
    %c0_i32_1 = arith.constant 0 : i32
    return %c0_i32, %c0_i32_0 : i32, i32
  }
  func.func @transform_2(%arg0: i32) -> (i32, i32) {
    %c0_i32 = arith.constant 0 : i32
    %c0_i32_0 = arith.constant 0 : i32
    %c0_i32_1 = arith.constant 0 : i32
    return %c0_i32, %c0_i32_0 : i32, i32
  }
  func.func @transform_3(%arg0: i32) -> (i32, i32, i32) {
    %c0_i32 = arith.constant 0 : i32
    %c0_i32_0 = arith.constant 0 : i32
    %c0_i32_1 = arith.constant 0 : i32
    return %arg0, %c0_i32, %c0_i32_0 : i32, i32, i32
  }
  func.func @transform_4(%arg0: i32) -> (i32, i32, i32) {
    %c0_i32 = arith.constant 0 : i32
    %c0_i32_0 = arith.constant 0 : i32
    %c0_i32_1 = arith.constant 0 : i32
    return %arg0, %c0_i32, %c0_i32_0 : i32, i32, i32
  }
  func.func @transform_5(%arg0: i32) -> (i32, i32, i32) {
    %c0_i32 = arith.constant 0 : i32
    %c0_i32_0 = arith.constant 0 : i32
    %c0_i32_1 = arith.constant 0 : i32
    return %arg0, %c0_i32, %c0_i32_0 : i32, i32, i32
  }
  func.func @transform_6(%arg0: i32) -> (i32, i32, i32) {
    %c0_i32 = arith.constant 0 : i32
    %c0_i32_0 = arith.constant 0 : i32
    %c0_i32_1 = arith.constant 0 : i32
    return %arg0, %c0_i32, %c0_i32_0 : i32, i32, i32
  }
  func.func @transform_7(%arg0: i32) -> (i32, i32, i32) {
    %c0_i32 = arith.constant 0 : i32
    %c0_i32_0 = arith.constant 0 : i32
    %c0_i32_1 = arith.constant 0 : i32
    return %arg0, %c0_i32, %c0_i32_0 : i32, i32, i32
  }
  func.func @transform_8(%arg0: i32) -> (i32, i32, i32) {
    %c0_i32 = arith.constant 0 : i32
    %c0_i32_0 = arith.constant 0 : i32
    %c0_i32_1 = arith.constant 0 : i32
    return %arg0, %c0_i32, %c0_i32_0 : i32, i32, i32
  }
  func.func @transform_9(%arg0: i32) -> (i32, i32, i32) {
    %c0_i32 = arith.constant 0 : i32
    %c0_i32_0 = arith.constant 0 : i32
    %c0_i32_1 = arith.constant 0 : i32
    return %arg0, %c0_i32, %c0_i32_0 : i32, i32, i32
  }
  func.func @transform_10(%arg0: i32) -> (i32, i32, i32) {
    %c0_i32 = arith.constant 0 : i32
    %c0_i32_0 = arith.constant 0 : i32
    %c0_i32_1 = arith.constant 0 : i32
    return %arg0, %c0_i32, %c0_i32_0 : i32, i32, i32
  }
  func.func @transform_11(%arg0: i32) -> (i32, i32, i32) {
    %c0_i32 = arith.constant 0 : i32
    %c0_i32_0 = arith.constant 0 : i32
    %c0_i32_1 = arith.constant 0 : i32
    return %arg0, %c0_i32, %c0_i32_0 : i32, i32, i32
  }
  func.func @transform_12(%arg0: i32) -> (i32, i32, i32) {
    %c0_i32 = arith.constant 0 : i32
    %c0_i32_0 = arith.constant 0 : i32
    %c0_i32_1 = arith.constant 0 : i32
    return %arg0, %c0_i32, %c0_i32_0 : i32, i32, i32
  }
  func.func @transform_13(%arg0: i32) -> (i32, i32, i32) {
    %c0_i32 = arith.constant 0 : i32
    %c0_i32_0 = arith.constant 0 : i32
    %c0_i32_1 = arith.constant 0 : i32
    return %arg0, %c0_i32, %c0_i32_0 : i32, i32, i32
  }
  func.func @transform_14(%arg0: i32) -> (i32, i32) {
    %c0_i32 = arith.constant 0 : i32
    %c0_i32_0 = arith.constant 0 : i32
    %c0_i32_1 = arith.constant 0 : i32
    return %c0_i32, %c0_i32_0 : i32, i32
  }
  func.func @transform_15(%arg0: i32) -> (i32, i32) {
    %c0_i32 = arith.constant 0 : i32
    %c0_i32_0 = arith.constant 0 : i32
    %c0_i32_1 = arith.constant 0 : i32
    return %c0_i32, %c0_i32_0 : i32, i32
  }
  func.func @transform_16(%arg0: i32) -> (i32, i32) {
    %c0_i32 = arith.constant 0 : i32
    %c0_i32_0 = arith.constant 0 : i32
    %c0_i32_1 = arith.constant 0 : i32
    return %c0_i32, %c0_i32_0 : i32, i32
  }
}

</mosaic_0001>

<llo_original>
// kernel: vit_forward.1
$region0: #{vit_forward.1}
  #allocation0 [shape = 'u32[]', space=smem, size = 0x4, offset = 0x4, fixed_abs, tag = 'smem constant byte address 0x4 - core index']
  #allocation1 [shape = 'u32[144,128]{1,0:T(1,128)}', space=vmem, size = 0x12000, scoped, tag = 'internal scratch']
  #allocation2 [shape = 'f32[2,17,32]{2,1,0:T(8,128)}', space=vmem, size = 0x6000, scoped, tag = 'scratch operand']
  #allocation3 [shape = 'f32[2,17,32]{2,1,0:T(8,128)}', space=vmem, size = 0x6000, scoped, tag = 'scratch operand']
  %s0 = inlined_call_operand.vmem [shape: f32[2,17,48], index: 0, kind: input, shape index: {}]
  %s1 = inlined_call_operand.vmem [shape: f32[48,32], index: 1, kind: input, shape index: {}]
  %s2 = inlined_call_operand.vmem [shape: f32[17,32], index: 2, kind: input, shape index: {}]
  %s3 = inlined_call_operand.vmem [shape: f32[2,32,96], index: 3, kind: input, shape index: {}]
  %s4 = inlined_call_operand.vmem [shape: f32[2,32,32], index: 4, kind: input, shape index: {}]
  %s5 = inlined_call_operand.vmem [shape: f32[2,1,32], index: 5, kind: input, shape index: {}]
  %s6 = inlined_call_operand.vmem [shape: f32[2,1,32], index: 6, kind: input, shape index: {}]
  %s7 = inlined_call_operand.vmem [shape: f32[2,1,32], index: 7, kind: input, shape index: {}]
  %s8 = inlined_call_operand.vmem [shape: f32[2,32,64], index: 8, kind: input, shape index: {}]
  %s9 = inlined_call_operand.vmem [shape: f32[2,1,64], index: 9, kind: input, shape index: {}]
  %s10 = inlined_call_operand.vmem [shape: f32[2,64,32], index: 10, kind: input, shape index: {}]
  %s11 = inlined_call_operand.vmem [shape: f32[2,1,32], index: 11, kind: input, shape index: {}]
  %s12 = inlined_call_operand.vmem [shape: f32[2,1,32], index: 12, kind: input, shape index: {}]
  %s13 = inlined_call_operand.vmem [shape: f32[2,1,32], index: 13, kind: input, shape index: {}]
  %s14 = inlined_call_operand.vmem [shape: f32[32,10], index: 14, kind: input, shape index: {}]
  %s15 = inlined_call_operand.vmem [shape: f32[1,10], index: 15, kind: input, shape index: {}]
  %s16 = inlined_call_operand.hbm [shape: f32[2,10], index: 16, kind: output, shape index: {}]
  %s17 = sld [smem:[#allocation0]]
  $region105: #{vit_forward.1} parent=0
    _
  %s19 = ssub.s32 1, %s17
  %s20 = scalar_select 0, %s19, %s17
  $region1: #{vit_forward.1} parent=0
    #allocation4 [shape = 'u8[1024]{0}', space=vmem, size = 0x400, scoped, tag = 'output window, operand 0, single buffered']
    #allocation5 [shape = 's32[2]{0}', space=sflag, size = 0x8, scoped, tag = 'scoped memory for vit_forward.1']
    %21 = vsyncpa [#allocation5], 0
    loop: start=0, step=1, limit=4
    $region2: #{vit_forward.1} parent=1 // loop_pre_header
      _
    $region3: #{vit_forward.1} parent=1 // loop_header
      %s23 = sphi 0, %s27
      %p24 = scmp.ge.s32.totalorder %s23, 4
      %s31 = sphi 0, %s31
      %s33 = sphi 0, %s31
      %s34 = sphi 0, %s33
      %s48 = sphi 0, %s34
      %s52 = sphi 0, %s52
      %s54 = sphi 0, %s52
      %s55 = sphi 0, %s54
      %s69 = sphi 0, %s55
      %s73 = sphi 0, %s73
      %s75 = sphi 0, %s73
      %s76 = sphi 0, %s75
      %s90 = sphi 0, %s76
      %s96 = sphi 0, %s98
      %s99 = sphi 0, %s96
      %s100 = sphi 0, %s99
      %s116 = sphi 0, %s100
      %s122 = sphi 0, %s124
      %s125 = sphi 0, %s122
      %s126 = sphi 0, %s125
      %s142 = sphi 0, %s126
      %s148 = sphi 0, %s150
      %s151 = sphi 0, %s148
      %s152 = sphi 0, %s151
      %s168 = sphi 0, %s152
      %s174 = sphi 0, %s176
      %s177 = sphi 0, %s174
      %s178 = sphi 0, %s177
      %s194 = sphi 0, %s178
      %s200 = sphi 0, %s202
      %s203 = sphi 0, %s200
      %s204 = sphi 0, %s203
      %s220 = sphi 0, %s204
      %s226 = sphi 0, %s228
      %s229 = sphi 0, %s226
      %s230 = sphi 0, %s229
      %s246 = sphi 0, %s230
      %s252 = sphi 0, %s254
      %s255 = sphi 0, %s252
      %s256 = sphi 0, %s255
      %s272 = sphi 0, %s256
      %s278 = sphi 0, %s280
      %s281 = sphi 0, %s278
      %s282 = sphi 0, %s281
      %s298 = sphi 0, %s282
      %s304 = sphi 0, %s306
      %s307 = sphi 0, %s304
      %s308 = sphi 0, %s307
      %s324 = sphi 0, %s308
      %s330 = sphi 0, %s332
      %s333 = sphi 0, %s330
      %s334 = sphi 0, %s333
      %s350 = sphi 0, %s334
      %s356 = sphi 0, %s358
      %s359 = sphi 0, %s356
      %s360 = sphi 0, %s359
      %s376 = sphi 0, %s360
      %s380 = sphi 0, %s380
      %s382 = sphi 0, %s380
      %s383 = sphi 0, %s382
      %s397 = sphi 0, %s383
      %s401 = sphi 0, %s401
      %s403 = sphi 0, %s401
      %s404 = sphi 0, %s403
      %s418 = sphi 0, %s404
      %s422 = sphi 0, %s422
      %s424 = sphi 0, %s422
      %s425 = sphi 0, %s424
      %s439 = sphi 0, %s425
    $region4: #{vit_forward.1} parent=1 // loop_header_branch
      %26 = sbr.rel (%p24) target = $region8
    $region5: #{vit_forward.1} parent=1 // loop_body
      %s28 = ssub.s32 %s23, 1
      %s29 = ssub.s32 %s23, 2
      %s30 = sadd.s32 %s23, 1
      %s32 = sadd.s32 %s31, 1
      %p35 = scmp.eq.s32.totalorder %s23, 1
      %p36 = scmp.ne.s32.totalorder %s31, %s33
      %p37 = scmp.eq.s32.totalorder %s23, 0
      %p38 = por %p36, %p37
      %p39 = scmp.ne.s32.totalorder %s31, %s33
      %p40 = scmp.eq.s32.totalorder %s28, 1
      %p41 = por %p39, %p40
      %p42 = scmp.ne.s32.totalorder %s33, %s34
      %p43 = scmp.eq.s32.totalorder %s28, 0
      %p44 = por %p42, %p43
      %p45 = scmp.ne.s32.totalorder %s33, %s34
      %p46 = scmp.eq.s32.totalorder %s29, 1
      %p47 = por %p45, %p46
      %p49 = scmp.ne.s32.totalorder %s34, %s48
      %p50 = scmp.eq.s32.totalorder %s29, 0
      %p51 = por %p49, %p50
      %s53 = sadd.s32 %s52, 1
      %p56 = scmp.eq.s32.totalorder %s23, 1
      %p57 = scmp.ne.s32.totalorder %s52, %s54
      %p58 = scmp.eq.s32.totalorder %s23, 0
      %p59 = por %p57, %p58
      %p60 = scmp.ne.s32.totalorder %s52, %s54
      %p61 = scmp.eq.s32.totalorder %s28, 1
      %p62 = por %p60, %p61
      %p63 = scmp.ne.s32.totalorder %s54, %s55
      %p64 = scmp.eq.s32.totalorder %s28, 0
      %p65 = por %p63, %p64
      %p66 = scmp.ne.s32.totalorder %s54, %s55
      %p67 = scmp.eq.s32.totalorder %s29, 1
      %p68 = por %p66, %p67
      %p70 = scmp.ne.s32.totalorder %s55, %s69
      %p71 = scmp.eq.s32.totalorder %s29, 0
      %p72 = por %p70, %p71
      %s74 = sadd.s32 %s73, 1
      %p77 = scmp.eq.s32.totalorder %s23, 1
      %p78 = scmp.ne.s32.totalorder %s73, %s75
      %p79 = scmp.eq.s32.totalorder %s23, 0
      %p80 = por %p78, %p79
      %p81 = scmp.ne.s32.totalorder %s73, %s75
      %p82 = scmp.eq.s32.totalorder %s28, 1
      %p83 = por %p81, %p82
      %p84 = scmp.ne.s32.totalorder %s75, %s76
      %p85 = scmp.eq.s32.totalorder %s28, 0
      %p86 = por %p84, %p85
      %p87 = scmp.ne.s32.totalorder %s75, %s76
      %p88 = scmp.eq.s32.totalorder %s29, 1
      %p89 = por %p87, %p88
      %p91 = scmp.ne.s32.totalorder %s76, %s90
      %p92 = scmp.eq.s32.totalorder %s29, 0
      %p93 = por %p91, %p92
      %s94 = ssub.s32 %s23, %s30
      %p95 = scmp.eq.s32.totalorder %s94, 0
      %s97 = sadd.s32 %s96, 1
      %s98 = scalar_select %p95, %s96, %s97
      %p101 = pneg %p95
      %p102 = scmp.eq.s32.totalorder %s23, 1
      %p103 = por %p101, %p102
      %p104 = scmp.ne.s32.totalorder %s96, %s99
      %p105 = scmp.eq.s32.totalorder %s23, 0
      %p106 = por %p104, %p105
      %p107 = scmp.ne.s32.totalorder %s96, %s99
      %p108 = scmp.eq.s32.totalorder %s28, 1
      %p109 = por %p107, %p108
      %p110 = scmp.ne.s32.totalorder %s99, %s100
      %p111 = scmp.eq.s32.totalorder %s28, 0
      %p112 = por %p110, %p111
      %p113 = scmp.ne.s32.totalorder %s99, %s100
      %p114 = scmp.eq.s32.totalorder %s29, 1
      %p115 = por %p113, %p114
      %p117 = scmp.ne.s32.totalorder %s100, %s116
      %p118 = scmp.eq.s32.totalorder %s29, 0
      %p119 = por %p117, %p118
      %s120 = ssub.s32 %s23, %s30
      %p121 = scmp.eq.s32.totalorder %s120, 0
      %s123 = sadd.s32 %s122, 1
      %s124 = scalar_select %p121, %s122, %s123
      %p127 = pneg %p121
      %p128 = scmp.eq.s32.totalorder %s23, 1
      %p129 = por %p127, %p128
      %p130 = scmp.ne.s32.totalorder %s122, %s125
      %p131 = scmp.eq.s32.totalorder %s23, 0
      %p132 = por %p130, %p131
      %p133 = scmp.ne.s32.totalorder %s122, %s125
      %p134 = scmp.eq.s32.totalorder %s28, 1
      %p135 = por %p133, %p134
      %p136 = scmp.ne.s32.totalorder %s125, %s126
      %p137 = scmp.eq.s32.totalorder %s28, 0
      %p138 = por %p136, %p137
      %p139 = scmp.ne.s32.totalorder %s125, %s126
      %p140 = scmp.eq.s32.totalorder %s29, 1
      %p141 = por %p139, %p140
      %p143 = scmp.ne.s32.totalorder %s126, %s142
      %p144 = scmp.eq.s32.totalorder %s29, 0
      %p145 = por %p143, %p144
      %s146 = ssub.s32 %s23, %s30
      %p147 = scmp.eq.s32.totalorder %s146, 0
      %s149 = sadd.s32 %s148, 1
      %s150 = scalar_select %p147, %s148, %s149
      %p153 = pneg %p147
      %p154 = scmp.eq.s32.totalorder %s23, 1
      %p155 = por %p153, %p154
      %p156 = scmp.ne.s32.totalorder %s148, %s151
      %p157 = scmp.eq.s32.totalorder %s23, 0
      %p158 = por %p156, %p157
      %p159 = scmp.ne.s32.totalorder %s148, %s151
      %p160 = scmp.eq.s32.totalorder %s28, 1
      %p161 = por %p159, %p160
      %p162 = scmp.ne.s32.totalorder %s151, %s152
      %p163 = scmp.eq.s32.totalorder %s28, 0
      %p164 = por %p162, %p163
      %p165 = scmp.ne.s32.totalorder %s151, %s152
      %p166 = scmp.eq.s32.totalorder %s29, 1
      %p167 = por %p165, %p166
      %p169 = scmp.ne.s32.totalorder %s152, %s168
      %p170 = scmp.eq.s32.totalorder %s29, 0
      %p171 = por %p169, %p170
      %s172 = ssub.s32 %s23, %s30
      %p173 = scmp.eq.s32.totalorder %s172, 0
      %s175 = sadd.s32 %s174, 1
      %s176 = scalar_select %p173, %s174, %s175
      %p179 = pneg %p173
      %p180 = scmp.eq.s32.totalorder %s23, 1
      %p181 = por %p179, %p180
      %p182 = scmp.ne.s32.totalorder %s174, %s177
      %p183 = scmp.eq.s32.totalorder %s23, 0
      %p184 = por %p182, %p183
      %p185 = scmp.ne.s32.totalorder %s174, %s177
      %p186 = scmp.eq.s32.totalorder %s28, 1
      %p187 = por %p185, %p186
      %p188 = scmp.ne.s32.totalorder %s177, %s178
      %p189 = scmp.eq.s32.totalorder %s28, 0
      %p190 = por %p188, %p189
      %p191 = scmp.ne.s32.totalorder %s177, %s178
      %p192 = scmp.eq.s32.totalorder %s29, 1
      %p193 = por %p191, %p192
      %p195 = scmp.ne.s32.totalorder %s178, %s194
      %p196 = scmp.eq.s32.totalorder %s29, 0
      %p197 = por %p195, %p196
      %s198 = ssub.s32 %s23, %s30
      %p199 = scmp.eq.s32.totalorder %s198, 0
      %s201 = sadd.s32 %s200, 1
      %s202 = scalar_select %p199, %s200, %s201
      %p205 = pneg %p199
      %p206 = scmp.eq.s32.totalorder %s23, 1
      %p207 = por %p205, %p206
      %p208 = scmp.ne.s32.totalorder %s200, %s203
      %p209 = scmp.eq.s32.totalorder %s23, 0
      %p210 = por %p208, %p209
      %p211 = scmp.ne.s32.totalorder %s200, %s203
      %p212 = scmp.eq.s32.totalorder %s28, 1
      %p213 = por %p211, %p212
      %p214 = scmp.ne.s32.totalorder %s203, %s204
      %p215 = scmp.eq.s32.totalorder %s28, 0
      %p216 = por %p214, %p215
      %p217 = scmp.ne.s32.totalorder %s203, %s204
      %p218 = scmp.eq.s32.totalorder %s29, 1
      %p219 = por %p217, %p218
      %p221 = scmp.ne.s32.totalorder %s204, %s220
      %p222 = scmp.eq.s32.totalorder %s29, 0
      %p223 = por %p221, %p222
      %s224 = ssub.s32 %s23, %s30
      %p225 = scmp.eq.s32.totalorder %s224, 0
      %s227 = sadd.s32 %s226, 1
      %s228 = scalar_select %p225, %s226, %s227
      %p231 = pneg %p225
      %p232 = scmp.eq.s32.totalorder %s23, 1
      %p233 = por %p231, %p232
      %p234 = scmp.ne.s32.totalorder %s226, %s229
      %p235 = scmp.eq.s32.totalorder %s23, 0
      %p236 = por %p234, %p235
      %p237 = scmp.ne.s32.totalorder %s226, %s229
      %p238 = scmp.eq.s32.totalorder %s28, 1
      %p239 = por %p237, %p238
      %p240 = scmp.ne.s32.totalorder %s229, %s230
      %p241 = scmp.eq.s32.totalorder %s28, 0
      %p242 = por %p240, %p241
      %p243 = scmp.ne.s32.totalorder %s229, %s230
      %p244 = scmp.eq.s32.totalorder %s29, 1
      %p245 = por %p243, %p244
      %p247 = scmp.ne.s32.totalorder %s230, %s246
      %p248 = scmp.eq.s32.totalorder %s29, 0
      %p249 = por %p247, %p248
      %s250 = ssub.s32 %s23, %s30
      %p251 = scmp.eq.s32.totalorder %s250, 0
      %s253 = sadd.s32 %s252, 1
      %s254 = scalar_select %p251, %s252, %s253
      %p257 = pneg %p251
      %p258 = scmp.eq.s32.totalorder %s23, 1
      %p259 = por %p257, %p258
      %p260 = scmp.ne.s32.totalorder %s252, %s255
      %p261 = scmp.eq.s32.totalorder %s23, 0
      %p262 = por %p260, %p261
      %p263 = scmp.ne.s32.totalorder %s252, %s255
      %p264 = scmp.eq.s32.totalorder %s28, 1
      %p265 = por %p263, %p264
      %p266 = scmp.ne.s32.totalorder %s255, %s256
      %p267 = scmp.eq.s32.totalorder %s28, 0
      %p268 = por %p266, %p267
      %p269 = scmp.ne.s32.totalorder %s255, %s256
      %p270 = scmp.eq.s32.totalorder %s29, 1
      %p271 = por %p269, %p270
      %p273 = scmp.ne.s32.totalorder %s256, %s272
      %p274 = scmp.eq.s32.totalorder %s29, 0
      %p275 = por %p273, %p274
      %s276 = ssub.s32 %s23, %s30
      %p277 = scmp.eq.s32.totalorder %s276, 0
      %s279 = sadd.s32 %s278, 1
      %s280 = scalar_select %p277, %s278, %s279
      %p283 = pneg %p277
      %p284 = scmp.eq.s32.totalorder %s23, 1
      %p285 = por %p283, %p284
      %p286 = scmp.ne.s32.totalorder %s278, %s281
      %p287 = scmp.eq.s32.totalorder %s23, 0
      %p288 = por %p286, %p287
      %p289 = scmp.ne.s32.totalorder %s278, %s281
      %p290 = scmp.eq.s32.totalorder %s28, 1
      %p291 = por %p289, %p290
      %p292 = scmp.ne.s32.totalorder %s281, %s282
      %p293 = scmp.eq.s32.totalorder %s28, 0
      %p294 = por %p292, %p293
      %p295 = scmp.ne.s32.totalorder %s281, %s282
      %p296 = scmp.eq.s32.totalorder %s29, 1
      %p297 = por %p295, %p296
      %p299 = scmp.ne.s32.totalorder %s282, %s298
      %p300 = scmp.eq.s32.totalorder %s29, 0
      %p301 = por %p299, %p300
      %s302 = ssub.s32 %s23, %s30
      %p303 = scmp.eq.s32.totalorder %s302, 0
      %s305 = sadd.s32 %s304, 1
      %s306 = scalar_select %p303, %s304, %s305
      %p309 = pneg %p303
      %p310 = scmp.eq.s32.totalorder %s23, 1
      %p311 = por %p309, %p310
      %p312 = scmp.ne.s32.totalorder %s304, %s307
      %p313 = scmp.eq.s32.totalorder %s23, 0
      %p314 = por %p312, %p313
      %p315 = scmp.ne.s32.totalorder %s304, %s307
      %p316 = scmp.eq.s32.totalorder %s28, 1
      %p317 = por %p315, %p316
      %p318 = scmp.ne.s32.totalorder %s307, %s308
      %p319 = scmp.eq.s32.totalorder %s28, 0
      %p320 = por %p318, %p319
      %p321 = scmp.ne.s32.totalorder %s307, %s308
      %p322 = scmp.eq.s32.totalorder %s29, 1
      %p323 = por %p321, %p322
      %p325 = scmp.ne.s32.totalorder %s308, %s324
      %p326 = scmp.eq.s32.totalorder %s29, 0
      %p327 = por %p325, %p326
      %s328 = ssub.s32 %s23, %s30
      %p329 = scmp.eq.s32.totalorder %s328, 0
      %s331 = sadd.s32 %s330, 1
      %s332 = scalar_select %p329, %s330, %s331
      %p335 = pneg %p329
      %p336 = scmp.eq.s32.totalorder %s23, 1
      %p337 = por %p335, %p336
      %p338 = scmp.ne.s32.totalorder %s330, %s333
      %p339 = scmp.eq.s32.totalorder %s23, 0
      %p340 = por %p338, %p339
      %p341 = scmp.ne.s32.totalorder %s330, %s333
      %p342 = scmp.eq.s32.totalorder %s28, 1
      %p343 = por %p341, %p342
      %p344 = scmp.ne.s32.totalorder %s333, %s334
      %p345 = scmp.eq.s32.totalorder %s28, 0
      %p346 = por %p344, %p345
      %p347 = scmp.ne.s32.totalorder %s333, %s334
      %p348 = scmp.eq.s32.totalorder %s29, 1
      %p349 = por %p347, %p348
      %p351 = scmp.ne.s32.totalorder %s334, %s350
      %p352 = scmp.eq.s32.totalorder %s29, 0
      %p353 = por %p351, %p352
      %s354 = ssub.s32 %s23, %s30
      %p355 = scmp.eq.s32.totalorder %s354, 0
      %s357 = sadd.s32 %s356, 1
      %s358 = scalar_select %p355, %s356, %s357
      %p361 = pneg %p355
      %p362 = scmp.eq.s32.totalorder %s23, 1
      %p363 = por %p361, %p362
      %p364 = scmp.ne.s32.totalorder %s356, %s359
      %p365 = scmp.eq.s32.totalorder %s23, 0
      %p366 = por %p364, %p365
      %p367 = scmp.ne.s32.totalorder %s356, %s359
      %p368 = scmp.eq.s32.totalorder %s28, 1
      %p369 = por %p367, %p368
      %p370 = scmp.ne.s32.totalorder %s359, %s360
      %p371 = scmp.eq.s32.totalorder %s28, 0
      %p372 = por %p370, %p371
      %p373 = scmp.ne.s32.totalorder %s359, %s360
      %p374 = scmp.eq.s32.totalorder %s29, 1
      %p375 = por %p373, %p374
      %p377 = scmp.ne.s32.totalorder %s360, %s376
      %p378 = scmp.eq.s32.totalorder %s29, 0
      %p379 = por %p377, %p378
      %s381 = sadd.s32 %s380, 1
      %p384 = scmp.eq.s32.totalorder %s23, 1
      %p385 = scmp.ne.s32.totalorder %s380, %s382
      %p386 = scmp.eq.s32.totalorder %s23, 0
      %p387 = por %p385, %p386
      %p388 = scmp.ne.s32.totalorder %s380, %s382
      %p389 = scmp.eq.s32.totalorder %s28, 1
      %p390 = por %p388, %p389
      %p391 = scmp.ne.s32.totalorder %s382, %s383
      %p392 = scmp.eq.s32.totalorder %s28, 0
      %p393 = por %p391, %p392
      %p394 = scmp.ne.s32.totalorder %s382, %s383
      %p395 = scmp.eq.s32.totalorder %s29, 1
      %p396 = por %p394, %p395
      %p398 = scmp.ne.s32.totalorder %s383, %s397
      %p399 = scmp.eq.s32.totalorder %s29, 0
      %p400 = por %p398, %p399
      %s402 = sadd.s32 %s401, 1
      %p405 = scmp.eq.s32.totalorder %s23, 1
      %p406 = scmp.ne.s32.totalorder %s401, %s403
      %p407 = scmp.eq.s32.totalorder %s23, 0
      %p408 = por %p406, %p407
      %p409 = scmp.ne.s32.totalorder %s401, %s403
      %p410 = scmp.eq.s32.totalorder %s28, 1
      %p411 = por %p409, %p410
      %p412 = scmp.ne.s32.totalorder %s403, %s404
      %p413 = scmp.eq.s32.totalorder %s28, 0
      %p414 = por %p412, %p413
      %p415 = scmp.ne.s32.totalorder %s403, %s404
      %p416 = scmp.eq.s32.totalorder %s29, 1
      %p417 = por %p415, %p416
      %p419 = scmp.ne.s32.totalorder %s404, %s418
      %p420 = scmp.eq.s32.totalorder %s29, 0
      %p421 = por %p419, %p420
      %s423 = sadd.s32 %s422, 1
      %p426 = scmp.eq.s32.totalorder %s23, 1
      %p427 = scmp.ne.s32.totalorder %s422, %s424
      %p428 = scmp.eq.s32.totalorder %s23, 0
      %p429 = por %p427, %p428
      %p430 = scmp.ne.s32.totalorder %s422, %s424
      %p431 = scmp.eq.s32.totalorder %s28, 1
      %p432 = por %p430, %p431
      %p433 = scmp.ne.s32.totalorder %s424, %s425
      %p434 = scmp.eq.s32.totalorder %s28, 0
      %p435 = por %p433, %p434
      %p436 = scmp.ne.s32.totalorder %s424, %s425
      %p437 = scmp.eq.s32.totalorder %s29, 1
      %p438 = por %p436, %p437
      %p440 = scmp.ne.s32.totalorder %s425, %s439
      %p441 = scmp.eq.s32.totalorder %s29, 0
      %p442 = por %p440, %p441
      %p443 = scmp.le.s32.totalorder 1, %s23
      %p444 = scmp.lt.s32.totalorder %s23, 3
      %p445 = pnand %p443, %p444
      %p446 = pneg %p445
      // Predicated region
      $region9: #{vit_forward.1} parent=5 // pred_check
        _
      $region10: #{vit_forward.1} parent=5 // pred_check_branch
        %448 = sbr.rel (%p445) target = $region12
      $region11: #{vit_forward.1} parent=5 // pred_region
        %s449 = ssub.s32 %s23, 1
        // Predicated region
        $region13: #{vit_forward.1} parent=11 // pred_check
          %p450 = pneg %p44
        $region14: #{vit_forward.1} parent=11 // pred_check_branch
          %452 = sbr.rel (%p450) target = $region16
        $region15: #{vit_forward.1} parent=11 // pred_region
          _
        $region16: #{vit_forward.1} parent=11 // pred_fallthru
          _
        // Predicated region
        $region17: #{vit_forward.1} parent=11 // pred_check
          %p453 = pneg %p65
        $region18: #{vit_forward.1} parent=11 // pred_check_branch
          %455 = sbr.rel (%p453) target = $region20
        $region19: #{vit_forward.1} parent=11 // pred_region
          _
        $region20: #{vit_forward.1} parent=11 // pred_fallthru
          _
        // Predicated region
        $region21: #{vit_forward.1} parent=11 // pred_check
          %p456 = pneg %p86
        $region22: #{vit_forward.1} parent=11 // pred_check_branch
          %458 = sbr.rel (%p456) target = $region24
        $region23: #{vit_forward.1} parent=11 // pred_region
          _
        $region24: #{vit_forward.1} parent=11 // pred_fallthru
          _
        // Predicated region
        $region25: #{vit_forward.1} parent=11 // pred_check
          %p459 = pneg %p393
        $region26: #{vit_forward.1} parent=11 // pred_check_branch
          %461 = sbr.rel (%p459) target = $region28
        $region27: #{vit_forward.1} parent=11 // pred_region
          _
        $region28: #{vit_forward.1} parent=11 // pred_fallthru
          _
        // Predicated region
        $region29: #{vit_forward.1} parent=11 // pred_check
          %p462 = pneg %p414
        $region30: #{vit_forward.1} parent=11 // pred_check_branch
          %464 = sbr.rel (%p462) target = $region32
        $region31: #{vit_forward.1} parent=11 // pred_region
          _
        $region32: #{vit_forward.1} parent=11 // pred_fallthru
          _
      $region12: #{vit_forward.1} parent=5 // pred_fallthru
        _
      %p465 = scmp.lt.s32.totalorder %s23, 2
      // Predicated region
      $region33: #{vit_forward.1} parent=5 // pred_check
        %p466 = pneg %p465
      $region34: #{vit_forward.1} parent=5 // pred_check_branch
        %468 = sbr.rel (%p466) target = $region36
      $region35: #{vit_forward.1} parent=5 // pred_region
        // Predicated region
        $region37: #{vit_forward.1} parent=35 // pred_check
          %p469 = pneg %p106
        $region38: #{vit_forward.1} parent=35 // pred_check_branch
          %471 = sbr.rel (%p469) target = $region40
        $region39: #{vit_forward.1} parent=35 // pred_region
          %p472 = scmp.lt.s32.totalorder %s23, 1
          %s473 = scalar_select %p472, %s23, 1
          %s474 = smul.addr %s473, 4
          %s475 = smul.addr %s474, 8
          %s476 = scalar_lea.vmem %s3, %s475
        $region40: #{vit_forward.1} parent=35 // pred_fallthru
          _
        // Predicated region
        $region41: #{vit_forward.1} parent=35 // pred_check
          %p477 = pneg %p132
        $region42: #{vit_forward.1} parent=35 // pred_check_branch
          %479 = sbr.rel (%p477) target = $region44
        $region43: #{vit_forward.1} parent=35 // pred_region
          %p480 = scmp.lt.s32.totalorder %s23, 1
          %s481 = scalar_select %p480, %s23, 1
          %s482 = smul.addr %s481, 4
          %s483 = smul.addr %s482, 8
          %s484 = scalar_lea.vmem %s4, %s483
        $region44: #{vit_forward.1} parent=35 // pred_fallthru
          _
        // Predicated region
        $region45: #{vit_forward.1} parent=35 // pred_check
          %p485 = pneg %p158
        $region46: #{vit_forward.1} parent=35 // pred_check_branch
          %487 = sbr.rel (%p485) target = $region48
        $region47: #{vit_forward.1} parent=35 // pred_region
          %p488 = scmp.lt.s32.totalorder %s23, 1
          %s489 = scalar_select %p488, %s23, 1
          %s490 = scalar_lea.vmem %s5, %s489
        $region48: #{vit_forward.1} parent=35 // pred_fallthru
          _
        // Predicated region
        $region49: #{vit_forward.1} parent=35 // pred_check
          %p491 = pneg %p184
        $region50: #{vit_forward.1} parent=35 // pred_check_branch
          %493 = sbr.rel (%p491) target = $region52
        $region51: #{vit_forward.1} parent=35 // pred_region
          %p494 = scmp.lt.s32.totalorder %s23, 1
          %s495 = scalar_select %p494, %s23, 1
          %s496 = scalar_lea.vmem %s6, %s495
        $region52: #{vit_forward.1} parent=35 // pred_fallthru
          _
        // Predicated region
        $region53: #{vit_forward.1} parent=35 // pred_check
          %p497 = pneg %p210
        $region54: #{vit_forward.1} parent=35 // pred_check_branch
          %499 = sbr.rel (%p497) target = $region56
        $region55: #{vit_forward.1} parent=35 // pred_region
          %p500 = scmp.lt.s32.totalorder %s23, 1
          %s501 = scalar_select %p500, %s23, 1
          %s502 = scalar_lea.vmem %s7, %s501
        $region56: #{vit_forward.1} parent=35 // pred_fallthru
          _
        // Predicated region
        $region57: #{vit_forward.1} parent=35 // pred_check
          %p503 = pneg %p236
        $region58: #{vit_forward.1} parent=35 // pred_check_branch
          %505 = sbr.rel (%p503) target = $region60
        $region59: #{vit_forward.1} parent=35 // pred_region
          %p506 = scmp.lt.s32.totalorder %s23, 1
          %s507 = scalar_select %p506, %s23, 1
          %s508 = smul.addr %s507, 4
          %s509 = smul.addr %s508, 8
          %s510 = scalar_lea.vmem %s8, %s509
        $region60: #{vit_forward.1} parent=35 // pred_fallthru
          _
        // Predicated region
        $region61: #{vit_forward.1} parent=35 // pred_check
          %p511 = pneg %p262
        $region62: #{vit_forward.1} parent=35 // pred_check_branch
          %513 = sbr.rel (%p511) target = $region64
        $region63: #{vit_forward.1} parent=35 // pred_region
          %p514 = scmp.lt.s32.totalorder %s23, 1
          %s515 = scalar_select %p514, %s23, 1
          %s516 = scalar_lea.vmem %s9, %s515
        $region64: #{vit_forward.1} parent=35 // pred_fallthru
          _
        // Predicated region
        $region65: #{vit_forward.1} parent=35 // pred_check
          %p517 = pneg %p288
        $region66: #{vit_forward.1} parent=35 // pred_check_branch
          %519 = sbr.rel (%p517) target = $region68
        $region67: #{vit_forward.1} parent=35 // pred_region
          %p520 = scmp.lt.s32.totalorder %s23, 1
          %s521 = scalar_select %p520, %s23, 1
          %s522 = smul.addr %s521, 8
          %s523 = smul.addr %s522, 8
          %s524 = scalar_lea.vmem %s10, %s523
        $region68: #{vit_forward.1} parent=35 // pred_fallthru
          _
        // Predicated region
        $region69: #{vit_forward.1} parent=35 // pred_check
          %p525 = pneg %p314
        $region70: #{vit_forward.1} parent=35 // pred_check_branch
          %527 = sbr.rel (%p525) target = $region72
        $region71: #{vit_forward.1} parent=35 // pred_region
          %p528 = scmp.lt.s32.totalorder %s23, 1
          %s529 = scalar_select %p528, %s23, 1
          %s530 = scalar_lea.vmem %s11, %s529
        $region72: #{vit_forward.1} parent=35 // pred_fallthru
          _
        // Predicated region
        $region73: #{vit_forward.1} parent=35 // pred_check
          %p531 = pneg %p340
        $region74: #{vit_forward.1} parent=35 // pred_check_branch
          %533 = sbr.rel (%p531) target = $region76
        $region75: #{vit_forward.1} parent=35 // pred_region
          %p534 = scmp.lt.s32.totalorder %s23, 1
          %s535 = scalar_select %p534, %s23, 1
          %s536 = scalar_lea.vmem %s12, %s535
        $region76: #{vit_forward.1} parent=35 // pred_fallthru
          _
        // Predicated region
        $region77: #{vit_forward.1} parent=35 // pred_check
          %p537 = pneg %p366
        $region78: #{vit_forward.1} parent=35 // pred_check_branch
          %539 = sbr.rel (%p537) target = $region80
        $region79: #{vit_forward.1} parent=35 // pred_region
          %p540 = scmp.lt.s32.totalorder %s23, 1
          %s541 = scalar_select %p540, %s23, 1
          %s542 = scalar_lea.vmem %s13, %s541
        $region80: #{vit_forward.1} parent=35 // pred_fallthru
          _
      $region36: #{vit_forward.1} parent=5 // pred_fallthru
        _
      %p543 = scmp.le.s32.totalorder 1, %s23
      %p544 = scmp.lt.s32.totalorder %s23, 3
      %p545 = pnand %p543, %p544
      %p546 = pneg %p545
      // Predicated region
      $region81: #{vit_forward.1} parent=5 // pred_check
        _
      $region82: #{vit_forward.1} parent=5 // pred_check_branch
        %548 = sbr.rel (%p545) target = $region84
      $region83: #{vit_forward.1} parent=5 // pred_region
        %s549 = ssub.s32 %s23, 1
        %p550 = pneg %p44
        %p551 = pneg %p41
        %p552 = pneg %p65
        %p553 = pneg %p62
        %p554 = pneg %p86
        %p555 = pneg %p83
        %p556 = scmp.lt.s32.totalorder %s28, 1
        %s557 = scalar_select %p556, %s28, 1
        %s558 = smul.addr %s557, 4
        %s559 = smul.addr %s558, 8
        %s560 = scalar_lea.vmem %s3, %s559
        %p561 = pneg %p112
        %p562 = pneg %p109
        %p563 = scmp.lt.s32.totalorder %s28, 1
        %s564 = scalar_select %p563, %s28, 1
        %s565 = smul.addr %s564, 4
        %s566 = smul.addr %s565, 8
        %s567 = scalar_lea.vmem %s4, %s566
        %p568 = pneg %p138
        %p569 = pneg %p135
        %p570 = scmp.lt.s32.totalorder %s28, 1
        %s571 = scalar_select %p570, %s28, 1
        %s572 = scalar_lea.vmem %s5, %s571
        %p573 = pneg %p164
        %p574 = pneg %p161
        %p575 = scmp.lt.s32.totalorder %s28, 1
        %s576 = scalar_select %p575, %s28, 1
        %s577 = scalar_lea.vmem %s6, %s576
        %p578 = pneg %p190
        %p579 = pneg %p187
        %p580 = scmp.lt.s32.totalorder %s28, 1
        %s581 = scalar_select %p580, %s28, 1
        %s582 = scalar_lea.vmem %s7, %s581
        %p583 = pneg %p216
        %p584 = pneg %p213
        %p585 = scmp.lt.s32.totalorder %s28, 1
        %s586 = scalar_select %p585, %s28, 1
        %s587 = smul.addr %s586, 4
        %s588 = smul.addr %s587, 8
        %s589 = scalar_lea.vmem %s8, %s588
        %p590 = pneg %p242
        %p591 = pneg %p239
        %p592 = scmp.lt.s32.totalorder %s28, 1
        %s593 = scalar_select %p592, %s28, 1
        %s594 = scalar_lea.vmem %s9, %s593
        %p595 = pneg %p268
        %p596 = pneg %p265
        %p597 = scmp.lt.s32.totalorder %s28, 1
        %s598 = scalar_select %p597, %s28, 1
        %s599 = smul.addr %s598, 8
        %s600 = smul.addr %s599, 8
        %s601 = scalar_lea.vmem %s10, %s600
        %p602 = pneg %p294
        %p603 = pneg %p291
        %p604 = scmp.lt.s32.totalorder %s28, 1
        %s605 = scalar_select %p604, %s28, 1
        %s606 = scalar_lea.vmem %s11, %s605
        %p607 = pneg %p320
        %p608 = pneg %p317
        %p609 = scmp.lt.s32.totalorder %s28, 1
        %s610 = scalar_select %p609, %s28, 1
        %s611 = scalar_lea.vmem %s12, %s610
        %p612 = pneg %p346
        %p613 = pneg %p343
        %p614 = scmp.lt.s32.totalorder %s28, 1
        %s615 = scalar_select %p614, %s28, 1
        %s616 = scalar_lea.vmem %s13, %s615
        %p617 = pneg %p372
        %p618 = pneg %p369
        %p619 = pneg %p393
        %p620 = pneg %p390
        %p621 = pneg %p414
        %p622 = pneg %p411
        %p623 = pneg %p435
        %p624 = pneg %p432
        %p625 = scmp.lt.s32.totalorder %s28, 1
        %s626 = scalar_select %p625, %s28, 1
        %s627 = smul.addr %s626, 4
        %s628 = smul.addr %s627, 8
        %s629 = scalar_lea.vmem %s3, %s628
        %p630 = scmp.lt.s32.totalorder %s28, 1
        %s631 = scalar_select %p630, %s28, 1
        %s632 = smul.addr %s631, 4
        %s633 = smul.addr %s632, 8
        %s634 = scalar_lea.vmem %s4, %s633
        %p635 = scmp.lt.s32.totalorder %s28, 1
        %s636 = scalar_select %p635, %s28, 1
        %s637 = scalar_lea.vmem %s5, %s636
        %p638 = scmp.lt.s32.totalorder %s28, 1
        %s639 = scalar_select %p638, %s28, 1
        %s640 = scalar_lea.vmem %s6, %s639
        %p641 = scmp.lt.s32.totalorder %s28, 1
        %s642 = scalar_select %p641, %s28, 1
        %s643 = scalar_lea.vmem %s7, %s642
        %p644 = scmp.lt.s32.totalorder %s28, 1
        %s645 = scalar_select %p644, %s28, 1
        %s646 = smul.addr %s645, 4
        %s647 = smul.addr %s646, 8
        %s648 = scalar_lea.vmem %s8, %s647
        %p649 = scmp.lt.s32.totalorder %s28, 1
        %s650 = scalar_select %p649, %s28, 1
        %s651 = scalar_lea.vmem %s9, %s650
        %p652 = scmp.lt.s32.totalorder %s28, 1
        %s653 = scalar_select %p652, %s28, 1
        %s654 = smul.addr %s653, 8
        %s655 = smul.addr %s654, 8
        %s656 = scalar_lea.vmem %s10, %s655
        %p657 = scmp.lt.s32.totalorder %s28, 1
        %s658 = scalar_select %p657, %s28, 1
        %s659 = scalar_lea.vmem %s11, %s658
        %p660 = scmp.lt.s32.totalorder %s28, 1
        %s661 = scalar_select %p660, %s28, 1
        %s662 = scalar_lea.vmem %s12, %s661
        %p663 = scmp.lt.s32.totalorder %s28, 1
        %s664 = scalar_select %p663, %s28, 1
        %s665 = scalar_lea.vmem %s13, %s664
        %p667 = scmp.eq.s32.totalorder %s28, 0
        // Predicated region
        $region85: #{vit_forward.1} parent=83 // pred_check
          %p668 = pneg %p667
        $region86: #{vit_forward.1} parent=83 // pred_check_branch
          %670 = sbr.rel (%p668) target = $region88
        $region87: #{vit_forward.1} parent=83 // pred_region
          %v671 = vld [vmem:[%s1] sm:$0xff]
          %v672 = vld [vmem:[%s1 + $0x8] sm:$0xff]
          %v673 = vld [vmem:[%s1 + $0x10] sm:$0xff]
          %v674 = vld [vmem:[%s1 + $0x18] sm:$0xff]
          %v675 = vld [vmem:[%s1 + $0x20] sm:$0xff]
          %v676 = vld [vmem:[%s1 + $0x28] sm:$0xff]
          %v677 = vld [vmem:[%s2] sm:$0xff]
          %v678 = vld [vmem:[%s2 + $0x8] sm:$0xff]
          %v679 = vld [vmem:[%s2 + $0x10] sm:$0x1]
          %v680 = vld [vmem:[%s0] sm:$0xff]
          %v681 = vld [vmem:[%s0 + $0x8] sm:$0xff]
          %v682 = vld [vmem:[%s0 + $0x10] sm:$0x1]
          %v683 = vpack.c.bf16 %v681, %v680
          %v684 = vpack.c.bf16 %v682, %v682
          %v685 = vpack.c.bf16 %v672, %v671
          %v686 = vpack.c.bf16 %v674, %v673
          %v687 = vpack.c.bf16 %v676, %v675
          %vm688 = vcmask 392192
          %v690 = vsel %vm688, %v683, 0
          %v693 = vsel %vm688, %v684, 0
          %695 = vmatprep.subr.bf16.mxu0 0
          %696 = vmatpush1.bf16.msra.mxu0 %v685
          %697 = vmatprep.subr.bf16.mxu0 0
          %698 = vmatpush1.bf16.msra.mxu0 %v686
          %699 = vmatprep.subr.bf16.mxu0 0
          %700 = vmatpush1.bf16.msra.mxu0 %v687
          %701 = vmatprep.subr.bf16.mxu0 0
          %702 = vmatpush1.bf16.msra.mxu0 0
          %703 = vmatprep.subr.bf16.mxu0 0
          %704 = vmatpush1.bf16.msra.mxu0 0
          %705 = vmatprep.subr.bf16.mxu0 0
          %706 = vmatpush1.bf16.msra.mxu0 0
          %707 = vmatprep.subr.bf16.mxu0 0
          %708 = vmatpush1.bf16.msra.mxu0 0
          %709 = vmatprep.subr.bf16.mxu0 0
          %710 = vmatpush1.bf16.msra.mxu0 0
          %711 = vmatprep.subr.bf16.mxu0 0
          %712 = vmatpush1.bf16.msra.mxu0 0
          %713 = vmatprep.subr.bf16.mxu0 0
          %714 = vmatpush1.bf16.msra.mxu0 0
          %715 = vmatprep.subr.bf16.mxu0 0
          %716 = vmatpush1.bf16.msra.mxu0 0
          %717 = vmatprep.subr.bf16.mxu0 0
          %718 = vmatpush1.bf16.msra.mxu0 0
          %719 = vmatprep.subr.bf16.mxu0 0
          %720 = vmatpush1.bf16.msra.mxu0 0
          %721 = vmatprep.subr.bf16.mxu0 0
          %722 = vmatpush1.bf16.msra.mxu0 0
          %723 = vmatprep.subr.bf16.mxu0 0
          %724 = vmatpush1.bf16.msra.mxu0 0
          %725 = vmatprep.subr.bf16.mxu0 0
          %726 = vmatpush1.bf16.msra.mxu0 0
          %727 = vmatprep.mubr.bf16.mxu0 0
          %728 = vmatmul.mubr.bf16.gmra.mrb[0].mxu0 %v690
          %v729 = vpop.f32.mrb[0].mxu0
          %v730 = vadd.f32 %v677, %v729
          %v731 = vpop.f32.mrb[0].mxu0
          %v732 = vpop.f32.mrb[0].mxu0
          %v733 = vadd.f32 %v678, %v732
          %v734 = vpop.f32.mrb[0].mxu0
          %735 = vmatprep.mubr.bf16.mxu0 0
          %736 = vmatmul.mubr.bf16.gmra.mrb[0].mxu0 %v693
          %v737 = vpop.f32.mrb[0].mxu0
          %v738 = vadd.f32 %v679, %v737
          %v739 = vpop.f32.mrb[0].mxu0
          %v740 = vpop.f32.mrb[0].mxu0
          %v741 = vpop.f32.mrb[0].mxu0
          %742 = vdwg.mxu0
          %vm743 = vcmask 261120
          %744 = vst.msk [vmem:[#allocation2] sm:$0xff] %vm743, %v730
          %745 = vst.msk [vmem:[#allocation2 + $0x8] sm:$0xff] %vm743, %v733
          %vm746 = vcmask 253952
          %747 = vst.msk [vmem:[#allocation2 + $0x10] sm:$0x1] %vm746, %v738
          %s748 = scalar_lea.vmem %s0, 24
          %v749 = vld [vmem:[%s748] sm:$0xff]
          %v750 = vld [vmem:[%s748 + $0x8] sm:$0xff]
          %v751 = vld [vmem:[%s748 + $0x10] sm:$0x1]
          %v752 = vpack.c.bf16 %v750, %v749
          %v753 = vpack.c.bf16 %v751, %v751
          %v755 = vsel %vm688, %v752, 0
          %v758 = vsel %vm688, %v753, 0
          %760 = vmatprep.subr.bf16.mxu0 0
          %761 = vmatpush1.bf16.msra.mxu0 %v685
          %762 = vmatprep.subr.bf16.mxu0 0
          %763 = vmatpush1.bf16.msra.mxu0 %v686
          %764 = vmatprep.subr.bf16.mxu0 0
          %765 = vmatpush1.bf16.msra.mxu0 %v687
          %766 = vmatprep.subr.bf16.mxu0 0
          %767 = vmatpush1.bf16.msra.mxu0 0
          %768 = vmatprep.subr.bf16.mxu0 0
          %769 = vmatpush1.bf16.msra.mxu0 0
          %770 = vmatprep.subr.bf16.mxu0 0
          %771 = vmatpush1.bf16.msra.mxu0 0
          %772 = vmatprep.subr.bf16.mxu0 0
          %773 = vmatpush1.bf16.msra.mxu0 0
          %774 = vmatprep.subr.bf16.mxu0 0
          %775 = vmatpush1.bf16.msra.mxu0 0
          %776 = vmatprep.subr.bf16.mxu0 0
          %777 = vmatpush1.bf16.msra.mxu0 0
          %778 = vmatprep.subr.bf16.mxu0 0
          %779 = vmatpush1.bf16.msra.mxu0 0
          %780 = vmatprep.subr.bf16.mxu0 0
          %781 = vmatpush1.bf16.msra.mxu0 0
          %782 = vmatprep.subr.bf16.mxu0 0
          %783 = vmatpush1.bf16.msra.mxu0 0
          %784 = vmatprep.subr.bf16.mxu0 0
          %785 = vmatpush1.bf16.msra.mxu0 0
          %786 = vmatprep.subr.bf16.mxu0 0
          %787 = vmatpush1.bf16.msra.mxu0 0
          %788 = vmatprep.subr.bf16.mxu0 0
          %789 = vmatpush1.bf16.msra.mxu0 0
          %790 = vmatprep.subr.bf16.mxu0 0
          %791 = vmatpush1.bf16.msra.mxu0 0
          %792 = vmatprep.mubr.bf16.mxu0 0
          %793 = vmatmul.mubr.bf16.gmra.mrb[0].mxu0 %v755
          %v794 = vpop.f32.mrb[0].mxu0
          %v795 = vadd.f32 %v677, %v794
          %v796 = vpop.f32.mrb[0].mxu0
          %v797 = vpop.f32.mrb[0].mxu0
          %v798 = vadd.f32 %v678, %v797
          %v799 = vpop.f32.mrb[0].mxu0
          %800 = vmatprep.mubr.bf16.mxu0 0
          %801 = vmatmul.mubr.bf16.gmra.mrb[0].mxu0 %v758
          %v802 = vpop.f32.mrb[0].mxu0
          %v803 = vadd.f32 %v679, %v802
          %v804 = vpop.f32.mrb[0].mxu0
          %v805 = vpop.f32.mrb[0].mxu0
          %v806 = vpop.f32.mrb[0].mxu0
          %807 = vdwg.mxu0
          %s808 = scalar_lea.vmem [#allocation2], 24
          %809 = vst.msk [vmem:[%s808] sm:$0xff] %vm743, %v795
          %810 = vst.msk [vmem:[%s808 + $0x8] sm:$0xff] %vm743, %v798
          %811 = vst.msk [vmem:[%s808 + $0x10] sm:$0x1] %vm746, %v803
        $region88: #{vit_forward.1} parent=83 // pred_fallthru
          _
        %v812 = vld [vmem:[%s629] sm:$0xff]
        %v813 = vld [vmem:[%s629 + $0x8] sm:$0xff]
        %v814 = vld [vmem:[%s629 + $0x10] sm:$0xff]
        %v815 = vld [vmem:[%s629 + $0x18] sm:$0xff]
        %v816 = vld [vmem:[%s634] sm:$0xff]
        %v817 = vld [vmem:[%s634 + $0x8] sm:$0xff]
        %v818 = vld [vmem:[%s634 + $0x10] sm:$0xff]
        %v819 = vld [vmem:[%s634 + $0x18] sm:$0xff]
        %v820 = vld [vmem:[%s637] sm:$0x1]
        %v821 = vld [vmem:[#allocation2] sm:$0xff]
        %v822 = vld [vmem:[#allocation2 + $0x8] sm:$0xff]
        %v823 = vld [vmem:[#allocation2 + $0x10] sm:$0x1]
        %v824 = vpack.c.bf16 %v822, %v821
        %v825 = vpack.c.bf16 %v823, %v823
        %v826 = vpack.c.bf16 %v813, %v812
        %v827 = vpack.c.bf16 %v815, %v814
        %vm828 = vcmask 261120
        %v830 = vsel %vm828, %v824, 0
        %v833 = vsel %vm828, %v825, 0
        %835 = vmatprep.subr.bf16.mxu0 0
        %836 = vmatpush1.bf16.msra.mxu0 %v826
        %837 = vmatprep.subr.bf16.mxu0 0
        %838 = vmatpush1.bf16.msra.mxu0 %v827
        %839 = vmatprep.subr.bf16.mxu0 0
        %840 = vmatpush1.bf16.msra.mxu0 0
        %841 = vmatprep.subr.bf16.mxu0 0
        %842 = vmatpush1.bf16.msra.mxu0 0
        %843 = vmatprep.subr.bf16.mxu0 0
        %844 = vmatpush1.bf16.msra.mxu0 0
        %845 = vmatprep.subr.bf16.mxu0 0
        %846 = vmatpush1.bf16.msra.mxu0 0
        %847 = vmatprep.subr.bf16.mxu0 0
        %848 = vmatpush1.bf16.msra.mxu0 0
        %849 = vmatprep.subr.bf16.mxu0 0
        %850 = vmatpush1.bf16.msra.mxu0 0
        %851 = vmatprep.subr.bf16.mxu0 0
        %852 = vmatpush1.bf16.msra.mxu0 0
        %853 = vmatprep.subr.bf16.mxu0 0
        %854 = vmatpush1.bf16.msra.mxu0 0
        %855 = vmatprep.subr.bf16.mxu0 0
        %856 = vmatpush1.bf16.msra.mxu0 0
        %857 = vmatprep.subr.bf16.mxu0 0
        %858 = vmatpush1.bf16.msra.mxu0 0
        %859 = vmatprep.subr.bf16.mxu0 0
        %860 = vmatpush1.bf16.msra.mxu0 0
        %861 = vmatprep.subr.bf16.mxu0 0
        %862 = vmatpush1.bf16.msra.mxu0 0
        %863 = vmatprep.subr.bf16.mxu0 0
        %864 = vmatpush1.bf16.msra.mxu0 0
        %865 = vmatprep.subr.bf16.mxu0 0
        %866 = vmatpush1.bf16.msra.mxu0 0
        %867 = vmatprep.mubr.bf16.mxu0 0
        %868 = vmatmul.mubr.bf16.gmra.mrb[0].mxu0 %v830
        %v869 = vpop.f32.mrb[0].mxu0
        %v870 = vadd.f32 0.0, %v869
        %v871 = vpop.f32.mrb[0].mxu0
        %v872 = vpop.f32.mrb[0].mxu0
        %v873 = vadd.f32 0.0, %v872
        %v874 = vpop.f32.mrb[0].mxu0
        %875 = vmatprep.mubr.bf16.mxu0 0
        %876 = vmatmul.mubr.bf16.gmra.mrb[0].mxu0 %v833
        %v877 = vpop.f32.mrb[0].mxu0
        %v878 = vadd.f32 0.0, %v877
        %v879 = vpop.f32.mrb[0].mxu0
        %v880 = vpop.f32.mrb[0].mxu0
        %v881 = vpop.f32.mrb[0].mxu0
        %882 = vdwg.mxu0
        %v883 = vpack.c.bf16 %v873, %v870
        %v884 = vpack.c.bf16 %v878, %v878
        %887 = vrot.lane.b32.xlu0 %v883, 96
        %v888 = vpop.permute.xlu0 %887
        %889 = vrot.lane.b32.xlu0 %v884, 96
        %v890 = vpop.permute.xlu0 %889
        %vm891 = vcmask 130048
        %v893 = vsel %vm891, %v883, 0
        %v896 = vsel %vm891, %v884, 0
        %v899 = vsel %vm891, %v888, 0
        %v902 = vsel %vm891, %v890, 0
        %904 = vmatprep.subr.bf16.mxu0 0
        %905 = vmatpush1.bf16.xpose.msra.mxu0 %v899
        %906 = vmatprep.subr.bf16.mxu0 0
        %907 = vmatpush1.bf16.xpose.msra.mxu0 %v902
        %908 = vmatprep.subr.bf16.mxu0 0
        %909 = vmatpush1.bf16.xpose.msra.mxu0 0
        %910 = vmatprep.subr.bf16.mxu0 0
        %911 = vmatpush1.bf16.xpose.msra.mxu0 0
        %912 = vmatprep.subr.bf16.mxu0 0
        %913 = vmatpush1.bf16.xpose.msra.mxu0 0
        %914 = vmatprep.subr.bf16.mxu0 0
        %915 = vmatpush1.bf16.xpose.msra.mxu0 0
        %916 = vmatprep.subr.bf16.mxu0 0
        %917 = vmatpush1.bf16.xpose.msra.mxu0 0
        %918 = vmatprep.subr.bf16.mxu0 0
        %919 = vmatpush1.bf16.xpose.msra.mxu0 0
        %920 = vmatprep.subr.bf16.mxu0 0
        %921 = vmatpush1.bf16.xpose.msra.mxu0 0
        %922 = vmatprep.subr.bf16.mxu0 0
        %923 = vmatpush1.bf16.xpose.msra.mxu0 0
        %924 = vmatprep.subr.bf16.mxu0 0
        %925 = vmatpush1.bf16.xpose.msra.mxu0 0
        %926 = vmatprep.subr.bf16.mxu0 0
        %927 = vmatpush1.bf16.xpose.msra.mxu0 0
        %928 = vmatprep.subr.bf16.mxu0 0
        %929 = vmatpush1.bf16.xpose.msra.mxu0 0
        %930 = vmatprep.subr.bf16.mxu0 0
        %931 = vmatpush1.bf16.xpose.msra.mxu0 0
        %932 = vmatprep.subr.bf16.mxu0 0
        %933 = vmatpush1.bf16.xpose.msra.mxu0 0
        %934 = vmatprep.subr.bf16.mxu0 0
        %935 = vmatpush1.bf16.xpose.msra.mxu0 0
        %936 = vmatprep.mubr.bf16.mxu0 0
        %937 = vmatmul.mubr.bf16.gmra.mrb[0].mxu0 %v893
        %v938 = vpop.f32.mrb[0].mxu0
        %v939 = vadd.f32 0.0, %v938
        %v940 = vpop.f32.mrb[0].mxu0
        %v941 = vpop.f32.mrb[0].mxu0
        %v942 = vadd.f32 0.0, %v941
        %v943 = vpop.f32.mrb[0].mxu0
        %944 = vmatprep.mubr.bf16.mxu0 0
        %945 = vmatmul.mubr.bf16.gmra.mrb[0].mxu0 %v896
        %v946 = vpop.f32.mrb[0].mxu0
        %v947 = vadd.f32 0.0, %v946
        %v948 = vpop.f32.mrb[0].mxu0
        %v949 = vpop.f32.mrb[0].mxu0
        %v950 = vpop.f32.mrb[0].mxu0
        %951 = vdwg.mxu0
        %vm952 = vcmask 138240
        %v953 = vsel %vm952, %v939, -inf
        %954 = vmax.xlane.f32.xlu0 %v953
        %v955 = vpop.xlane.xlu0 %954
        %v956 = vsel %vm952, %v942, -inf
        %957 = vmax.xlane.f32.xlu0 %v956
        %v958 = vpop.xlane.xlu0 %957
        %vm959 = vcmask 131072
        %v960 = vsel %vm959, %v947, -inf
        %961 = vmax.xlane.f32.xlu0 %v960
        %v962 = vpop.xlane.xlu0 %961
        %v963 = vsub.f32 %v939, %v955
        %v964 = vsub.f32 %v942, %v958
        %v965 = vsub.f32 %v947, %v962
        %v966 = vmul.f32 %v963, 1.442695
        %v967 = vpow.pop %v966
        %v968 = vmul.f32 %v964, 1.442695
        %v969 = vpow.pop %v968
        %v970 = vmul.f32 %v965, 1.442695
        %v971 = vpow.pop %v970
        %v972 = vsel %vm952, %v967, 0.0
        %973 = vadd.xlane.f32.xlu0 %v972
        %v974 = vpop.xlane.xlu0 %973
        %v975 = vsel %vm952, %v969, 0.0
        %976 = vadd.xlane.f32.xlu0 %v975
        %v977 = vpop.xlane.xlu0 %976
        %v978 = vsel %vm959, %v971, 0.0
        %979 = vadd.xlane.f32.xlu0 %v978
        %v980 = vpop.xlane.xlu0 %979
        %v981 = vrcp.pop %v974
        %v982 = vmul.f32 %v967, %v981
        %v983 = vrcp.pop %v977
        %v984 = vmul.f32 %v969, %v983
        %v985 = vrcp.pop %v980
        %v986 = vmul.f32 %v971, %v985
        %v987 = vpack.c.bf16 %v984, %v982
        %v988 = vpack.c.bf16 %v986, %v986
        %989 = vrot.lane.b32.xlu0 %v883, 64
        %v990 = vpop.permute.xlu0 %989
        %991 = vrot.lane.b32.xlu0 %v884, 64
        %v992 = vpop.permute.xlu0 %991
        %v995 = vsel %vm952, %v987, 0
        %v998 = vsel %vm952, %v988, 0
        %vm1000 = vcmask 1040384
        %v1001 = vsel 0, 4294967295, 65535
        %v1002 = vsel %vm1000, %v1001, 0
        %v1004 = vand.u32 %v992, %v1002
        %1006 = vmatprep.subr.bf16.mxu0 0
        %1007 = vmatpush1.bf16.msra.mxu0 %v990
        %1008 = vmatprep.subr.bf16.mxu0 0
        %1009 = vmatpush1.bf16.msra.mxu0 %v1004
        %1010 = vmatprep.subr.bf16.mxu0 0
        %1011 = vmatpush1.bf16.msra.mxu0 0
        %1012 = vmatprep.subr.bf16.mxu0 0
        %1013 = vmatpush1.bf16.msra.mxu0 0
        %1014 = vmatprep.subr.bf16.mxu0 0
        %1015 = vmatpush1.bf16.msra.mxu0 0
        %1016 = vmatprep.subr.bf16.mxu0 0
        %1017 = vmatpush1.bf16.msra.mxu0 0
        %1018 = vmatprep.subr.bf16.mxu0 0
        %1019 = vmatpush1.bf16.msra.mxu0 0
        %1020 = vmatprep.subr.bf16.mxu0 0
        %1021 = vmatpush1.bf16.msra.mxu0 0
        %1022 = vmatprep.subr.bf16.mxu0 0
        %1023 = vmatpush1.bf16.msra.mxu0 0
        %1024 = vmatprep.subr.bf16.mxu0 0
        %1025 = vmatpush1.bf16.msra.mxu0 0
        %1026 = vmatprep.subr.bf16.mxu0 0
        %1027 = vmatpush1.bf16.msra.mxu0 0
        %1028 = vmatprep.subr.bf16.mxu0 0
        %1029 = vmatpush1.bf16.msra.mxu0 0
        %1030 = vmatprep.subr.bf16.mxu0 0
        %1031 = vmatpush1.bf16.msra.mxu0 0
        %1032 = vmatprep.subr.bf16.mxu0 0
        %1033 = vmatpush1.bf16.msra.mxu0 0
        %1034 = vmatprep.subr.bf16.mxu0 0
        %1035 = vmatpush1.bf16.msra.mxu0 0
        %1036 = vmatprep.subr.bf16.mxu0 0
        %1037 = vmatpush1.bf16.msra.mxu0 0
        %1038 = vmatprep.mubr.bf16.mxu0 0
        %1039 = vmatmul.mubr.bf16.gmra.mrb[0].mxu0 %v995
        %v1040 = vpop.f32.mrb[0].mxu0
        %v1041 = vadd.f32 0.0, %v1040
        %v1042 = vpop.f32.mrb[0].mxu0
        %v1043 = vpop.f32.mrb[0].mxu0
        %v1044 = vadd.f32 0.0, %v1043
        %v1045 = vpop.f32.mrb[0].mxu0
        %1046 = vmatprep.mubr.bf16.mxu0 0
        %1047 = vmatmul.mubr.bf16.gmra.mrb[0].mxu0 %v998
        %v1048 = vpop.f32.mrb[0].mxu0
        %v1049 = vadd.f32 0.0, %v1048
        %v1050 = vpop.f32.mrb[0].mxu0
        %v1051 = vpop.f32.mrb[0].mxu0
        %v1052 = vpop.f32.mrb[0].mxu0
        %1053 = vdwg.mxu0
        %v1054 = vpack.c.bf16 %v1044, %v1041
        %v1055 = vpack.c.bf16 %v1049, %v1049
        %v1056 = vpack.c.bf16 %v817, %v816
        %1057 = vrot.lane.b32.xlu0 %v883, 112
        %v1058 = vpop.permute.xlu0 %1057
        %1059 = vrot.lane.b32.xlu0 %v884, 112
        %v1060 = vpop.permute.xlu0 %1059
        %1061 = vrot.lane.b32.xlu0 %v883, 80
        %v1062 = vpop.permute.xlu0 %1061
        %1063 = vrot.lane.b32.xlu0 %v884, 80
        %v1064 = vpop.permute.xlu0 %1063
        %v1066 = vsel %vm891, %v1058, 0
        %v1069 = vsel %vm891, %v1060, 0
        %v1072 = vsel %vm891, %v1062, 0
        %v1075 = vsel %vm891, %v1064, 0
        %1077 = vmatprep.subr.bf16.mxu0 0
        %1078 = vmatpush1.bf16.xpose.msra.mxu0 %v1072
        %1079 = vmatprep.subr.bf16.mxu0 0
        %1080 = vmatpush1.bf16.xpose.msra.mxu0 %v1075
        %1081 = vmatprep.subr.bf16.mxu0 0
        %1082 = vmatpush1.bf16.xpose.msra.mxu0 0
        %1083 = vmatprep.subr.bf16.mxu0 0
        %1084 = vmatpush1.bf16.xpose.msra.mxu0 0
        %1085 = vmatprep.subr.bf16.mxu0 0
        %1086 = vmatpush1.bf16.xpose.msra.mxu0 0
        %1087 = vmatprep.subr.bf16.mxu0 0
        %1088 = vmatpush1.bf16.xpose.msra.mxu0 0
        %1089 = vmatprep.subr.bf16.mxu0 0
        %1090 = vmatpush1.bf16.xpose.msra.mxu0 0
        %1091 = vmatprep.subr.bf16.mxu0 0
        %1092 = vmatpush1.bf16.xpose.msra.mxu0 0
        %1093 = vmatprep.subr.bf16.mxu0 0
        %1094 = vmatpush1.bf16.xpose.msra.mxu0 0
        %1095 = vmatprep.subr.bf16.mxu0 0
        %1096 = vmatpush1.bf16.xpose.msra.mxu0 0
        %1097 = vmatprep.subr.bf16.mxu0 0
        %1098 = vmatpush1.bf16.xpose.msra.mxu0 0
        %1099 = vmatprep.subr.bf16.mxu0 0
        %1100 = vmatpush1.bf16.xpose.msra.mxu0 0
        %1101 = vmatprep.subr.bf16.mxu0 0
        %1102 = vmatpush1.bf16.xpose.msra.mxu0 0
        %1103 = vmatprep.subr.bf16.mxu0 0
        %1104 = vmatpush1.bf16.xpose.msra.mxu0 0
        %1105 = vmatprep.subr.bf16.mxu0 0
        %1106 = vmatpush1.bf16.xpose.msra.mxu0 0
        %1107 = vmatprep.subr.bf16.mxu0 0
        %1108 = vmatpush1.bf16.xpose.msra.mxu0 0
        %1109 = vmatprep.mubr.bf16.mxu0 0
        %1110 = vmatmul.mubr.bf16.gmra.mrb[0].mxu0 %v1066
        %v1111 = vpop.f32.mrb[0].mxu0
        %v1112 = vadd.f32 0.0, %v1111
        %v1113 = vpop.f32.mrb[0].mxu0
        %v1114 = vpop.f32.mrb[0].mxu0
        %v1115 = vadd.f32 0.0, %v1114
        %v1116 = vpop.f32.mrb[0].mxu0
        %1117 = vmatprep.mubr.bf16.mxu0 0
        %1118 = vmatmul.mubr.bf16.gmra.mrb[0].mxu0 %v1069
        %v1119 = vpop.f32.mrb[0].mxu0
        %v1120 = vadd.f32 0.0, %v1119
        %v1121 = vpop.f32.mrb[0].mxu0
        %v1122 = vpop.f32.mrb[0].mxu0
        %v1123 = vpop.f32.mrb[0].mxu0
        %1124 = vdwg.mxu0
        %v1125 = vsel %vm952, %v1112, -inf
        %1126 = vmax.xlane.f32.xlu0 %v1125
        %v1127 = vpop.xlane.xlu0 %1126
        %v1128 = vsel %vm952, %v1115, -inf
        %1129 = vmax.xlane.f32.xlu0 %v1128
        %v1130 = vpop.xlane.xlu0 %1129
        %v1131 = vsel %vm959, %v1120, -inf
        %1132 = vmax.xlane.f32.xlu0 %v1131
        %v1133 = vpop.xlane.xlu0 %1132
        %v1134 = vsub.f32 %v1112, %v1127
        %v1135 = vsub.f32 %v1115, %v1130
        %v1136 = vsub.f32 %v1120, %v1133
        %v1137 = vmul.f32 %v1134, 1.442695
        %v1138 = vpow.pop %v1137
        %v1139 = vmul.f32 %v1135, 1.442695
        %v1140 = vpow.pop %v1139
        %v1141 = vmul.f32 %v1136, 1.442695
        %v1142 = vpow.pop %v1141
        %v1143 = vsel %vm952, %v1138, 0.0
        %1144 = vadd.xlane.f32.xlu0 %v1143
        %v1145 = vpop.xlane.xlu0 %1144
        %v1146 = vsel %vm952, %v1140, 0.0
        %1147 = vadd.xlane.f32.xlu0 %v1146
        %v1148 = vpop.xlane.xlu0 %1147
        %v1149 = vsel %vm959, %v1142, 0.0
        %1150 = vadd.xlane.f32.xlu0 %v1149
        %v1151 = vpop.xlane.xlu0 %1150
        %v1152 = vrcp.pop %v1145
        %v1153 = vmul.f32 %v1138, %v1152
        %v1154 = vrcp.pop %v1148
        %v1155 = vmul.f32 %v1140, %v1154
        %v1156 = vrcp.pop %v1151
        %v1157 = vmul.f32 %v1142, %v1156
        %v1158 = vpack.c.bf16 %v1155, %v1153
        %v1159 = vpack.c.bf16 %v1157, %v1157
        %1160 = vrot.lane.b32.xlu0 %v883, 48
        %v1161 = vpop.permute.xlu0 %1160
        %1162 = vrot.lane.b32.xlu0 %v884, 48
        %v1163 = vpop.permute.xlu0 %1162
        %v1166 = vsel %vm952, %v1158, 0
        %v1169 = vsel %vm952, %v1159, 0
        %v1172 = vand.u32 %v1163, %v1002
        %1174 = vmatprep.subr.bf16.mxu0 0
        %1175 = vmatpush1.bf16.msra.mxu0 %v1161
        %1176 = vmatprep.subr.bf16.mxu0 0
        %1177 = vmatpush1.bf16.msra.mxu0 %v1172
        %1178 = vmatprep.subr.bf16.mxu0 0
        %1179 = vmatpush1.bf16.msra.mxu0 0
        %1180 = vmatprep.subr.bf16.mxu0 0
        %1181 = vmatpush1.bf16.msra.mxu0 0
        %1182 = vmatprep.subr.bf16.mxu0 0
        %1183 = vmatpush1.bf16.msra.mxu0 0
        %1184 = vmatprep.subr.bf16.mxu0 0
        %1185 = vmatpush1.bf16.msra.mxu0 0
        %1186 = vmatprep.subr.bf16.mxu0 0
        %1187 = vmatpush1.bf16.msra.mxu0 0
        %1188 = vmatprep.subr.bf16.mxu0 0
        %1189 = vmatpush1.bf16.msra.mxu0 0
        %1190 = vmatprep.subr.bf16.mxu0 0
        %1191 = vmatpush1.bf16.msra.mxu0 0
        %1192 = vmatprep.subr.bf16.mxu0 0
        %1193 = vmatpush1.bf16.msra.mxu0 0
        %1194 = vmatprep.subr.bf16.mxu0 0
        %1195 = vmatpush1.bf16.msra.mxu0 0
        %1196 = vmatprep.subr.bf16.mxu0 0
        %1197 = vmatpush1.bf16.msra.mxu0 0
        %1198 = vmatprep.subr.bf16.mxu0 0
        %1199 = vmatpush1.bf16.msra.mxu0 0
        %1200 = vmatprep.subr.bf16.mxu0 0
        %1201 = vmatpush1.bf16.msra.mxu0 0
        %1202 = vmatprep.subr.bf16.mxu0 0
        %1203 = vmatpush1.bf16.msra.mxu0 0
        %1204 = vmatprep.subr.bf16.mxu0 0
        %1205 = vmatpush1.bf16.msra.mxu0 0
        %1206 = vmatprep.mubr.bf16.mxu0 0
        %1207 = vmatmul.mubr.bf16.gmra.mrb[0].mxu0 %v1166
        %v1208 = vpop.f32.mrb[0].mxu0
        %v1209 = vadd.f32 0.0, %v1208
        %v1210 = vpop.f32.mrb[0].mxu0
        %v1211 = vpop.f32.mrb[0].mxu0
        %v1212 = vadd.f32 0.0, %v1211
        %v1213 = vpop.f32.mrb[0].mxu0
        %1214 = vmatprep.mubr.bf16.mxu0 0
        %1215 = vmatmul.mubr.bf16.gmra.mrb[0].mxu0 %v1169
        %v1216 = vpop.f32.mrb[0].mxu0
        %v1217 = vadd.f32 0.0, %v1216
        %v1218 = vpop.f32.mrb[0].mxu0
        %v1219 = vpop.f32.mrb[0].mxu0
        %v1220 = vpop.f32.mrb[0].mxu0
        %1221 = vdwg.mxu0
        %v1222 = vpack.c.bf16 %v1212, %v1209
        %v1223 = vpack.c.bf16 %v1217, %v1217
        %v1224 = vpack.c.bf16 %v819, %v818
        %v1226 = vsel %vm891, %v1222, 0
        %v1229 = vsel %vm891, %v1223, 0
        %1231 = vmatprep.subr.bf16.mxu0 0
        %1232 = vmatpush1.bf16.msra.mxu0 %v1224
        %1233 = vmatprep.subr.bf16.mxu0 0
        %1234 = vmatpush1.bf16.msra.mxu0 0
        %1235 = vmatprep.subr.bf16.mxu0 0
        %1236 = vmatpush1.bf16.msra.mxu0 0
        %1237 = vmatprep.subr.bf16.mxu0 0
        %1238 = vmatpush1.bf16.msra.mxu0 0
        %1239 = vmatprep.subr.bf16.mxu0 0
        %1240 = vmatpush1.bf16.msra.mxu0 0
        %1241 = vmatprep.subr.bf16.mxu0 0
        %1242 = vmatpush1.bf16.msra.mxu0 0
        %1243 = vmatprep.subr.bf16.mxu0 0
        %1244 = vmatpush1.bf16.msra.mxu0 0
        %1245 = vmatprep.subr.bf16.mxu0 0
        %1246 = vmatpush1.bf16.msra.mxu0 0
        %1247 = vmatprep.subr.bf16.mxu0 0
        %1248 = vmatpush1.bf16.msra.mxu0 0
        %1249 = vmatprep.subr.bf16.mxu0 0
        %1250 = vmatpush1.bf16.msra.mxu0 0
        %1251 = vmatprep.subr.bf16.mxu0 0
        %1252 = vmatpush1.bf16.msra.mxu0 0
        %1253 = vmatprep.subr.bf16.mxu0 0
        %1254 = vmatpush1.bf16.msra.mxu0 0
        %1255 = vmatprep.subr.bf16.mxu0 0
        %1256 = vmatpush1.bf16.msra.mxu0 0
        %1257 = vmatprep.subr.bf16.mxu0 0
        %1258 = vmatpush1.bf16.msra.mxu0 0
        %1259 = vmatprep.subr.bf16.mxu0 0
        %1260 = vmatpush1.bf16.msra.mxu0 0
        %1261 = vmatprep.subr.bf16.mxu0 0
        %1262 = vmatpush1.bf16.msra.mxu0 0
        %1263 = vmatprep.mubr.bf16.mxu0 0
        %1264 = vmatmul.mubr.bf16.gmra.mrb[0].mxu0 %v1226
        %v1265 = vpop.f32.mrb[0].mxu0
        %v1266 = vadd.f32 0.0, %v1265
        %v1267 = vpop.f32.mrb[0].mxu0
        %v1268 = vpop.f32.mrb[0].mxu0
        %v1269 = vadd.f32 0.0, %v1268
        %v1270 = vpop.f32.mrb[0].mxu0
        %1271 = vmatprep.mubr.bf16.mxu0 0
        %1272 = vmatmul.mubr.bf16.gmra.mrb[0].mxu0 %v1229
        %v1273 = vpop.f32.mrb[0].mxu0
        %v1274 = vadd.f32 0.0, %v1273
        %v1275 = vpop.f32.mrb[0].mxu0
        %v1276 = vpop.f32.mrb[0].mxu0
        %v1277 = vpop.f32.mrb[0].mxu0
        %1278 = vdwg.mxu0
        %v1280 = vsel %vm891, %v1054, 0
        %v1283 = vsel %vm891, %v1055, 0
        %1285 = vmatprep.subr.bf16.mxu0 0
        %1286 = vmatpush1.bf16.msra.mxu0 %v1056
        %1287 = vmatprep.subr.bf16.mxu0 0
        %1288 = vmatpush1.bf16.msra.mxu0 0
        %1289 = vmatprep.subr.bf16.mxu0 0
        %1290 = vmatpush1.bf16.msra.mxu0 0
        %1291 = vmatprep.subr.bf16.mxu0 0
        %1292 = vmatpush1.bf16.msra.mxu0 0
        %1293 = vmatprep.subr.bf16.mxu0 0
        %1294 = vmatpush1.bf16.msra.mxu0 0
        %1295 = vmatprep.subr.bf16.mxu0 0
        %1296 = vmatpush1.bf16.msra.mxu0 0
        %1297 = vmatprep.subr.bf16.mxu0 0
        %1298 = vmatpush1.bf16.msra.mxu0 0
        %1299 = vmatprep.subr.bf16.mxu0 0
        %1300 = vmatpush1.bf16.msra.mxu0 0
        %1301 = vmatprep.subr.bf16.mxu0 0
        %1302 = vmatpush1.bf16.msra.mxu0 0
        %1303 = vmatprep.subr.bf16.mxu0 0
        %1304 = vmatpush1.bf16.msra.mxu0 0
        %1305 = vmatprep.subr.bf16.mxu0 0
        %1306 = vmatpush1.bf16.msra.mxu0 0
        %1307 = vmatprep.subr.bf16.mxu0 0
        %1308 = vmatpush1.bf16.msra.mxu0 0
        %1309 = vmatprep.subr.bf16.mxu0 0
        %1310 = vmatpush1.bf16.msra.mxu0 0
        %1311 = vmatprep.subr.bf16.mxu0 0
        %1312 = vmatpush1.bf16.msra.mxu0 0
        %1313 = vmatprep.subr.bf16.mxu0 0
        %1314 = vmatpush1.bf16.msra.mxu0 0
        %1315 = vmatprep.subr.bf16.mxu0 0
        %1316 = vmatpush1.bf16.msra.mxu0 0
        %1317 = vmatprep.mubr.bf16.mxu0 0
        %1318 = vmatmul.mubr.bf16.gmra.mrb[0].mxu0 %v1280
        %v1319 = vpop.f32.mrb[0].mxu0
        %v1320 = vadd.f32 %v1266, %v1319
        %v1321 = vpop.f32.mrb[0].mxu0
        %v1322 = vpop.f32.mrb[0].mxu0
        %v1323 = vadd.f32 %v1269, %v1322
        %v1324 = vpop.f32.mrb[0].mxu0
        %1325 = vmatprep.mubr.bf16.mxu0 0
        %1326 = vmatmul.mubr.bf16.gmra.mrb[0].mxu0 %v1283
        %v1327 = vpop.f32.mrb[0].mxu0
        %v1328 = vadd.f32 %v1274, %v1327
        %v1329 = vpop.f32.mrb[0].mxu0
        %v1330 = vpop.f32.mrb[0].mxu0
        %v1331 = vpop.f32.mrb[0].mxu0
        %1332 = vdwg.mxu0
        %v1334 = vlaneseq
        %v1335 = vshrl.u32 %v1334, 7
        %v1336 = vsub.s32 0, %v1335
        %v1337 = vrot.slane %v820, %v1336
        %v1339 = vadd.f32 %v1320, %v1337
        %v1340 = vadd.f32 %v1323, %v1337
        %v1341 = vadd.f32 %v1328, %v1337
        %1342 = vst.msk [vmem:[#allocation3] sm:$0xff] %vm828, %v1339
        %1343 = vst.msk [vmem:[#allocation3 + $0x8] sm:$0xff] %vm828, %v1340
        %vm1344 = vcmask 253952
        %1345 = vst.msk [vmem:[#allocation3 + $0x10] sm:$0x1] %vm1344, %v1341
        %v1346 = vsel %vm828, %v1339, 0.0
        %v1347 = vsel %vm828, %v1340, 0.0
        %v1348 = vadd.f32 %v1346, %v1347
        %v1349 = vsel %vm1344, %v1341, 0.0
        %v1350 = vadd.f32 %v1348, %v1349
        %v1351 = vrot.slane %v1350, 4
        %v1352 = vadd.f32 %v1350, %v1351
        %v1353 = vrot.slane %v1352, 2
        %v1354 = vadd.f32 %v1352, %v1353
        %v1355 = vrot.slane %v1354, 1
        %v1356 = vadd.f32 %v1354, %v1355
        %v1357 = vadd.f32 %v1356, 0.0
        %v1358 = vmul.f32 %v1339, %v1339
        %v1359 = vmul.f32 %v1340, %v1340
        %v1360 = vmul.f32 %v1341, %v1341
        %v1361 = vsel %vm828, %v1358, 0.0
        %v1362 = vsel %vm828, %v1359, 0.0
        %v1363 = vadd.f32 %v1361, %v1362
        %v1364 = vsel %vm1344, %v1360, 0.0
        %v1365 = vadd.f32 %v1363, %v1364
        %v1366 = vrot.slane %v1365, 4
        %v1367 = vadd.f32 %v1365, %v1366
        %v1368 = vrot.slane %v1367, 2
        %v1369 = vadd.f32 %v1367, %v1368
        %v1370 = vrot.slane %v1369, 1
        %v1371 = vadd.f32 %v1369, %v1370
        %v1372 = vadd.f32 %v1371, 0.0
        %s1373 = scalar_lea.vmem [#allocation2], 24
        %v1374 = vld [vmem:[%s1373] sm:$0xff]
        %v1375 = vld [vmem:[%s1373 + $0x8] sm:$0xff]
        %v1376 = vld [vmem:[%s1373 + $0x10] sm:$0x1]
        %v1377 = vpack.c.bf16 %v1375, %v1374
        %v1378 = vpack.c.bf16 %v1376, %v1376
        %v1380 = vsel %vm828, %v1377, 0
        %v1383 = vsel %vm828, %v1378, 0
        %1385 = vmatprep.subr.bf16.mxu0 0
        %1386 = vmatpush1.bf16.msra.mxu0 %v826
        %1387 = vmatprep.subr.bf16.mxu0 0
        %1388 = vmatpush1.bf16.msra.mxu0 %v827
        %1389 = vmatprep.subr.bf16.mxu0 0
        %1390 = vmatpush1.bf16.msra.mxu0 0
        %1391 = vmatprep.subr.bf16.mxu0 0
        %1392 = vmatpush1.bf16.msra.mxu0 0
        %1393 = vmatprep.subr.bf16.mxu0 0
        %1394 = vmatpush1.bf16.msra.mxu0 0
        %1395 = vmatprep.subr.bf16.mxu0 0
        %1396 = vmatpush1.bf16.msra.mxu0 0
        %1397 = vmatprep.subr.bf16.mxu0 0
        %1398 = vmatpush1.bf16.msra.mxu0 0
        %1399 = vmatprep.subr.bf16.mxu0 0
        %1400 = vmatpush1.bf16.msra.mxu0 0
        %1401 = vmatprep.subr.bf16.mxu0 0
        %1402 = vmatpush1.bf16.msra.mxu0 0
        %1403 = vmatprep.subr.bf16.mxu0 0
        %1404 = vmatpush1.bf16.msra.mxu0 0
        %1405 = vmatprep.subr.bf16.mxu0 0
        %1406 = vmatpush1.bf16.msra.mxu0 0
        %1407 = vmatprep.subr.bf16.mxu0 0
        %1408 = vmatpush1.bf16.msra.mxu0 0
        %1409 = vmatprep.subr.bf16.mxu0 0
        %1410 = vmatpush1.bf16.msra.mxu0 0
        %1411 = vmatprep.subr.bf16.mxu0 0
        %1412 = vmatpush1.bf16.msra.mxu0 0
        %1413 = vmatprep.subr.bf16.mxu0 0
        %1414 = vmatpush1.bf16.msra.mxu0 0
        %1415 = vmatprep.subr.bf16.mxu0 0
        %1416 = vmatpush1.bf16.msra.mxu0 0
        %1417 = vmatprep.mubr.bf16.mxu0 0
        %1418 = vmatmul.mubr.bf16.gmra.mrb[0].mxu0 %v1380
        %v1419 = vpop.f32.mrb[0].mxu0
        %v1420 = vadd.f32 0.0, %v1419
        %v1421 = vpop.f32.mrb[0].mxu0
        %v1422 = vpop.f32.mrb[0].mxu0
        %v1423 = vadd.f32 0.0, %v1422
        %v1424 = vpop.f32.mrb[0].mxu0
        %1425 = vmatprep.mubr.bf16.mxu0 0
        %1426 = vmatmul.mubr.bf16.gmra.mrb[0].mxu0 %v1383
        %v1427 = vpop.f32.mrb[0].mxu0
        %v1428 = vadd.f32 0.0, %v1427
        %v1429 = vpop.f32.mrb[0].mxu0
        %v1430 = vpop.f32.mrb[0].mxu0
        %v1431 = vpop.f32.mrb[0].mxu0
        %1432 = vdwg.mxu0
        %v1433 = vpack.c.bf16 %v1423, %v1420
        %v1434 = vpack.c.bf16 %v1428, %v1428
        %1437 = vrot.lane.b32.xlu0 %v1433, 96
        %v1438 = vpop.permute.xlu0 %1437
        %1439 = vrot.lane.b32.xlu0 %v1434, 96
        %v1440 = vpop.permute.xlu0 %1439
        %v1442 = vsel %vm891, %v1433, 0
        %v1445 = vsel %vm891, %v1434, 0
        %v1448 = vsel %vm891, %v1438, 0
        %v1451 = vsel %vm891, %v1440, 0
        %1453 = vmatprep.subr.bf16.mxu0 0
        %1454 = vmatpush1.bf16.xpose.msra.mxu0 %v1448
        %1455 = vmatprep.subr.bf16.mxu0 0
        %1456 = vmatpush1.bf16.xpose.msra.mxu0 %v1451
        %1457 = vmatprep.subr.bf16.mxu0 0
        %1458 = vmatpush1.bf16.xpose.msra.mxu0 0
        %1459 = vmatprep.subr.bf16.mxu0 0
        %1460 = vmatpush1.bf16.xpose.msra.mxu0 0
        %1461 = vmatprep.subr.bf16.mxu0 0
        %1462 = vmatpush1.bf16.xpose.msra.mxu0 0
        %1463 = vmatprep.subr.bf16.mxu0 0
        %1464 = vmatpush1.bf16.xpose.msra.mxu0 0
        %1465 = vmatprep.subr.bf16.mxu0 0
        %1466 = vmatpush1.bf16.xpose.msra.mxu0 0
        %1467 = vmatprep.subr.bf16.mxu0 0
        %1468 = vmatpush1.bf16.xpose.msra.mxu0 0
        %1469 = vmatprep.subr.bf16.mxu0 0
        %1470 = vmatpush1.bf16.xpose.msra.mxu0 0
        %1471 = vmatprep.subr.bf16.mxu0 0
        %1472 = vmatpush1.bf16.xpose.msra.mxu0 0
        %1473 = vmatprep.subr.bf16.mxu0 0
        %1474 = vmatpush1.bf16.xpose.msra.mxu0 0
        %1475 = vmatprep.subr.bf16.mxu0 0
        %1476 = vmatpush1.bf16.xpose.msra.mxu0 0
        %1477 = vmatprep.subr.bf16.mxu0 0
        %1478 = vmatpush1.bf16.xpose.msra.mxu0 0
        %1479 = vmatprep.subr.bf16.mxu0 0
        %1480 = vmatpush1.bf16.xpose.msra.mxu0 0
        %1481 = vmatprep.subr.bf16.mxu0 0
        %1482 = vmatpush1.bf16.xpose.msra.mxu0 0
        %1483 = vmatprep.subr.bf16.mxu0 0
        %1484 = vmatpush1.bf16.xpose.msra.mxu0 0
        %1485 = vmatprep.mubr.bf16.mxu0 0
        %1486 = vmatmul.mubr.bf16.gmra.mrb[0].mxu0 %v1442
        %v1487 = vpop.f32.mrb[0].mxu0
        %v1488 = vadd.f32 0.0, %v1487
        %v1489 = vpop.f32.mrb[0].mxu0
        %v1490 = vpop.f32.mrb[0].mxu0
        %v1491 = vadd.f32 0.0, %v1490
        %v1492 = vpop.f32.mrb[0].mxu0
        %1493 = vmatprep.mubr.bf16.mxu0 0
        %1494 = vmatmul.mubr.bf16.gmra.mrb[0].mxu0 %v1445
        %v1495 = vpop.f32.mrb[0].mxu0
        %v1496 = vadd.f32 0.0, %v1495
        %v1497 = vpop.f32.mrb[0].mxu0
        %v1498 = vpop.f32.mrb[0].mxu0
        %v1499 = vpop.f32.mrb[0].mxu0
        %1500 = vdwg.mxu0
        %v1501 = vsel %vm952, %v1488, -inf
        %1502 = vmax.xlane.f32.xlu0 %v1501
        %v1503 = vpop.xlane.xlu0 %1502
        %v1504 = vsel %vm952, %v1491, -inf
        %1505 = vmax.xlane.f32.xlu0 %v1504
        %v1506 = vpop.xlane.xlu0 %1505
        %v1507 = vsel %vm959, %v1496, -inf
        %1508 = vmax.xlane.f32.xlu0 %v1507
        %v1509 = vpop.xlane.xlu0 %1508
        %v1510 = vsub.f32 %v1488, %v1503
        %v1511 = vsub.f32 %v1491, %v1506
        %v1512 = vsub.f32 %v1496, %v1509
        %v1513 = vmul.f32 %v1510, 1.442695
        %v1514 = vpow.pop %v1513
        %v1515 = vmul.f32 %v1511, 1.442695
        %v1516 = vpow.pop %v1515
        %v1517 = vmul.f32 %v1512, 1.442695
        %v1518 = vpow.pop %v1517
        %v1519 = vsel %vm952, %v1514, 0.0
        %1520 = vadd.xlane.f32.xlu0 %v1519
        %v1521 = vpop.xlane.xlu0 %1520
        %v1522 = vsel %vm952, %v1516, 0.0
        %1523 = vadd.xlane.f32.xlu0 %v1522
        %v1524 = vpop.xlane.xlu0 %1523
        %v1525 = vsel %vm959, %v1518, 0.0
        %1526 = vadd.xlane.f32.xlu0 %v1525
        %v1527 = vpop.xlane.xlu0 %1526
        %v1528 = vrcp.pop %v1521
        %v1529 = vmul.f32 %v1514, %v1528
        %v1530 = vrcp.pop %v1524
        %v1531 = vmul.f32 %v1516, %v1530
        %v1532 = vrcp.pop %v1527
        %v1533 = vmul.f32 %v1518, %v1532
        %v1534 = vpack.c.bf16 %v1531, %v1529
        %v1535 = vpack.c.bf16 %v1533, %v1533
        %1536 = vrot.lane.b32.xlu0 %v1433, 64
        %v1537 = vpop.permute.xlu0 %1536
        %1538 = vrot.lane.b32.xlu0 %v1434, 64
        %v1539 = vpop.permute.xlu0 %1538
        %v1542 = vsel %vm952, %v1534, 0
        %v1545 = vsel %vm952, %v1535, 0
        %v1548 = vand.u32 %v1539, %v1002
        %1550 = vmatprep.subr.bf16.mxu0 0
        %1551 = vmatpush1.bf16.msra.mxu0 %v1537
        %1552 = vmatprep.subr.bf16.mxu0 0
        %1553 = vmatpush1.bf16.msra.mxu0 %v1548
        %1554 = vmatprep.subr.bf16.mxu0 0
        %1555 = vmatpush1.bf16.msra.mxu0 0
        %1556 = vmatprep.subr.bf16.mxu0 0
        %1557 = vmatpush1.bf16.msra.mxu0 0
        %1558 = vmatprep.subr.bf16.mxu0 0
        %1559 = vmatpush1.bf16.msra.mxu0 0
        %1560 = vmatprep.subr.bf16.mxu0 0
        %1561 = vmatpush1.bf16.msra.mxu0 0
        %1562 = vmatprep.subr.bf16.mxu0 0
        %1563 = vmatpush1.bf16.msra.mxu0 0
        %1564 = vmatprep.subr.bf16.mxu0 0
        %1565 = vmatpush1.bf16.msra.mxu0 0
        %1566 = vmatprep.subr.bf16.mxu0 0
        %1567 = vmatpush1.bf16.msra.mxu0 0
        %1568 = vmatprep.subr.bf16.mxu0 0
        %1569 = vmatpush1.bf16.msra.mxu0 0
        %1570 = vmatprep.subr.bf16.mxu0 0
        %1571 = vmatpush1.bf16.msra.mxu0 0
        %1572 = vmatprep.subr.bf16.mxu0 0
        %1573 = vmatpush1.bf16.msra.mxu0 0
        %1574 = vmatprep.subr.bf16.mxu0 0
        %1575 = vmatpush1.bf16.msra.mxu0 0
        %1576 = vmatprep.subr.bf16.mxu0 0
        %1577 = vmatpush1.bf16.msra.mxu0 0
        %1578 = vmatprep.subr.bf16.mxu0 0
        %1579 = vmatpush1.bf16.msra.mxu0 0
        %1580 = vmatprep.subr.bf16.mxu0 0
        %1581 = vmatpush1.bf16.msra.mxu0 0
        %1582 = vmatprep.mubr.bf16.mxu0 0
        %1583 = vmatmul.mubr.bf16.gmra.mrb[0].mxu0 %v1542
        %v1584 = vpop.f32.mrb[0].mxu0
        %v1585 = vadd.f32 0.0, %v1584
        %v1586 = vpop.f32.mrb[0].mxu0
        %v1587 = vpop.f32.mrb[0].mxu0
        %v1588 = vadd.f32 0.0, %v1587
        %v1589 = vpop.f32.mrb[0].mxu0
        %1590 = vmatprep.mubr.bf16.mxu0 0
        %1591 = vmatmul.mubr.bf16.gmra.mrb[0].mxu0 %v1545
        %v1592 = vpop.f32.mrb[0].mxu0
        %v1593 = vadd.f32 0.0, %v1592
        %v1594 = vpop.f32.mrb[0].mxu0
        %v1595 = vpop.f32.mrb[0].mxu0
        %v1596 = vpop.f32.mrb[0].mxu0
        %1597 = vdwg.mxu0
        %v1598 = vpack.c.bf16 %v1588, %v1585
        %v1599 = vpack.c.bf16 %v1593, %v1593
        %1600 = vrot.lane.b32.xlu0 %v1433, 112
        %v1601 = vpop.permute.xlu0 %1600
        %1602 = vrot.lane.b32.xlu0 %v1434, 112
        %v1603 = vpop.permute.xlu0 %1602
        %1604 = vrot.lane.b32.xlu0 %v1433, 80
        %v1605 = vpop.permute.xlu0 %1604
        %1606 = vrot.lane.b32.xlu0 %v1434, 80
        %v1607 = vpop.permute.xlu0 %1606
        %v1609 = vsel %vm891, %v1601, 0
        %v1612 = vsel %vm891, %v1603, 0
        %v1615 = vsel %vm891, %v1605, 0
        %v1618 = vsel %vm891, %v1607, 0
        %1620 = vmatprep.subr.bf16.mxu0 0
        %1621 = vmatpush1.bf16.xpose.msra.mxu0 %v1615
        %1622 = vmatprep.subr.bf16.mxu0 0
        %1623 = vmatpush1.bf16.xpose.msra.mxu0 %v1618
        %1624 = vmatprep.subr.bf16.mxu0 0
        %1625 = vmatpush1.bf16.xpose.msra.mxu0 0
        %1626 = vmatprep.subr.bf16.mxu0 0
        %1627 = vmatpush1.bf16.xpose.msra.mxu0 0
        %1628 = vmatprep.subr.bf16.mxu0 0
        %1629 = vmatpush1.bf16.xpose.msra.mxu0 0
        %1630 = vmatprep.subr.bf16.mxu0 0
        %1631 = vmatpush1.bf16.xpose.msra.mxu0 0
        %1632 = vmatprep.subr.bf16.mxu0 0
        %1633 = vmatpush1.bf16.xpose.msra.mxu0 0
        %1634 = vmatprep.subr.bf16.mxu0 0
        %1635 = vmatpush1.bf16.xpose.msra.mxu0 0
        %1636 = vmatprep.subr.bf16.mxu0 0
        %1637 = vmatpush1.bf16.xpose.msra.mxu0 0
        %1638 = vmatprep.subr.bf16.mxu0 0
        %1639 = vmatpush1.bf16.xpose.msra.mxu0 0
        %1640 = vmatprep.subr.bf16.mxu0 0
        %1641 = vmatpush1.bf16.xpose.msra.mxu0 0
        %1642 = vmatprep.subr.bf16.mxu0 0
        %1643 = vmatpush1.bf16.xpose.msra.mxu0 0
        %1644 = vmatprep.subr.bf16.mxu0 0
        %1645 = vmatpush1.bf16.xpose.msra.mxu0 0
        %1646 = vmatprep.subr.bf16.mxu0 0
        %1647 = vmatpush1.bf16.xpose.msra.mxu0 0
        %1648 = vmatprep.subr.bf16.mxu0 0
        %1649 = vmatpush1.bf16.xpose.msra.mxu0 0
        %1650 = vmatprep.subr.bf16.mxu0 0
        %1651 = vmatpush1.bf16.xpose.msra.mxu0 0
        %1652 = vmatprep.mubr.bf16.mxu0 0
        %1653 = vmatmul.mubr.bf16.gmra.mrb[0].mxu0 %v1609
        %v1654 = vpop.f32.mrb[0].mxu0
        %v1655 = vadd.f32 0.0, %v1654
        %v1656 = vpop.f32.mrb[0].mxu0
        %v1657 = vpop.f32.mrb[0].mxu0
        %v1658 = vadd.f32 0.0, %v1657
        %v1659 = vpop.f32.mrb[0].mxu0
        %1660 = vmatprep.mubr.bf16.mxu0 0
        %1661 = vmatmul.mubr.bf16.gmra.mrb[0].mxu0 %v1612
        %v1662 = vpop.f32.mrb[0].mxu0
        %v1663 = vadd.f32 0.0, %v1662
        %v1664 = vpop.f32.mrb[0].mxu0
        %v1665 = vpop.f32.mrb[0].mxu0
        %v1666 = vpop.f32.mrb[0].mxu0
        %1667 = vdwg.mxu0
        %v1668 = vsel %vm952, %v1655, -inf
        %1669 = vmax.xlane.f32.xlu0 %v1668
        %v1670 = vpop.xlane.xlu0 %1669
        %v1671 = vsel %vm952, %v1658, -inf
        %1672 = vmax.xlane.f32.xlu0 %v1671
        %v1673 = vpop.xlane.xlu0 %1672
        %v1674 = vsel %vm959, %v1663, -inf
        %1675 = vmax.xlane.f32.xlu0 %v1674
        %v1676 = vpop.xlane.xlu0 %1675
        %v1677 = vsub.f32 %v1655, %v1670
        %v1678 = vsub.f32 %v1658, %v1673
        %v1679 = vsub.f32 %v1663, %v1676
        %v1680 = vmul.f32 %v1677, 1.442695
        %v1681 = vpow.pop %v1680
        %v1682 = vmul.f32 %v1678, 1.442695
        %v1683 = vpow.pop %v1682
        %v1684 = vmul.f32 %v1679, 1.442695
        %v1685 = vpow.pop %v1684
        %v1686 = vsel %vm952, %v1681, 0.0
        %1687 = vadd.xlane.f32.xlu0 %v1686
        %v1688 = vpop.xlane.xlu0 %1687
        %v1689 = vsel %vm952, %v1683, 0.0
        %1690 = vadd.xlane.f32.xlu0 %v1689
        %v1691 = vpop.xlane.xlu0 %1690
        %v1692 = vsel %vm959, %v1685, 0.0
        %1693 = vadd.xlane.f32.xlu0 %v1692
        %v1694 = vpop.xlane.xlu0 %1693
        %v1695 = vrcp.pop %v1688
        %v1696 = vmul.f32 %v1681, %v1695
        %v1697 = vrcp.pop %v1691
        %v1698 = vmul.f32 %v1683, %v1697
        %v1699 = vrcp.pop %v1694
        %v1700 = vmul.f32 %v1685, %v1699
        %v1701 = vpack.c.bf16 %v1698, %v1696
        %v1702 = vpack.c.bf16 %v1700, %v1700
        %1703 = vrot.lane.b32.xlu0 %v1433, 48
        %v1704 = vpop.permute.xlu0 %1703
        %1705 = vrot.lane.b32.xlu0 %v1434, 48
        %v1706 = vpop.permute.xlu0 %1705
        %v1709 = vsel %vm952, %v1701, 0
        %v1712 = vsel %vm952, %v1702, 0
        %v1715 = vand.u32 %v1706, %v1002
        %1717 = vmatprep.subr.bf16.mxu0 0
        %1718 = vmatpush1.bf16.msra.mxu0 %v1704
        %1719 = vmatprep.subr.bf16.mxu0 0
        %1720 = vmatpush1.bf16.msra.mxu0 %v1715
        %1721 = vmatprep.subr.bf16.mxu0 0
        %1722 = vmatpush1.bf16.msra.mxu0 0
        %1723 = vmatprep.subr.bf16.mxu0 0
        %1724 = vmatpush1.bf16.msra.mxu0 0
        %1725 = vmatprep.subr.bf16.mxu0 0
        %1726 = vmatpush1.bf16.msra.mxu0 0
        %1727 = vmatprep.subr.bf16.mxu0 0
        %1728 = vmatpush1.bf16.msra.mxu0 0
        %1729 = vmatprep.subr.bf16.mxu0 0
        %1730 = vmatpush1.bf16.msra.mxu0 0
        %1731 = vmatprep.subr.bf16.mxu0 0
        %1732 = vmatpush1.bf16.msra.mxu0 0
        %1733 = vmatprep.subr.bf16.mxu0 0
        %1734 = vmatpush1.bf16.msra.mxu0 0
        %1735 = vmatprep.subr.bf16.mxu0 0
        %1736 = vmatpush1.bf16.msra.mxu0 0
        %1737 = vmatprep.subr.bf16.mxu0 0
        %1738 = vmatpush1.bf16.msra.mxu0 0
        %1739 = vmatprep.subr.bf16.mxu0 0
        %1740 = vmatpush1.bf16.msra.mxu0 0
        %1741 = vmatprep.subr.bf16.mxu0 0
        %1742 = vmatpush1.bf16.msra.mxu0 0
        %1743 = vmatprep.subr.bf16.mxu0 0
        %1744 = vmatpush1.bf16.msra.mxu0 0
        %1745 = vmatprep.subr.bf16.mxu0 0
        %1746 = vmatpush1.bf16.msra.mxu0 0
        %1747 = vmatprep.subr.bf16.mxu0 0
        %1748 = vmatpush1.bf16.msra.mxu0 0
        %1749 = vmatprep.mubr.bf16.mxu0 0
        %1750 = vmatmul.mubr.bf16.gmra.mrb[0].mxu0 %v1709
        %v1751 = vpop.f32.mrb[0].mxu0
        %v1752 = vadd.f32 0.0, %v1751
        %v1753 = vpop.f32.mrb[0].mxu0
        %v1754 = vpop.f32.mrb[0].mxu0
        %v1755 = vadd.f32 0.0, %v1754
        %v1756 = vpop.f32.mrb[0].mxu0
        %1757 = vmatprep.mubr.bf16.mxu0 0
        %1758 = vmatmul.mubr.bf16.gmra.mrb[0].mxu0 %v1712
        %v1759 = vpop.f32.mrb[0].mxu0
        %v1760 = vadd.f32 0.0, %v1759
        %v1761 = vpop.f32.mrb[0].mxu0
        %v1762 = vpop.f32.mrb[0].mxu0
        %v1763 = vpop.f32.mrb[0].mxu0
        %1764 = vdwg.mxu0
        %v1765 = vpack.c.bf16 %v1755, %v1752
        %v1766 = vpack.c.bf16 %v1760, %v1760
        %v1768 = vsel %vm891, %v1765, 0
        %v1771 = vsel %vm891, %v1766, 0
        %1773 = vmatprep.subr.bf16.mxu0 0
        %1774 = vmatpush1.bf16.msra.mxu0 %v1224
        %1775 = vmatprep.subr.bf16.mxu0 0
        %1776 = vmatpush1.bf16.msra.mxu0 0
        %1777 = vmatprep.subr.bf16.mxu0 0
        %1778 = vmatpush1.bf16.msra.mxu0 0
        %1779 = vmatprep.subr.bf16.mxu0 0
        %1780 = vmatpush1.bf16.msra.mxu0 0
        %1781 = vmatprep.subr.bf16.mxu0 0
        %1782 = vmatpush1.bf16.msra.mxu0 0
        %1783 = vmatprep.subr.bf16.mxu0 0
        %1784 = vmatpush1.bf16.msra.mxu0 0
        %1785 = vmatprep.subr.bf16.mxu0 0
        %1786 = vmatpush1.bf16.msra.mxu0 0
        %1787 = vmatprep.subr.bf16.mxu0 0
        %1788 = vmatpush1.bf16.msra.mxu0 0
        %1789 = vmatprep.subr.bf16.mxu0 0
        %1790 = vmatpush1.bf16.msra.mxu0 0
        %1791 = vmatprep.subr.bf16.mxu0 0
        %1792 = vmatpush1.bf16.msra.mxu0 0
        %1793 = vmatprep.subr.bf16.mxu0 0
        %1794 = vmatpush1.bf16.msra.mxu0 0
        %1795 = vmatprep.subr.bf16.mxu0 0
        %1796 = vmatpush1.bf16.msra.mxu0 0
        %1797 = vmatprep.subr.bf16.mxu0 0
        %1798 = vmatpush1.bf16.msra.mxu0 0
        %1799 = vmatprep.subr.bf16.mxu0 0
        %1800 = vmatpush1.bf16.msra.mxu0 0
        %1801 = vmatprep.subr.bf16.mxu0 0
        %1802 = vmatpush1.bf16.msra.mxu0 0
        %1803 = vmatprep.subr.bf16.mxu0 0
        %1804 = vmatpush1.bf16.msra.mxu0 0
        %1805 = vmatprep.mubr.bf16.mxu0 0
        %1806 = vmatmul.mubr.bf16.gmra.mrb[0].mxu0 %v1768
        %v1807 = vpop.f32.mrb[0].mxu0
        %v1808 = vadd.f32 0.0, %v1807
        %v1809 = vpop.f32.mrb[0].mxu0
        %v1810 = vpop.f32.mrb[0].mxu0
        %v1811 = vadd.f32 0.0, %v1810
        %v1812 = vpop.f32.mrb[0].mxu0
        %1813 = vmatprep.mubr.bf16.mxu0 0
        %1814 = vmatmul.mubr.bf16.gmra.mrb[0].mxu0 %v1771
        %v1815 = vpop.f32.mrb[0].mxu0
        %v1816 = vadd.f32 0.0, %v1815
        %v1817 = vpop.f32.mrb[0].mxu0
        %v1818 = vpop.f32.mrb[0].mxu0
        %v1819 = vpop.f32.mrb[0].mxu0
        %1820 = vdwg.mxu0
        %v1822 = vsel %vm891, %v1598, 0
        %v1825 = vsel %vm891, %v1599, 0
        %1827 = vmatprep.subr.bf16.mxu0 0
        %1828 = vmatpush1.bf16.msra.mxu0 %v1056
        %1829 = vmatprep.subr.bf16.mxu0 0
        %1830 = vmatpush1.bf16.msra.mxu0 0
        %1831 = vmatprep.subr.bf16.mxu0 0
        %1832 = vmatpush1.bf16.msra.mxu0 0
        %1833 = vmatprep.subr.bf16.mxu0 0
        %1834 = vmatpush1.bf16.msra.mxu0 0
        %1835 = vmatprep.subr.bf16.mxu0 0
        %1836 = vmatpush1.bf16.msra.mxu0 0
        %1837 = vmatprep.subr.bf16.mxu0 0
        %1838 = vmatpush1.bf16.msra.mxu0 0
        %1839 = vmatprep.subr.bf16.mxu0 0
        %1840 = vmatpush1.bf16.msra.mxu0 0
        %1841 = vmatprep.subr.bf16.mxu0 0
        %1842 = vmatpush1.bf16.msra.mxu0 0
        %1843 = vmatprep.subr.bf16.mxu0 0
        %1844 = vmatpush1.bf16.msra.mxu0 0
        %1845 = vmatprep.subr.bf16.mxu0 0
        %1846 = vmatpush1.bf16.msra.mxu0 0
        %1847 = vmatprep.subr.bf16.mxu0 0
        %1848 = vmatpush1.bf16.msra.mxu0 0
        %1849 = vmatprep.subr.bf16.mxu0 0
        %1850 = vmatpush1.bf16.msra.mxu0 0
        %1851 = vmatprep.subr.bf16.mxu0 0
        %1852 = vmatpush1.bf16.msra.mxu0 0
        %1853 = vmatprep.subr.bf16.mxu0 0
        %1854 = vmatpush1.bf16.msra.mxu0 0
        %1855 = vmatprep.subr.bf16.mxu0 0
        %1856 = vmatpush1.bf16.msra.mxu0 0
        %1857 = vmatprep.subr.bf16.mxu0 0
        %1858 = vmatpush1.bf16.msra.mxu0 0
        %1859 = vmatprep.mubr.bf16.mxu0 0
        %1860 = vmatmul.mubr.bf16.gmra.mrb[0].mxu0 %v1822
        %v1861 = vpop.f32.mrb[0].mxu0
        %v1862 = vadd.f32 %v1808, %v1861
        %v1863 = vpop.f32.mrb[0].mxu0
        %v1864 = vpop.f32.mrb[0].mxu0
        %v1865 = vadd.f32 %v1811, %v1864
        %v1866 = vpop.f32.mrb[0].mxu0
        %1867 = vmatprep.mubr.bf16.mxu0 0
        %1868 = vmatmul.mubr.bf16.gmra.mrb[0].mxu0 %v1825
        %v1869 = vpop.f32.mrb[0].mxu0
        %v1870 = vadd.f32 %v1816, %v1869
        %v1871 = vpop.f32.mrb[0].mxu0
        %v1872 = vpop.f32.mrb[0].mxu0
        %v1873 = vpop.f32.mrb[0].mxu0
        %1874 = vdwg.mxu0
        %v1875 = vadd.f32 %v1862, %v1337
        %v1876 = vadd.f32 %v1865, %v1337
        %v1877 = vadd.f32 %v1870, %v1337
        %s1878 = scalar_lea.vmem [#allocation3], 24
        %1879 = vst.msk [vmem:[%s1878] sm:$0xff] %vm828, %v1875
        %1880 = vst.msk [vmem:[%s1878 + $0x8] sm:$0xff] %vm828, %v1876
        %1881 = vst.msk [vmem:[%s1878 + $0x10] sm:$0x1] %vm1344, %v1877
        %v1882 = vsel %vm828, %v1875, 0.0
        %v1883 = vsel %vm828, %v1876, 0.0
        %v1884 = vadd.f32 %v1882, %v1883
        %v1885 = vsel %vm1344, %v1877, 0.0
        %v1886 = vadd.f32 %v1884, %v1885
        %v1887 = vrot.slane %v1886, 4
        %v1888 = vadd.f32 %v1886, %v1887
        %v1889 = vrot.slane %v1888, 2
        %v1890 = vadd.f32 %v1888, %v1889
        %v1891 = vrot.slane %v1890, 1
        %v1892 = vadd.f32 %v1890, %v1891
        %v1893 = vadd.f32 %v1357, %v1892
        %v1894 = vmul.f32 %v1875, %v1875
        %v1895 = vmul.f32 %v1876, %v1876
        %v1896 = vmul.f32 %v1877, %v1877
        %v1897 = vsel %vm828, %v1894, 0.0
        %v1898 = vsel %vm828, %v1895, 0.0
        %v1899 = vadd.f32 %v1897, %v1898
        %v1900 = vsel %vm1344, %v1896, 0.0
        %v1901 = vadd.f32 %v1899, %v1900
        %v1902 = vrot.slane %v1901, 4
        %v1903 = vadd.f32 %v1901, %v1902
        %v1904 = vrot.slane %v1903, 2
        %v1905 = vadd.f32 %v1903, %v1904
        %v1906 = vrot.slane %v1905, 1
        %v1907 = vadd.f32 %v1905, %v1906
        %v1908 = vadd.f32 %v1372, %v1907
        %v1909 = vmul.f32 %v1893, 0.029411765
        %v1910 = vmul.f32 %v1908, 0.029411765
        %v1911 = vmul.f32 %v1909, %v1909
        %v1912 = vsub.f32 %v1910, %v1911
        %v1913 = vadd.f32 %v1912, 1e-05
        %v1914 = vrsqrt.pop %v1913
        %v1915 = vld [vmem:[%s640] sm:$0x1]
        %v1916 = vmul.f32 %v1914, %v1915
        %v1917 = vld [vmem:[%s643] sm:$0x1]
        %v1918 = vmul.f32 %v1909, %v1916
        %v1919 = vsub.f32 %v1917, %v1918
        %v1920 = vld [vmem:[%s648] sm:$0xff]
        %v1921 = vld [vmem:[%s648 + $0x8] sm:$0xff]
        %v1922 = vld [vmem:[%s648 + $0x10] sm:$0xff]
        %v1923 = vld [vmem:[%s648 + $0x18] sm:$0xff]
        %v1924 = vld [vmem:[%s651] sm:$0x1]
        %v1925 = vld [vmem:[%s656] sm:$0xff]
        %v1926 = vld [vmem:[%s656 + $0x8] sm:$0xff]
        %v1927 = vld [vmem:[%s656 + $0x10] sm:$0xff]
        %v1928 = vld [vmem:[%s656 + $0x18] sm:$0xff]
        %v1929 = vld [vmem:[%s656 + $0x20] sm:$0xff]
        %v1930 = vld [vmem:[%s656 + $0x28] sm:$0xff]
        %v1931 = vld [vmem:[%s656 + $0x30] sm:$0xff]
        %v1932 = vld [vmem:[%s656 + $0x38] sm:$0xff]
        %v1933 = vld [vmem:[%s659] sm:$0x1]
        %v1934 = vld [vmem:[#allocation2] sm:$0xff]
        %v1935 = vld [vmem:[#allocation2 + $0x8] sm:$0xff]
        %v1936 = vld [vmem:[#allocation2 + $0x10] sm:$0x1]
        %v1937 = vld [vmem:[#allocation3] sm:$0xff]
        %v1938 = vld [vmem:[#allocation3 + $0x8] sm:$0xff]
        %v1939 = vld [vmem:[#allocation3 + $0x10] sm:$0x1]
        %v1940 = vlaneseq
        %v1941 = vshrl.u32 %v1940, 7
        %v1942 = vsub.s32 0, %v1941
        %v1943 = vrot.slane %v1916, %v1942
        %v1944 = vmul.f32 %v1937, %v1943
        %v1945 = vmul.f32 %v1938, %v1943
        %v1946 = vmul.f32 %v1939, %v1943
        %v1947 = vadd.f32 %v1934, %v1944
        %v1948 = vadd.f32 %v1935, %v1945
        %v1949 = vadd.f32 %v1936, %v1946
        %v1951 = vlaneseq
        %v1952 = vshrl.u32 %v1951, 7
        %v1953 = vsub.s32 0, %v1952
        %v1954 = vrot.slane %v1919, %v1953
        %v1956 = vadd.f32 %v1947, %v1954
        %v1957 = vadd.f32 %v1948, %v1954
        %v1958 = vadd.f32 %v1949, %v1954
        %1959 = vst.msk [vmem:[#allocation2] sm:$0xff] %vm828, %v1956
        %1960 = vst.msk [vmem:[#allocation2 + $0x8] sm:$0xff] %vm828, %v1957
        %1961 = vst.msk [vmem:[#allocation2 + $0x10] sm:$0x1] %vm1344, %v1958
        %v1962 = vpack.c.bf16 %v1957, %v1956
        %v1963 = vpack.c.bf16 %v1958, %v1958
        %v1964 = vpack.c.bf16 %v1921, %v1920
        %v1965 = vpack.c.bf16 %v1923, %v1922
        %v1967 = vlaneseq
        %v1968 = vshrl.u32 %v1967, 7
        %v1969 = vsub.s32 0, %v1968
        %v1970 = vrot.slane %v1924, %v1969
        %v1973 = vsel %vm828, %v1962, 0
        %v1976 = vsel %vm828, %v1963, 0
        %1978 = vmatprep.subr.bf16.mxu0 0
        %1979 = vmatpush1.bf16.msra.mxu0 %v1964
        %1980 = vmatprep.subr.bf16.mxu0 0
        %1981 = vmatpush1.bf16.msra.mxu0 %v1965
        %1982 = vmatprep.subr.bf16.mxu0 0
        %1983 = vmatpush1.bf16.msra.mxu0 0
        %1984 = vmatprep.subr.bf16.mxu0 0
        %1985 = vmatpush1.bf16.msra.mxu0 0
        %1986 = vmatprep.subr.bf16.mxu0 0
        %1987 = vmatpush1.bf16.msra.mxu0 0
        %1988 = vmatprep.subr.bf16.mxu0 0
        %1989 = vmatpush1.bf16.msra.mxu0 0
        %1990 = vmatprep.subr.bf16.mxu0 0
        %1991 = vmatpush1.bf16.msra.mxu0 0
        %1992 = vmatprep.subr.bf16.mxu0 0
        %1993 = vmatpush1.bf16.msra.mxu0 0
        %1994 = vmatprep.subr.bf16.mxu0 0
        %1995 = vmatpush1.bf16.msra.mxu0 0
        %1996 = vmatprep.subr.bf16.mxu0 0
        %1997 = vmatpush1.bf16.msra.mxu0 0
        %1998 = vmatprep.subr.bf16.mxu0 0
        %1999 = vmatpush1.bf16.msra.mxu0 0
        %2000 = vmatprep.subr.bf16.mxu0 0
        %2001 = vmatpush1.bf16.msra.mxu0 0
        %2002 = vmatprep.subr.bf16.mxu0 0
        %2003 = vmatpush1.bf16.msra.mxu0 0
        %2004 = vmatprep.subr.bf16.mxu0 0
        %2005 = vmatpush1.bf16.msra.mxu0 0
        %2006 = vmatprep.subr.bf16.mxu0 0
        %2007 = vmatpush1.bf16.msra.mxu0 0
        %2008 = vmatprep.subr.bf16.mxu0 0
        %2009 = vmatpush1.bf16.msra.mxu0 0
        %2010 = vmatprep.mubr.bf16.mxu0 0
        %2011 = vmatmul.mubr.bf16.gmra.mrb[0].mxu0 %v1973
        %v2012 = vpop.f32.mrb[0].mxu0
        %v2013 = vadd.f32 %v1970, %v2012
        %v2014 = vpop.f32.mrb[0].mxu0
        %v2015 = vpop.f32.mrb[0].mxu0
        %v2016 = vadd.f32 %v1970, %v2015
        %v2017 = vpop.f32.mrb[0].mxu0
        %2018 = vmatprep.mubr.bf16.mxu0 0
        %2019 = vmatmul.mubr.bf16.gmra.mrb[0].mxu0 %v1976
        %v2020 = vpop.f32.mrb[0].mxu0
        %v2021 = vadd.f32 %v1970, %v2020
        %v2022 = vpop.f32.mrb[0].mxu0
        %v2023 = vpop.f32.mrb[0].mxu0
        %v2024 = vpop.f32.mrb[0].mxu0
        %2025 = vdwg.mxu0
        %v2026 = vmul.f32 %v2013, 0.5
        %v2027 = vmul.f32 %v2016, 0.5
        %v2028 = vmul.f32 %v2021, 0.5
        %v2029 = vmul.f32 %v2013, 0.70710677
        %v2030 = vmul.f32 %v2016, 0.70710677
        %v2031 = vmul.f32 %v2021, 0.70710677
        %v2032 = verf.f32.pop %v2029
        %v2033 = verf.f32.pop %v2030
        %v2034 = verf.f32.pop %v2031
        %v2035 = vadd.f32 %v2032, 1.0
        %v2036 = vadd.f32 %v2033, 1.0
        %v2037 = vadd.f32 %v2034, 1.0
        %v2038 = vmul.f32 %v2026, %v2035
        %v2039 = vmul.f32 %v2027, %v2036
        %v2040 = vmul.f32 %v2028, %v2037
        %v2041 = vpack.c.bf16 %v2039, %v2038
        %v2042 = vpack.c.bf16 %v2040, %v2040
        %v2043 = vpack.c.bf16 %v1926, %v1925
        %v2044 = vpack.c.bf16 %v1928, %v1927
        %v2045 = vpack.c.bf16 %v1930, %v1929
        %v2046 = vpack.c.bf16 %v1932, %v1931
        %v2048 = vlaneseq
        %v2049 = vshrl.u32 %v2048, 7
        %v2050 = vsub.s32 0, %v2049
        %v2051 = vrot.slane %v1933, %v2050
        %vm2053 = vcmask 523264
        %v2055 = vsel %vm2053, %v2041, 0
        %v2058 = vsel %vm2053, %v2042, 0
        %2060 = vmatprep.subr.bf16.mxu0 0
        %2061 = vmatpush1.bf16.msra.mxu0 %v2043
        %2062 = vmatprep.subr.bf16.mxu0 0
        %2063 = vmatpush1.bf16.msra.mxu0 %v2044
        %2064 = vmatprep.subr.bf16.mxu0 0
        %2065 = vmatpush1.bf16.msra.mxu0 %v2045
        %2066 = vmatprep.subr.bf16.mxu0 0
        %2067 = vmatpush1.bf16.msra.mxu0 %v2046
        %2068 = vmatprep.subr.bf16.mxu0 0
        %2069 = vmatpush1.bf16.msra.mxu0 0
        %2070 = vmatprep.subr.bf16.mxu0 0
        %2071 = vmatpush1.bf16.msra.mxu0 0
        %2072 = vmatprep.subr.bf16.mxu0 0
        %2073 = vmatpush1.bf16.msra.mxu0 0
        %2074 = vmatprep.subr.bf16.mxu0 0
        %2075 = vmatpush1.bf16.msra.mxu0 0
        %2076 = vmatprep.subr.bf16.mxu0 0
        %2077 = vmatpush1.bf16.msra.mxu0 0
        %2078 = vmatprep.subr.bf16.mxu0 0
        %2079 = vmatpush1.bf16.msra.mxu0 0
        %2080 = vmatprep.subr.bf16.mxu0 0
        %2081 = vmatpush1.bf16.msra.mxu0 0
        %2082 = vmatprep.subr.bf16.mxu0 0
        %2083 = vmatpush1.bf16.msra.mxu0 0
        %2084 = vmatprep.subr.bf16.mxu0 0
        %2085 = vmatpush1.bf16.msra.mxu0 0
        %2086 = vmatprep.subr.bf16.mxu0 0
        %2087 = vmatpush1.bf16.msra.mxu0 0
        %2088 = vmatprep.subr.bf16.mxu0 0
        %2089 = vmatpush1.bf16.msra.mxu0 0
        %2090 = vmatprep.subr.bf16.mxu0 0
        %2091 = vmatpush1.bf16.msra.mxu0 0
        %2092 = vmatprep.mubr.bf16.mxu0 0
        %2093 = vmatmul.mubr.bf16.gmra.mrb[0].mxu0 %v2055
        %v2094 = vpop.f32.mrb[0].mxu0
        %v2095 = vadd.f32 %v2051, %v2094
        %v2096 = vpop.f32.mrb[0].mxu0
        %v2097 = vpop.f32.mrb[0].mxu0
        %v2098 = vadd.f32 %v2051, %v2097
        %v2099 = vpop.f32.mrb[0].mxu0
        %2100 = vmatprep.mubr.bf16.mxu0 0
        %2101 = vmatmul.mubr.bf16.gmra.mrb[0].mxu0 %v2058
        %v2102 = vpop.f32.mrb[0].mxu0
        %v2103 = vadd.f32 %v2051, %v2102
        %v2104 = vpop.f32.mrb[0].mxu0
        %v2105 = vpop.f32.mrb[0].mxu0
        %v2106 = vpop.f32.mrb[0].mxu0
        %2107 = vdwg.mxu0
        %2108 = vst.msk [vmem:[#allocation3] sm:$0xff] %vm828, %v2095
        %2109 = vst.msk [vmem:[#allocation3 + $0x8] sm:$0xff] %vm828, %v2098
        %2110 = vst.msk [vmem:[#allocation3 + $0x10] sm:$0x1] %vm1344, %v2103
        %v2111 = vsel %vm828, %v2095, 0.0
        %v2112 = vsel %vm828, %v2098, 0.0
        %v2113 = vadd.f32 %v2111, %v2112
        %v2114 = vsel %vm1344, %v2103, 0.0
        %v2115 = vadd.f32 %v2113, %v2114
        %v2116 = vrot.slane %v2115, 4
        %v2117 = vadd.f32 %v2115, %v2116
        %v2118 = vrot.slane %v2117, 2
        %v2119 = vadd.f32 %v2117, %v2118
        %v2120 = vrot.slane %v2119, 1
        %v2121 = vadd.f32 %v2119, %v2120
        %v2122 = vadd.f32 %v2121, 0.0
        %v2123 = vmul.f32 %v2095, %v2095
        %v2124 = vmul.f32 %v2098, %v2098
        %v2125 = vmul.f32 %v2103, %v2103
        %v2126 = vsel %vm828, %v2123, 0.0
        %v2127 = vsel %vm828, %v2124, 0.0
        %v2128 = vadd.f32 %v2126, %v2127
        %v2129 = vsel %vm1344, %v2125, 0.0
        %v2130 = vadd.f32 %v2128, %v2129
        %v2131 = vrot.slane %v2130, 4
        %v2132 = vadd.f32 %v2130, %v2131
        %v2133 = vrot.slane %v2132, 2
        %v2134 = vadd.f32 %v2132, %v2133
        %v2135 = vrot.slane %v2134, 1
        %v2136 = vadd.f32 %v2134, %v2135
        %v2137 = vadd.f32 %v2136, 0.0
        %v2138 = vld [vmem:[%s1373] sm:$0xff]
        %v2139 = vld [vmem:[%s1373 + $0x8] sm:$0xff]
        %v2140 = vld [vmem:[%s1373 + $0x10] sm:$0x1]
        %v2141 = vld [vmem:[%s1878] sm:$0xff]
        %v2142 = vld [vmem:[%s1878 + $0x8] sm:$0xff]
        %v2143 = vld [vmem:[%s1878 + $0x10] sm:$0x1]
        %v2144 = vmul.f32 %v2141, %v1943
        %v2145 = vmul.f32 %v2142, %v1943
        %v2146 = vmul.f32 %v2143, %v1943
        %v2147 = vadd.f32 %v2138, %v2144
        %v2148 = vadd.f32 %v2139, %v2145
        %v2149 = vadd.f32 %v2140, %v2146
        %v2150 = vadd.f32 %v2147, %v1954
        %v2151 = vadd.f32 %v2148, %v1954
        %v2152 = vadd.f32 %v2149, %v1954
        %2153 = vst.msk [vmem:[%s1373] sm:$0xff] %vm828, %v2150
        %2154 = vst.msk [vmem:[%s1373 + $0x8] sm:$0xff] %vm828, %v2151
        %2155 = vst.msk [vmem:[%s1373 + $0x10] sm:$0x1] %vm1344, %v2152
        %v2156 = vpack.c.bf16 %v2151, %v2150
        %v2157 = vpack.c.bf16 %v2152, %v2152
        %v2159 = vsel %vm828, %v2156, 0
        %v2162 = vsel %vm828, %v2157, 0
        %2164 = vmatprep.subr.bf16.mxu0 0
        %2165 = vmatpush1.bf16.msra.mxu0 %v1964
        %2166 = vmatprep.subr.bf16.mxu0 0
        %2167 = vmatpush1.bf16.msra.mxu0 %v1965
        %2168 = vmatprep.subr.bf16.mxu0 0
        %2169 = vmatpush1.bf16.msra.mxu0 0
        %2170 = vmatprep.subr.bf16.mxu0 0
        %2171 = vmatpush1.bf16.msra.mxu0 0
        %2172 = vmatprep.subr.bf16.mxu0 0
        %2173 = vmatpush1.bf16.msra.mxu0 0
        %2174 = vmatprep.subr.bf16.mxu0 0
        %2175 = vmatpush1.bf16.msra.mxu0 0
        %2176 = vmatprep.subr.bf16.mxu0 0
        %2177 = vmatpush1.bf16.msra.mxu0 0
        %2178 = vmatprep.subr.bf16.mxu0 0
        %2179 = vmatpush1.bf16.msra.mxu0 0
        %2180 = vmatprep.subr.bf16.mxu0 0
        %2181 = vmatpush1.bf16.msra.mxu0 0
        %2182 = vmatprep.subr.bf16.mxu0 0
        %2183 = vmatpush1.bf16.msra.mxu0 0
        %2184 = vmatprep.subr.bf16.mxu0 0
        %2185 = vmatpush1.bf16.msra.mxu0 0
        %2186 = vmatprep.subr.bf16.mxu0 0
        %2187 = vmatpush1.bf16.msra.mxu0 0
        %2188 = vmatprep.subr.bf16.mxu0 0
        %2189 = vmatpush1.bf16.msra.mxu0 0
        %2190 = vmatprep.subr.bf16.mxu0 0
        %2191 = vmatpush1.bf16.msra.mxu0 0
        %2192 = vmatprep.subr.bf16.mxu0 0
        %2193 = vmatpush1.bf16.msra.mxu0 0
        %2194 = vmatprep.subr.bf16.mxu0 0
        %2195 = vmatpush1.bf16.msra.mxu0 0
        %2196 = vmatprep.mubr.bf16.mxu0 0
        %2197 = vmatmul.mubr.bf16.gmra.mrb[0].mxu0 %v2159
        %v2198 = vpop.f32.mrb[0].mxu0
        %v2199 = vadd.f32 %v1970, %v2198
        %v2200 = vpop.f32.mrb[0].mxu0
        %v2201 = vpop.f32.mrb[0].mxu0
        %v2202 = vadd.f32 %v1970, %v2201
        %v2203 = vpop.f32.mrb[0].mxu0
        %2204 = vmatprep.mubr.bf16.mxu0 0
        %2205 = vmatmul.mubr.bf16.gmra.mrb[0].mxu0 %v2162
        %v2206 = vpop.f32.mrb[0].mxu0
        %v2207 = vadd.f32 %v1970, %v2206
        %v2208 = vpop.f32.mrb[0].mxu0
        %v2209 = vpop.f32.mrb[0].mxu0
        %v2210 = vpop.f32.mrb[0].mxu0
        %2211 = vdwg.mxu0
        %v2212 = vmul.f32 %v2199, 0.5
        %v2213 = vmul.f32 %v2202, 0.5
        %v2214 = vmul.f32 %v2207, 0.5
        %v2215 = vmul.f32 %v2199, 0.70710677
        %v2216 = vmul.f32 %v2202, 0.70710677
        %v2217 = vmul.f32 %v2207, 0.70710677
        %v2218 = verf.f32.pop %v2215
        %v2219 = verf.f32.pop %v2216
        %v2220 = verf.f32.pop %v2217
        %v2221 = vadd.f32 %v2218, 1.0
        %v2222 = vadd.f32 %v2219, 1.0
        %v2223 = vadd.f32 %v2220, 1.0
        %v2224 = vmul.f32 %v2212, %v2221
        %v2225 = vmul.f32 %v2213, %v2222
        %v2226 = vmul.f32 %v2214, %v2223
        %v2227 = vpack.c.bf16 %v2225, %v2224
        %v2228 = vpack.c.bf16 %v2226, %v2226
        %v2230 = vsel %vm2053, %v2227, 0
        %v2233 = vsel %vm2053, %v2228, 0
        %2235 = vmatprep.subr.bf16.mxu0 0
        %2236 = vmatpush1.bf16.msra.mxu0 %v2043
        %2237 = vmatprep.subr.bf16.mxu0 0
        %2238 = vmatpush1.bf16.msra.mxu0 %v2044
        %2239 = vmatprep.subr.bf16.mxu0 0
        %2240 = vmatpush1.bf16.msra.mxu0 %v2045
        %2241 = vmatprep.subr.bf16.mxu0 0
        %2242 = vmatpush1.bf16.msra.mxu0 %v2046
        %2243 = vmatprep.subr.bf16.mxu0 0
        %2244 = vmatpush1.bf16.msra.mxu0 0
        %2245 = vmatprep.subr.bf16.mxu0 0
        %2246 = vmatpush1.bf16.msra.mxu0 0
        %2247 = vmatprep.subr.bf16.mxu0 0
        %2248 = vmatpush1.bf16.msra.mxu0 0
        %2249 = vmatprep.subr.bf16.mxu0 0
        %2250 = vmatpush1.bf16.msra.mxu0 0
        %2251 = vmatprep.subr.bf16.mxu0 0
        %2252 = vmatpush1.bf16.msra.mxu0 0
        %2253 = vmatprep.subr.bf16.mxu0 0
        %2254 = vmatpush1.bf16.msra.mxu0 0
        %2255 = vmatprep.subr.bf16.mxu0 0
        %2256 = vmatpush1.bf16.msra.mxu0 0
        %2257 = vmatprep.subr.bf16.mxu0 0
        %2258 = vmatpush1.bf16.msra.mxu0 0
        %2259 = vmatprep.subr.bf16.mxu0 0
        %2260 = vmatpush1.bf16.msra.mxu0 0
        %2261 = vmatprep.subr.bf16.mxu0 0
        %2262 = vmatpush1.bf16.msra.mxu0 0
        %2263 = vmatprep.subr.bf16.mxu0 0
        %2264 = vmatpush1.bf16.msra.mxu0 0
        %2265 = vmatprep.subr.bf16.mxu0 0
        %2266 = vmatpush1.bf16.msra.mxu0 0
        %2267 = vmatprep.mubr.bf16.mxu0 0
        %2268 = vmatmul.mubr.bf16.gmra.mrb[0].mxu0 %v2230
        %v2269 = vpop.f32.mrb[0].mxu0
        %v2270 = vadd.f32 %v2051, %v2269
        %v2271 = vpop.f32.mrb[0].mxu0
        %v2272 = vpop.f32.mrb[0].mxu0
        %v2273 = vadd.f32 %v2051, %v2272
        %v2274 = vpop.f32.mrb[0].mxu0
        %2275 = vmatprep.mubr.bf16.mxu0 0
        %2276 = vmatmul.mubr.bf16.gmra.mrb[0].mxu0 %v2233
        %v2277 = vpop.f32.mrb[0].mxu0
        %v2278 = vadd.f32 %v2051, %v2277
        %v2279 = vpop.f32.mrb[0].mxu0
        %v2280 = vpop.f32.mrb[0].mxu0
        %v2281 = vpop.f32.mrb[0].mxu0
        %2282 = vdwg.mxu0
        %2283 = vst.msk [vmem:[%s1878] sm:$0xff] %vm828, %v2270
        %2284 = vst.msk [vmem:[%s1878 + $0x8] sm:$0xff] %vm828, %v2273
        %2285 = vst.msk [vmem:[%s1878 + $0x10] sm:$0x1] %vm1344, %v2278
        %v2286 = vsel %vm828, %v2270, 0.0
        %v2287 = vsel %vm828, %v2273, 0.0
        %v2288 = vadd.f32 %v2286, %v2287
        %v2289 = vsel %vm1344, %v2278, 0.0
        %v2290 = vadd.f32 %v2288, %v2289
        %v2291 = vrot.slane %v2290, 4
        %v2292 = vadd.f32 %v2290, %v2291
        %v2293 = vrot.slane %v2292, 2
        %v2294 = vadd.f32 %v2292, %v2293
        %v2295 = vrot.slane %v2294, 1
        %v2296 = vadd.f32 %v2294, %v2295
        %v2297 = vadd.f32 %v2122, %v2296
        %v2298 = vmul.f32 %v2270, %v2270
        %v2299 = vmul.f32 %v2273, %v2273
        %v2300 = vmul.f32 %v2278, %v2278
        %v2301 = vsel %vm828, %v2298, 0.0
        %v2302 = vsel %vm828, %v2299, 0.0
        %v2303 = vadd.f32 %v2301, %v2302
        %v2304 = vsel %vm1344, %v2300, 0.0
        %v2305 = vadd.f32 %v2303, %v2304
        %v2306 = vrot.slane %v2305, 4
        %v2307 = vadd.f32 %v2305, %v2306
        %v2308 = vrot.slane %v2307, 2
        %v2309 = vadd.f32 %v2307, %v2308
        %v2310 = vrot.slane %v2309, 1
        %v2311 = vadd.f32 %v2309, %v2310
        %v2312 = vadd.f32 %v2137, %v2311
        %v2313 = vmul.f32 %v2297, 0.029411765
        %v2314 = vmul.f32 %v2312, 0.029411765
        %v2315 = vmul.f32 %v2313, %v2313
        %v2316 = vsub.f32 %v2314, %v2315
        %v2317 = vadd.f32 %v2316, 1e-05
        %v2318 = vrsqrt.pop %v2317
        %v2319 = vld [vmem:[%s662] sm:$0x1]
        %v2320 = vmul.f32 %v2318, %v2319
        %v2321 = vld [vmem:[%s665] sm:$0x1]
        %v2322 = vmul.f32 %v2313, %v2320
        %v2323 = vsub.f32 %v2321, %v2322
        %v2324 = vld [vmem:[#allocation2] sm:$0xff]
        %v2325 = vld [vmem:[#allocation2 + $0x8] sm:$0xff]
        %v2326 = vld [vmem:[#allocation2 + $0x10] sm:$0x1]
        %v2327 = vld [vmem:[#allocation3] sm:$0xff]
        %v2328 = vld [vmem:[#allocation3 + $0x8] sm:$0xff]
        %v2329 = vld [vmem:[#allocation3 + $0x10] sm:$0x1]
        %v2330 = vlaneseq
        %v2331 = vshrl.u32 %v2330, 7
        %v2332 = vsub.s32 0, %v2331
        %v2333 = vrot.slane %v2320, %v2332
        %v2334 = vmul.f32 %v2327, %v2333
        %v2335 = vmul.f32 %v2328, %v2333
        %v2336 = vmul.f32 %v2329, %v2333
        %v2337 = vadd.f32 %v2324, %v2334
        %v2338 = vadd.f32 %v2325, %v2335
        %v2339 = vadd.f32 %v2326, %v2336
        %v2341 = vlaneseq
        %v2342 = vshrl.u32 %v2341, 7
        %v2343 = vsub.s32 0, %v2342
        %v2344 = vrot.slane %v2323, %v2343
        %v2346 = vadd.f32 %v2337, %v2344
        %v2347 = vadd.f32 %v2338, %v2344
        %v2348 = vadd.f32 %v2339, %v2344
        %2349 = vst.msk [vmem:[#allocation2] sm:$0xff] %vm828, %v2346
        %2350 = vst.msk [vmem:[#allocation2 + $0x8] sm:$0xff] %vm828, %v2347
        %2351 = vst.msk [vmem:[#allocation2 + $0x10] sm:$0x1] %vm1344, %v2348
        %v2352 = vld [vmem:[%s1373] sm:$0xff]
        %v2353 = vld [vmem:[%s1373 + $0x8] sm:$0xff]
        %v2354 = vld [vmem:[%s1373 + $0x10] sm:$0x1]
        %v2355 = vld [vmem:[%s1878] sm:$0xff]
        %v2356 = vld [vmem:[%s1878 + $0x8] sm:$0xff]
        %v2357 = vld [vmem:[%s1878 + $0x10] sm:$0x1]
        %v2358 = vmul.f32 %v2355, %v2333
        %v2359 = vmul.f32 %v2356, %v2333
        %v2360 = vmul.f32 %v2357, %v2333
        %v2361 = vadd.f32 %v2352, %v2358
        %v2362 = vadd.f32 %v2353, %v2359
        %v2363 = vadd.f32 %v2354, %v2360
        %v2364 = vadd.f32 %v2361, %v2344
        %v2365 = vadd.f32 %v2362, %v2344
        %v2366 = vadd.f32 %v2363, %v2344
        %2367 = vst.msk [vmem:[%s1373] sm:$0xff] %vm828, %v2364
        %2368 = vst.msk [vmem:[%s1373 + $0x8] sm:$0xff] %vm828, %v2365
        %2369 = vst.msk [vmem:[%s1373 + $0x10] sm:$0x1] %vm1344, %v2366
        %p2370 = scmp.eq.s32.totalorder %s28, 1
        // Predicated region
        $region89: #{vit_forward.1} parent=83 // pred_check
          %p2371 = pneg %p2370
        $region90: #{vit_forward.1} parent=83 // pred_check_branch
          %2373 = sbr.rel (%p2371) target = $region92
        $region91: #{vit_forward.1} parent=83 // pred_region
          %v2374 = vld [vmem:[#allocation2] sm:$0xff]
          %v2375 = vld [vmem:[%s1373] sm:$0xff]
          %v2377 = vrot.slane %v2375, 7
          %v2379 = vsel %vm1000, %v2374, %v2377
          %v2380 = vld [vmem:[%s14] sm:$0xff]
          %v2381 = vld [vmem:[%s14 + $0x8] sm:$0xff]
          %v2382 = vld [vmem:[%s14 + $0x10] sm:$0xff]
          %v2383 = vld [vmem:[%s14 + $0x18] sm:$0xff]
          %v2384 = vpack.c.bf16 %v2379, %v2379
          %v2385 = vpack.c.bf16 %v2381, %v2380
          %v2386 = vpack.c.bf16 %v2383, %v2382
          %v2387 = vld [vmem:[%s15] sm:$0x1]
          %v2389 = vlaneseq
          %v2390 = vshrl.u32 %v2389, 7
          %v2391 = vsub.s32 0, %v2390
          %v2392 = vrot.slane %v2387, %v2391
          %v2395 = vsel %vm828, %v2384, 0
          %2397 = vmatprep.subr.bf16.mxu0 0
          %2398 = vmatpush1.bf16.msra.mxu0 %v2385
          %2399 = vmatprep.subr.bf16.mxu0 0
          %2400 = vmatpush1.bf16.msra.mxu0 %v2386
          %2401 = vmatprep.subr.bf16.mxu0 0
          %2402 = vmatpush1.bf16.msra.mxu0 0
          %2403 = vmatprep.subr.bf16.mxu0 0
          %2404 = vmatpush1.bf16.msra.mxu0 0
          %2405 = vmatprep.subr.bf16.mxu0 0
          %2406 = vmatpush1.bf16.msra.mxu0 0
          %2407 = vmatprep.subr.bf16.mxu0 0
          %2408 = vmatpush1.bf16.msra.mxu0 0
          %2409 = vmatprep.subr.bf16.mxu0 0
          %2410 = vmatpush1.bf16.msra.mxu0 0
          %2411 = vmatprep.subr.bf16.mxu0 0
          %2412 = vmatpush1.bf16.msra.mxu0 0
          %2413 = vmatprep.subr.bf16.mxu0 0
          %2414 = vmatpush1.bf16.msra.mxu0 0
          %2415 = vmatprep.subr.bf16.mxu0 0
          %2416 = vmatpush1.bf16.msra.mxu0 0
          %2417 = vmatprep.subr.bf16.mxu0 0
          %2418 = vmatpush1.bf16.msra.mxu0 0
          %2419 = vmatprep.subr.bf16.mxu0 0
          %2420 = vmatpush1.bf16.msra.mxu0 0
          %2421 = vmatprep.subr.bf16.mxu0 0
          %2422 = vmatpush1.bf16.msra.mxu0 0
          %2423 = vmatprep.subr.bf16.mxu0 0
          %2424 = vmatpush1.bf16.msra.mxu0 0
          %2425 = vmatprep.subr.bf16.mxu0 0
          %2426 = vmatpush1.bf16.msra.mxu0 0
          %2427 = vmatprep.subr.bf16.mxu0 0
          %2428 = vmatpush1.bf16.msra.mxu0 0
          %2429 = vmatprep.mubr.bf16.mxu0 0
          %2430 = vmatmul.mubr.bf16.gmra.mrb[0].mxu0 %v2395
          %v2431 = vpop.f32.mrb[0].mxu0
          %v2432 = vadd.f32 %v2392, %v2431
          %v2433 = vpop.f32.mrb[0].mxu0
          %v2434 = vpop.f32.mrb[0].mxu0
          %v2435 = vpop.f32.mrb[0].mxu0
          %2436 = vdwg.mxu0
          %vm2437 = vcmask 74752
          %2438 = vst.msk [vmem:[#allocation4] sm:$0x3] %vm2437, %v2432
        $region92: #{vit_forward.1} parent=83 // pred_fallthru
          _
        // Predicated region
        $region93: #{vit_forward.1} parent=83 // pred_check
          %p2439 = pneg %p432
        $region94: #{vit_forward.1} parent=83 // pred_check_branch
          %2441 = sbr.rel (%p2439) target = $region96
        $region95: #{vit_forward.1} parent=83 // pred_region
          %s2443 = ssub.s32 32, 32
          %2444 = vsyncadd [#allocation5], %s2443
          %s2446 = sshll.u32 [#allocation4], 4
          %s2447 = int_to_ptr.vmem [resolvable:$true] %s2446
          %2449 = dma.vmem_to_hbm [thread:$0]  %s2447, 32, %s16, [#allocation5]
        $region96: #{vit_forward.1} parent=83 // pred_fallthru
          _
        // Predicated region
        $region97: #{vit_forward.1} parent=83 // pred_check
          %p2450 = pneg %p432
        $region98: #{vit_forward.1} parent=83 // pred_check_branch
          %2452 = sbr.rel (%p2450) target = $region100
        $region99: #{vit_forward.1} parent=83 // pred_region
          %2453 = dma.done [#allocation5], 32
        $region100: #{vit_forward.1} parent=83 // pred_fallthru
          _
      $region84: #{vit_forward.1} parent=5 // pred_fallthru
        _
      %p2454 = scmp.le.s32.totalorder 2, %s23
      // Predicated region
      $region101: #{vit_forward.1} parent=5 // pred_check
        %p2455 = pneg %p2454
      $region102: #{vit_forward.1} parent=5 // pred_check_branch
        %2457 = sbr.rel (%p2455) target = $region104
      $region103: #{vit_forward.1} parent=5 // pred_region
        %s2458 = ssub.s32 %s23, 2
      $region104: #{vit_forward.1} parent=5 // pred_fallthru
        _
    $region6: #{vit_forward.1} parent=1 // loop_footer
      %s27 = sadd.s32 1, %s23
    $region7: #{vit_forward.1} parent=1 // loop_footer_branch
      %22 = sbr.rel target = $region3
    $region8: #{vit_forward.1} parent=1 // loop_exit
      _
    %2459 = vsyncpa [#allocation5], 1
    %s2460 = scalar_lea.sflag [#allocation5], 1
    %2461 = vsyncpa %s2460, 1

</llo_original>
